<compile_context>
chip_gen: v7x
topology: tpu7x:2x2x1
jax: 0.10.0
libtpu: 0.0.40
codegen_flags: <defaults>
</compile_context>

<pallas_src>
import math
import functools

import jax
import jax.numpy as jnp
from jax.experimental import pallas as pl
from jax.experimental.pallas import tpu as pltpu


_VMEM_LIMIT = 32 * 1024 * 1024  # raises v5e's 16 MiB scoped default, fits v7x's 64 MiB


def _cparams(vmem_limit=None):
    return pltpu.CompilerParams(dimension_semantics=("parallel",),
                                vmem_limit_bytes=vmem_limit)


def _apply_act(x, act):
    if act is None:
        return x
    if act == "relu":
        return jnp.maximum(x, 0.0)
    if act == "gelu":
        # TODO(synk): jax.nn.gelu is the tanh approximation; torch F.gelu is exact erf.
        return jax.nn.gelu(x)
    raise ValueError(f"unsupported activation: {act}")


def _moving_average(x, K):
    """Replicate-pad moving average over the time (sublane) axis; x: [L, D] f32."""
    L, D = x.shape
    pad = (K - 1) // 2
    if pad > 0:
        front = jnp.broadcast_to(x[0:1, :], (pad, D))
        end = jnp.broadcast_to(x[L - 1:L, :], (pad, D))
        xp = jnp.concatenate([front, x, end], axis=0)
    else:
        xp = x
    if K <= 9:
        acc = xp[0:L, :]
        for t in range(1, K):
            acc = acc + xp[t:t + L, :]
    else:
        # rolled loop for large moving_avg (default 25) to bound code size / live ranges
        def body(t, a):
            return a + jax.lax.dynamic_slice_in_dim(xp, t, L, axis=0)
        acc = jax.lax.fori_loop(1, K, body, xp[0:L, :])
    return acc * (1.0 / float(K))


# ---------------------------------------------------------------------------
# Pallas kernels
# ---------------------------------------------------------------------------

def _linear_kernel(*refs, act, has_bias):
    x_ref, w_ref = refs[0], refs[1]
    acc = jnp.dot(x_ref[...].astype(jnp.bfloat16),
                  w_ref[...].astype(jnp.bfloat16),   # no-op: weights stored bf16
                  preferred_element_type=jnp.float32)
    if has_bias:
        acc = acc + refs[2][...]
        o_ref = refs[3]
    else:
        o_ref = refs[2]
    acc = _apply_act(acc, act)
    o_ref[...] = acc.astype(o_ref.dtype)


def pallas_linear(x, w, b=None, act=None, block_m=256):
    """y = x @ w (+ b) (+ act); x: [..., K] f32, w: [K, N] bf16; M-row tiled."""
    orig = x.shape
    K = orig[-1]
    N = w.shape[1]
    x2 = x.reshape(-1, K)
    M = x2.shape[0]
    bm = M if M <= block_m else block_m
    in_specs = [pl.BlockSpec((bm, K), lambda i: (i, 0)),
                pl.BlockSpec((K, N), lambda i: (0, 0))]
    args = [x2, w]
    if b is not None:
        in_specs.append(pl.BlockSpec((1, N), lambda i: (0, 0)))
        args.append(b.reshape(1, N))
    out = pl.pallas_call(
        functools.partial(_linear_kernel, act=act, has_bias=b is not None),
        grid=(pl.cdiv(M, bm),),
        in_specs=in_specs,
        out_specs=pl.BlockSpec((bm, N), lambda i: (i, 0)),
        out_shape=jax.ShapeDtypeStruct((M, N), x.dtype),
        compiler_params=_cparams(_VMEM_LIMIT),
    )(*args)
    return out.reshape(orig[:-1] + (N,))


def _ffn_decomp_kernel(x_ref, w1_ref, w2_ref, *out_refs, act, K_ma, emit_trend):
    """conv1(k=1) -> act -> conv2(k=1), residual add, series_decomp -- all fused."""
    x = x_ref[0].astype(jnp.float32)                            # [L, D]
    h = jnp.dot(x.astype(jnp.bfloat16), w1_ref[...].astype(jnp.bfloat16),
                preferred_element_type=jnp.float32)
    h = _apply_act(h, act)
    y = jnp.dot(h.astype(jnp.bfloat16), w2_ref[...].astype(jnp.bfloat16),
                preferred_element_type=jnp.float32)
    s = x + y
    trend = _moving_average(s, K_ma)
    out_refs[0][0] = (s - trend).astype(out_refs[0].dtype)
    if emit_trend:
        out_refs[1][0] = trend.astype(out_refs[1].dtype)


def pallas_ffn_decomp(x, w1, w2, act, *, kernel_size, emit_trend):
    assert kernel_size % 2 == 1, "moving_avg must be odd (matches torch semantics)"
    B, L, D = x.shape
    dff = w1.shape[1]
    spec = pl.BlockSpec((1, L, D), lambda b: (b, 0, 0))
    out_shape = jax.ShapeDtypeStruct((B, L, D), x.dtype)
    res = pl.pallas_call(
        functools.partial(_ffn_decomp_kernel, act=act, K_ma=kernel_size,
                          emit_trend=emit_trend),
        grid=(B,),
        in_specs=[spec,
                  pl.BlockSpec((D, dff), lambda b: (0, 0)),
                  pl.BlockSpec((dff, D), lambda b: (0, 0))],
        out_specs=(spec, spec) if emit_trend else spec,
        out_shape=(out_shape, out_shape) if emit_trend else out_shape,
        compiler_params=_cparams(_VMEM_LIMIT),
    )(x, w1, w2)
    return res


def _decomp_kernel(x_ref, s_ref, t_ref, *, K):
    x = x_ref[0].astype(jnp.float32)
    trend = _moving_average(x, K)
    t_ref[0] = trend.astype(t_ref.dtype)
    s_ref[0] = (x - trend).astype(s_ref.dtype)


def pallas_series_decomp(x, *, kernel_size):
    """series_decomp(x) -> (seasonal, trend); only used on the raw encoder input."""
    assert kernel_size % 2 == 1
    B, L, D = x.shape
    spec = pl.BlockSpec((1, L, D), lambda b: (b, 0, 0))
    return pl.pallas_call(
        functools.partial(_decomp_kernel, K=kernel_size),
        grid=(B,),
        in_specs=[spec],
        out_specs=(spec, spec),
        out_shape=(jax.ShapeDtypeStruct((B, L, D), x.dtype),
                   jax.ShapeDtypeStruct((B, L, D), x.dtype)),
        compiler_params=_cparams(),
    )(x)


def _circ_conv_kernel(*refs, n_sum, has_mark, has_accum):
    """Circular Conv1d(k=3) on channels-last data; taps built in-kernel via sublane
    slice+concat.  Optional 'mark' channels share the fused weight (token + temporal
    embedding); optional 'accum' input is added post-matmul (decoder running trend)."""
    x = refs[0][0].astype(jnp.float32)
    for r in refs[1:n_sum]:
        x = x + r[0].astype(jnp.float32)
    pos = n_sum
    xm = None
    if has_mark:
        xm = refs[pos][0]
        pos += 1
    acc_in = None
    if has_accum:
        acc_in = refs[pos][0]
        pos += 1
    w_ref = refs[pos]
    o_ref = refs[pos + 1]
    L = x.shape[0]
    x_m1 = jnp.concatenate([x[L - 1:L, :], x[:L - 1, :]], axis=0)   # x[t-1]
    x_p1 = jnp.concatenate([x[1:, :], x[0:1, :]], axis=0)           # x[t+1]
    parts = [x_m1, x, x_p1]
    if has_mark:
        parts.append(xm.astype(jnp.float32))
    cat = jnp.concatenate(parts, axis=-1).astype(jnp.bfloat16)
    out = jnp.dot(cat, w_ref[...].astype(jnp.bfloat16),
                  preferred_element_type=jnp.float32)
    if has_accum:
        out = out + acc_in.astype(jnp.float32)
    o_ref[0] = out.astype(o_ref.dtype)


def pallas_circular_conv3(xs, w, x_mark=None, accum=None):
    """xs: list of [B, L, C] summed in-kernel; w: [3*C (+ Cm), N] bf16;
    accum (optional): [B, L, N] added to the conv output (fused trend accumulation)."""
    B, L, C = xs[0].shape
    N = w.shape[1]
    in_specs = [pl.BlockSpec((1, L, C), lambda b: (b, 0, 0)) for _ in xs]
    args = list(xs)
    if x_mark is not None:
        Cm = x_mark.shape[-1]
        in_specs.append(pl.BlockSpec((1, L, Cm), lambda b: (b, 0, 0)))
        args.append(x_mark)
    if accum is not None:
        in_specs.append(pl.BlockSpec((1, L, N), lambda b: (b, 0, 0)))
        args.append(accum)
    in_specs.append(pl.BlockSpec(w.shape, lambda b: (0, 0)))
    args.append(w)
    return pl.pallas_call(
        functools.partial(_circ_conv_kernel, n_sum=len(xs),
                          has_mark=x_mark is not None,
                          has_accum=accum is not None),
        grid=(B,),
        in_specs=in_specs,
        out_specs=pl.BlockSpec((1, L, N), lambda b: (b, 0, 0)),
        out_shape=jax.ShapeDtypeStruct((B, L, N), xs[0].dtype),
        compiler_params=_cparams(),
    )(*args)


def _autocorr_kernel(q_ref, k_ref, o_ref, *, D):
    """Channel-mean circular cross-correlation on the MXU:
       GT[s, a] = sum_d k[s, d] * q[a, d]        (one Gram matmul)
       corr[tau] = (1/D) * sum_s GT[s, (s+tau)%L] (circulant-diagonal reduction)
    The reduction accumulates L lane-dense [1, L] row slices of [GT, GT]."""
    # TODO(synk): O(L^2 * D) time-domain form; an FFT-based kernel would be needed
    # for seq_len in the many hundreds.  pltpu.roll (strided) could replace the
    # per-row slices once L is lane-aligned.
    q = q_ref[0].astype(jnp.bfloat16)                            # [L, D]
    k = k_ref[0].astype(jnp.bfloat16)                            # [L, D]
    gt = jax.lax.dot_general(k, q, (((1,), (1,)), ((), ())),
                             preferred_element_type=jnp.float32)  # [L, L]
    L = gt.shape[0]
    gt2 = jnp.concatenate([gt, gt], axis=1)                       # [L, 2L]
    acc = jnp.zeros((1, L), jnp.float32)
    for s in range(L):
        acc = acc + gt2[s:s + 1, s:s + L]
    o_ref[0] = (acc * (1.0 / float(D))).astype(o_ref.dtype)


def pallas_autocorr_mean(q, k):
    """q, k: [B, L, D] -> channel-mean circular correlation [B, L] f32
    (== mean over heads/channels of irfft(rfft(q)*conj(rfft(k))))."""
    B, L, D = q.shape
    spec = pl.BlockSpec((1, L, D), lambda b: (b, 0, 0))
    out = pl.pallas_call(
        functools.partial(_autocorr_kernel, D=D),
        grid=(B,),
        in_specs=[spec, spec],
        out_specs=pl.BlockSpec((1, 1, L), lambda b: (b, 0, 0)),
        out_shape=jax.ShapeDtypeStruct((B, 1, L), jnp.float32),
        compiler_params=_cparams(),
    )(q, k)
    return out.reshape(B, L)


def _agg_proj_decomp_kernel(delay_ref, corrw_ref, v_ref, x_ref, wo_ref, bo_ref,
                            *out_refs, top_k, K_ma, emit_trend):
    """time_delay_agg_inference + output projection + residual add + series_decomp,
    fully on-chip.  The [L, L] mixing matrix is built from the SMEM-resident top-k
    delays / softmax weights with broadcasted_iota comparisons."""
    b = pl.program_id(0)
    v = v_ref[0]                                                  # [L, D]
    x = x_ref[0].astype(jnp.float32)                              # [L, D] residual
    L = v.shape[0]
    t_idx = jax.lax.broadcasted_iota(jnp.int32, (L, L), 0)        # output time index
    s_idx = jax.lax.broadcasted_iota(jnp.int32, (L, L), 1)        # source time index
    mix = jnp.zeros((L, L), jnp.float32)
    for i in range(top_k):
        d = delay_ref[b, i]                                       # int32 in [0, L)
        w = corrw_ref[b, i]                                       # f32 softmax weight
        shifted = t_idx + d
        src = jnp.where(shifted >= L, shifted - L, shifted)       # (t + delay) % L
        mix = mix + jnp.where(s_idx == src, w, jnp.float32(0.0))
    agg = jnp.dot(mix.astype(jnp.bfloat16), v.astype(jnp.bfloat16),
                  preferred_element_type=jnp.float32)             # [L, D]
    out = jnp.dot(agg.astype(jnp.bfloat16), wo_ref[...].astype(jnp.bfloat16),
                  preferred_element_type=jnp.float32) + bo_ref[...]
    s = x + out
    trend = _moving_average(s, K_ma)
    out_refs[0][0] = (s - trend).astype(out_refs[0].dtype)
    if emit_trend:
        out_refs[1][0] = trend.astype(out_refs[1].dtype)


def pallas_agg_proj_decomp(delay, corr_w, v, x_resid, wo, bo, *, kernel_size,
                           emit_trend):
    assert kernel_size % 2 == 1
    B, L, D = v.shape
    top_k = delay.shape[1]
    spec = pl.BlockSpec((1, L, D), lambda b: (b, 0, 0))
    out_shape = jax.ShapeDtypeStruct((B, L, D), x_resid.dtype)
    res = pl.pallas_call(
        functools.partial(_agg_proj_decomp_kernel, top_k=top_k, K_ma=kernel_size,
                          emit_trend=emit_trend),
        grid=(B,),
        in_specs=[pl.BlockSpec(memory_space=pltpu.MemorySpace.SMEM),   # delay [B,K]
                  pl.BlockSpec(memory_space=pltpu.MemorySpace.SMEM),   # weights [B,K]
                  spec,                                                # v
                  spec,                                                # residual x
                  pl.BlockSpec((D, D), lambda b: (0, 0)),              # Wo (bf16)
                  pl.BlockSpec((1, D), lambda b: (0, 0))],             # bo
        out_specs=(spec, spec) if emit_trend else spec,
        out_shape=(out_shape, out_shape) if emit_trend else out_shape,
        compiler_params=_cparams(_VMEM_LIMIT),
    )(delay, corr_w, v, x_resid, wo, bo.reshape(1, D))
    return res


def _my_layernorm_kernel(*refs, has_proj):
    x = refs[0][0].astype(jnp.float32)                            # [L, D]
    w = refs[1][...]                                              # [1, D]
    b = refs[2][...]
    mu = jnp.mean(x, axis=-1, keepdims=True)
    var = jnp.mean(jnp.square(x - mu), axis=-1, keepdims=True)
    xhat = (x - mu) * jax.lax.rsqrt(var + 1e-5) * w + b
    y = xhat - jnp.mean(xhat, axis=0, keepdims=True)              # subtract time mean
    if has_proj:
        pw = refs[3][...].astype(jnp.bfloat16)
        pb = refs[4][...]
        o_ref = refs[5]
        y = jnp.dot(y.astype(jnp.bfloat16), pw,
                    preferred_element_type=jnp.float32) + pb
    else:
        o_ref = refs[3]
    o_ref[0] = y.astype(o_ref.dtype)


def pallas_my_layernorm(x, w, b, proj_w=None, proj_b=None):
    """my_Layernorm, optionally fused with the final Linear(d_model, c_out) so the
    narrow (c_out) store happens exactly once."""
    B, L, D = x.shape
    has_proj = proj_w is not None
    N = proj_w.shape[1] if has_proj else D
    in_specs = [pl.BlockSpec((1, L, D), lambda i: (i, 0, 0)),
                pl.BlockSpec((1, D), lambda i: (0, 0)),
                pl.BlockSpec((1, D), lambda i: (0, 0))]
    args = [x, w.reshape(1, D), b.reshape(1, D)]
    if has_proj:
        in_specs += [pl.BlockSpec((D, N), lambda i: (0, 0)),
                     pl.BlockSpec((1, N), lambda i: (0, 0))]
        args += [proj_w, proj_b.reshape(1, N)]
    return pl.pallas_call(
        functools.partial(_my_layernorm_kernel, has_proj=has_proj),
        grid=(B,),
        in_specs=in_specs,
        out_specs=pl.BlockSpec((1, L, N), lambda i: (i, 0, 0)),
        out_shape=jax.ShapeDtypeStruct((B, L, N), x.dtype),
        compiler_params=_cparams(),
    )(*args)


# ---------------------------------------------------------------------------
# Model building blocks (JAX glue around the Pallas kernels)
# ---------------------------------------------------------------------------

def data_embedding_wo_pos(p, x, x_mark):
    # TokenEmbedding (circular conv k=3) + TimeFeatureEmbedding (freq='a', 1 feature),
    # fused into a single kernel via channel concat + one matmul.
    return pallas_circular_conv3([x], p["w"], x_mark=x_mark)


def _attention_decomp(p, cfg, queries, keys_values, self_attn, emit_trend):
    """AutoCorrelationLayer + residual add + series_decomp, eval semantics.
    Heads cancel analytically in time_delay_agg_inference (per-batch delays/weights
    applied uniformly over channels), so everything stays channels-last [B, L, D]."""
    B, L, Dm = queries.shape
    if self_attn:
        qkv = pallas_linear(queries, p["Wqkv"], p["bqkv"])      # fused Q|K|V
        q, k, v = qkv[..., :Dm], qkv[..., Dm:2 * Dm], qkv[..., 2 * Dm:]
    else:
        q = pallas_linear(queries, p["Wq"], p["bq"])
        kv = pallas_linear(keys_values, p["Wkv"], p["bkv"])     # fused K|V
        k, v = kv[..., :Dm], kv[..., Dm:]
    S = k.shape[1]
    if L > S:
        pad = jnp.zeros((B, L - S, Dm), q.dtype)
        k = jnp.concatenate([k, pad], axis=1)
        v = jnp.concatenate([v, pad], axis=1)
    elif L < S:
        k = k[:, :L]
        v = v[:, :L]

    mean_corr = pallas_autocorr_mean(q, k)                      # [B, L] f32

    # TODO(synk): data-dependent top-k + softmax stay in plain JAX (tiny [B, top_k]);
    # the indices/weights feed the Pallas kernel through SMEM (no one_hot, no gather).
    top_k = max(1, int(cfg["factor"] * math.log(L)))
    weights, delay = jax.lax.top_k(mean_corr, top_k)            # [B, top_k]
    tmp_corr = jax.nn.softmax(weights, axis=-1).astype(jnp.float32)
    delay = delay.astype(jnp.int32)

    return pallas_agg_proj_decomp(delay, tmp_corr, v, queries, p["Wo"], p["bo"],
                                  kernel_size=cfg["moving_avg"],
                                  emit_trend=emit_trend)


def encoder_layer(p, cfg, x):
    ma = cfg["moving_avg"]
    # attn + out-proj + residual + decomp1 fused (trend discarded)
    x = _attention_decomp(p["attn"], cfg, x, x, self_attn=True, emit_trend=False)
    # conv1 + act + conv2 + residual + decomp2 fused
    res = pallas_ffn_decomp(x, p["W1"], p["W2"], cfg["activation"],
                            kernel_size=ma, emit_trend=False)
    return res


def encoder(params, cfg, x):
    for lp in params["enc_layers"]:
        x = encoder_layer(lp, cfg, x)
    return pallas_my_layernorm(x, params["enc_norm_w"], params["enc_norm_b"])


def decoder_layer(p, cfg, x, cross, trend):
    ma = cfg["moving_avg"]
    x, t1 = _attention_decomp(p["self_attn"], cfg, x, x, self_attn=True,
                              emit_trend=True)
    x, t2 = _attention_decomp(p["cross_attn"], cfg, x, cross, self_attn=False,
                              emit_trend=True)
    x, t3 = pallas_ffn_decomp(x, p["W1"], p["W2"], cfg["activation"],
                              kernel_size=ma, emit_trend=True)
    # trend1+trend2+trend3 summed in-kernel, circular Conv1d(d_model->c_out, k=3),
    # and the running trend accumulation fused into the same kernel.
    trend = pallas_circular_conv3([t1, t2, t3], p["Wtrend"], accum=trend)
    return x, trend


def decoder(params, cfg, x, cross, trend):
    for lp in params["dec_layers"]:
        x, trend = decoder_layer(lp, cfg, x, cross, trend)
    # my_Layernorm + Linear(d_model, c_out) fused
    x = pallas_my_layernorm(x, params["dec_norm_w"], params["dec_norm_b"],
                            params["dec_proj_w"], params["dec_proj_b"])
    return x, trend


def forecast(params, cfg, x_enc, x_mark_enc, x_dec, x_mark_dec):
    pred_len = cfg["pred_len"]
    label_len = cfg["label_len"]
    ma = cfg["moving_avg"]
    mean = jnp.repeat(jnp.mean(x_enc, axis=1, keepdims=True), pred_len, axis=1)
    zeros = jnp.zeros((x_dec.shape[0], pred_len, x_dec.shape[2]), x_enc.dtype)
    seasonal_init, trend_init = pallas_series_decomp(x_enc, kernel_size=ma)
    trend_init = jnp.concatenate([trend_init[:, -label_len:, :], mean], axis=1)
    seasonal_init = jnp.concatenate([seasonal_init[:, -label_len:, :], zeros], axis=1)
    enc_out = data_embedding_wo_pos(params["enc_embed"], x_enc, x_mark_enc)
    enc_out = encoder(params, cfg, enc_out)
    dec_out = data_embedding_wo_pos(params["dec_embed"], seasonal_init, x_mark_dec)
    seasonal_part, trend_part = decoder(params, cfg, dec_out, enc_out, trend_init)
    return trend_part + seasonal_part


def model_forward(params, cfg, x, x_mark=None, y=None, y_mark=None, y_mask=None):
    B, L, C = x.shape
    pred_len = cfg["pred_len"]
    label_len = cfg["label_len"]
    if x_mark is None:
        x_mark = jnp.broadcast_to(
            (jnp.arange(L, dtype=x.dtype) / L)[None, :, None], (B, L, 1))
    if y is None:
        y = jnp.ones((B, pred_len, C), x.dtype)
    if y_mark is None:
        y_mark = jnp.broadcast_to(
            (jnp.arange(y.shape[1], dtype=y.dtype) / y.shape[1])[None, :, None],
            (B, y.shape[1], 1))
    if y_mask is None:
        y_mask = jnp.ones_like(y)
    x_mark = jnp.where(x_mark == 1.0, 0.9999, x_mark)
    y_mark = jnp.where(y_mark == 1.0, 0.9999, y_mark)
    x_dec = jnp.concatenate([x[:, -label_len:, :], jnp.zeros_like(y)], axis=1)
    x_mark_dec = jnp.concatenate([x_mark[:, -label_len:, :], y_mark], axis=1)
    dec_out = forecast(params, cfg, x, x_mark, x_dec, x_mark_dec)
    PRED_LEN = y.shape[1]
    # features == 'M'  ->  f_dim = 0
    return {"pred": dec_out[:, -PRED_LEN:, 0:],
            "true": y[:, :, 0:],
            "mask": y_mask[:, :, 0:]}


# ---------------------------------------------------------------------------
# Deterministic parameter init (synthetic; shapes follow the torch __init__, with
# Q|K|V, K|V and conv+temporal weights pre-fused; matmul weights stored in bf16)
# ---------------------------------------------------------------------------

def init_params(key, cfg):
    D, dff = cfg["d_model"], cfg["d_ff"]
    enc_in, dec_in, c_out = cfg["enc_in"], cfg["dec_in"], cfg["c_out"]
    keys = iter(jax.random.split(key, 256))

    def dense(fi, fo):
        w = jax.random.normal(next(keys), (fi, fo), jnp.float32) / math.sqrt(float(fi))
        return w.astype(jnp.bfloat16)            # MXU-side weights live in bf16

    def self_attn_params():
        return dict(Wqkv=dense(D, 3 * D), bqkv=jnp.zeros((3 * D,), jnp.float32),
                    Wo=dense(D, D), bo=jnp.zeros((D,), jnp.float32))

    def cross_attn_params():
        return dict(Wq=dense(D, D), bq=jnp.zeros((D,), jnp.float32),
                    Wkv=dense(D, 2 * D), bkv=jnp.zeros((2 * D,), jnp.float32),
                    Wo=dense(D, D), bo=jnp.zeros((D,), jnp.float32))

    return dict(
        # rows: conv taps (t-1, t, t+1) for all input channels, then temporal feature
        enc_embed=dict(w=dense(3 * enc_in + 1, D)),
        dec_embed=dict(w=dense(3 * dec_in + 1, D)),
        enc_layers=[dict(attn=self_attn_params(),
                         W1=dense(D, dff), W2=dense(dff, D))
                    for _ in range(cfg["e_layers"])],
        enc_norm_w=jnp.ones((D,), jnp.float32),
        enc_norm_b=jnp.zeros((D,), jnp.float32),
        dec_layers=[dict(self_attn=self_attn_params(), cross_attn=cross_attn_params(),
                         W1=dense(D, dff), W2=dense(dff, D),
                         Wtrend=dense(3 * D, c_out))
                    for _ in range(cfg["d_layers"])],
        dec_norm_w=jnp.ones((D,), jnp.float32),
        dec_norm_b=jnp.zeros((D,), jnp.float32),
        dec_proj_w=dense(D, c_out),
        dec_proj_b=jnp.zeros((c_out,), jnp.float32),
    )


# ---------------------------------------------------------------------------

if __name__ == "__main__":
    cfg = dict(
        task_name="long_term_forecast",
        seq_len=16, label_len=8, pred_len=8,
        enc_in=4, dec_in=4, c_out=4,
        d_model=32, n_heads=4, d_ff=64,
        e_layers=1, d_layers=1,
        moving_avg=5, factor=1,
        activation="relu",          # dropout = 0 (eval semantics)
        embed="timeF", freq="a",    # x_mark has a single feature
    )

    key = jax.random.PRNGKey(0)
    pkey, xkey = jax.random.split(key)
    params = init_params(pkey, cfg)
    x = jax.random.normal(xkey, (2, cfg["seq_len"], cfg["enc_in"]), jnp.float32)

    fwd = jax.jit(lambda p, xx: model_forward(p, cfg, xx))
    out = fwd(params, x)
    jax.block_until_ready(out["pred"])

    assert out["pred"].shape == (2, cfg["pred_len"], cfg["c_out"])
    assert out["true"].shape == (2, cfg["pred_len"], cfg["c_out"])
    assert out["mask"].shape == (2, cfg["pred_len"], cfg["c_out"])
    assert bool(jnp.all(jnp.isfinite(out["pred"])))
    print("KERNEL_OK")
</pallas_src>

<mosaic_0001>
module attributes {stable_mosaic.version = 11 : i64} {
  func.func @_decomp_kernel(%arg0: i32, %arg1: memref<1x16x4xf32, #tpu.memory_space<vmem>>, %arg2: memref<1x16x4xf32, #tpu.memory_space<vmem>>, %arg3: memref<1x16x4xf32, #tpu.memory_space<vmem>>) attributes {dimension_semantics = [#tpu.dimension_semantics<parallel>], iteration_bounds = array<i64: 2>, scalar_prefetch = 0 : i64, scratch_operands = 0 : i64, tpu.core_type = #tpu.core_type<tc>, window_params = [{transform_indices = @transform_0, window_bounds = array<i64: 1, 16, 4>}, {transform_indices = @transform_1, window_bounds = array<i64: 1, 16, 4>}, {transform_indices = @transform_2, window_bounds = array<i64: 1, 16, 4>}]} {
    %c0 = arith.constant 0 : index
    %c0_0 = arith.constant 0 : index
    %c0_1 = arith.constant 0 : index
    %0 = vector.load %arg1[%c0, %c0_0, %c0_1] : memref<1x16x4xf32, #tpu.memory_space<vmem>>, vector<1x16x4xf32>
    %1 = vector.shape_cast %0 : vector<1x16x4xf32> to vector<16x4xf32>
    %2 = vector.extract_strided_slice %1 {offsets = [0, 0], sizes = [1, 4], strides = [1, 1]} : vector<16x4xf32> to vector<1x4xf32>
    %3 = vector.shape_cast %2 : vector<1x4xf32> to vector<1x4xf32>
    %4 = vector.broadcast %3 : vector<1x4xf32> to vector<2x4xf32>
    %5 = vector.extract_strided_slice %1 {offsets = [15, 0], sizes = [1, 4], strides = [1, 1]} : vector<16x4xf32> to vector<1x4xf32>
    %6 = vector.shape_cast %5 : vector<1x4xf32> to vector<1x4xf32>
    %7 = vector.broadcast %6 : vector<1x4xf32> to vector<2x4xf32>
    %8 = tpu.concatenate %4, %1, %7 in 0 : vector<2x4xf32>, vector<16x4xf32>, vector<2x4xf32> -> vector<20x4xf32>
    %9 = vector.extract_strided_slice %8 {offsets = [0, 0], sizes = [16, 4], strides = [1, 1]} : vector<20x4xf32> to vector<16x4xf32>
    %10 = vector.extract_strided_slice %8 {offsets = [1, 0], sizes = [16, 4], strides = [1, 1]} : vector<20x4xf32> to vector<16x4xf32>
    %11 = arith.addf %9, %10 : vector<16x4xf32>
    %12 = vector.extract_strided_slice %8 {offsets = [2, 0], sizes = [16, 4], strides = [1, 1]} : vector<20x4xf32> to vector<16x4xf32>
    %13 = arith.addf %11, %12 : vector<16x4xf32>
    %14 = vector.extract_strided_slice %8 {offsets = [3, 0], sizes = [16, 4], strides = [1, 1]} : vector<20x4xf32> to vector<16x4xf32>
    %15 = arith.addf %13, %14 : vector<16x4xf32>
    %16 = vector.extract_strided_slice %8 {offsets = [4, 0], sizes = [16, 4], strides = [1, 1]} : vector<20x4xf32> to vector<16x4xf32>
    %17 = arith.addf %15, %16 : vector<16x4xf32>
    %cst = arith.constant 2.000000e-01 : f32
    %18 = vector.broadcast %cst : f32 to vector<16x4xf32>
    %19 = arith.mulf %17, %18 : vector<16x4xf32>
    %c0_2 = arith.constant 0 : index
    %c0_3 = arith.constant 0 : index
    %c0_4 = arith.constant 0 : index
    %20 = vector.load %arg3[%c0_2, %c0_3, %c0_4] : memref<1x16x4xf32, #tpu.memory_space<vmem>>, vector<1x16x4xf32>
    %21 = vector.shape_cast %20 : vector<1x16x4xf32> to vector<16x4xf32>
    %22 = vector.shape_cast %19 : vector<16x4xf32> to vector<1x16x4xf32>
    tpu.vector_store %arg3[%c0_2, %c0_3, %c0_4], %22 {strides = array<i32>} : memref<1x16x4xf32, #tpu.memory_space<vmem>>, vector<1x16x4xf32>,
    %23 = arith.subf %1, %19 : vector<16x4xf32>
    %c0_5 = arith.constant 0 : index
    %c0_6 = arith.constant 0 : index
    %c0_7 = arith.constant 0 : index
    %24 = vector.load %arg2[%c0_5, %c0_6, %c0_7] : memref<1x16x4xf32, #tpu.memory_space<vmem>>, vector<1x16x4xf32>
    %25 = vector.shape_cast %24 : vector<1x16x4xf32> to vector<16x4xf32>
    %26 = vector.shape_cast %23 : vector<16x4xf32> to vector<1x16x4xf32>
    tpu.vector_store %arg2[%c0_5, %c0_6, %c0_7], %26 {strides = array<i32>} : memref<1x16x4xf32, #tpu.memory_space<vmem>>, vector<1x16x4xf32>,
    return
  }
  func.func @transform_0(%arg0: i32) -> (i32, i32, i32) {
    %c0_i32 = arith.constant 0 : i32
    %c0_i32_0 = arith.constant 0 : i32
    %c0_i32_1 = arith.constant 0 : i32
    return %arg0, %c0_i32, %c0_i32_0 : i32, i32, i32
  }
  func.func @transform_1(%arg0: i32) -> (i32, i32, i32) {
    %c0_i32 = arith.constant 0 : i32
    %c0_i32_0 = arith.constant 0 : i32
    %c0_i32_1 = arith.constant 0 : i32
    return %arg0, %c0_i32, %c0_i32_0 : i32, i32, i32
  }
  func.func @transform_2(%arg0: i32) -> (i32, i32, i32) {
    %c0_i32 = arith.constant 0 : i32
    %c0_i32_0 = arith.constant 0 : i32
    %c0_i32_1 = arith.constant 0 : i32
    return %arg0, %c0_i32, %c0_i32_0 : i32, i32, i32
  }
}

module attributes {stable_mosaic.version = 11 : i64} {
  func.func @_linear_kernel(%arg0: i32, %arg1: memref<32x32xf32, #tpu.memory_space<vmem>>, %arg2: memref<32x96xbf16, #tpu.memory_space<vmem>>, %arg3: memref<1x96xf32, #tpu.memory_space<vmem>>, %arg4: memref<32x96xf32, #tpu.memory_space<vmem>>) attributes {dimension_semantics = [#tpu.dimension_semantics<parallel>], iteration_bounds = array<i64: 1>, scalar_prefetch = 0 : i64, scratch_operands = 0 : i64, tpu.core_type = #tpu.core_type<tc>, window_params = [{transform_indices = @transform_0, window_bounds = array<i64: 32, 32>}, {pipeline_mode = #tpu.pipeline_mode<synchronous>, transform_indices = @transform_1, window_bounds = array<i64: 32, 96>}, {pipeline_mode = #tpu.pipeline_mode<synchronous>, transform_indices = @transform_2, window_bounds = array<i64: 1, 96>}, {transform_indices = @transform_3, window_bounds = array<i64: 32, 96>}]} {
    %c0 = arith.constant 0 : index
    %c0_0 = arith.constant 0 : index
    %0 = vector.load %arg1[%c0, %c0_0] : memref<32x32xf32, #tpu.memory_space<vmem>>, vector<32x32xf32>
    %1 = arith.truncf %0 : vector<32x32xf32> to vector<32x32xbf16>
    %c0_1 = arith.constant 0 : index
    %c0_2 = arith.constant 0 : index
    %2 = vector.load %arg2[%c0_1, %c0_2] : memref<32x96xbf16, #tpu.memory_space<vmem>>, vector<32x96xbf16>
    %cst = arith.constant dense<0.000000e+00> : vector<32x96xf32>
    %3 = tpu.matmul %1, %2, %cst {dimension_numbers = #tpu.dot_dimension_numbers<[1], [0], [0], [1], [0, 0, 1, 1], [], []>} : vector<32x32xbf16>, vector<32x96xbf16>, vector<32x96xf32> -> vector<32x96xf32>
    %c0_3 = arith.constant 0 : index
    %c0_4 = arith.constant 0 : index
    %4 = vector.load %arg3[%c0_3, %c0_4] : memref<1x96xf32, #tpu.memory_space<vmem>>, vector<1x96xf32>
    %5 = vector.broadcast %4 : vector<1x96xf32> to vector<32x96xf32>
    %6 = arith.addf %3, %5 : vector<32x96xf32>
    %c0_5 = arith.constant 0 : index
    %c0_6 = arith.constant 0 : index
    %7 = vector.load %arg4[%c0_5, %c0_6] : memref<32x96xf32, #tpu.memory_space<vmem>>, vector<32x96xf32>
    tpu.vector_store %arg4[%c0_5, %c0_6], %6 {strides = array<i32>} : memref<32x96xf32, #tpu.memory_space<vmem>>, vector<32x96xf32>,
    return
  }
  func.func @transform_0(%arg0: i32) -> (i32, i32) {
    %c0_i32 = arith.constant 0 : i32
    %c0_i32_0 = arith.constant 0 : i32
    return %arg0, %c0_i32 : i32, i32
  }
  func.func @transform_1(%arg0: i32) -> (i32, i32) {
    %c0_i32 = arith.constant 0 : i32
    %c0_i32_0 = arith.constant 0 : i32
    %c0_i32_1 = arith.constant 0 : i32
    return %c0_i32, %c0_i32_0 : i32, i32
  }
  func.func @transform_2(%arg0: i32) -> (i32, i32) {
    %c0_i32 = arith.constant 0 : i32
    %c0_i32_0 = arith.constant 0 : i32
    %c0_i32_1 = arith.constant 0 : i32
    return %c0_i32, %c0_i32_0 : i32, i32
  }
  func.func @transform_3(%arg0: i32) -> (i32, i32) {
    %c0_i32 = arith.constant 0 : i32
    %c0_i32_0 = arith.constant 0 : i32
    return %arg0, %c0_i32 : i32, i32
  }
}

module attributes {stable_mosaic.version = 11 : i64} {
  func.func @_circ_conv_kernel(%arg0: i32, %arg1: memref<1x16x4xf32, #tpu.memory_space<vmem>>, %arg2: memref<1x16x1xf32, #tpu.memory_space<vmem>>, %arg3: memref<13x32xbf16, #tpu.memory_space<vmem>>, %arg4: memref<1x16x32xf32, #tpu.memory_space<vmem>>) attributes {dimension_semantics = [#tpu.dimension_semantics<parallel>], iteration_bounds = array<i64: 2>, scalar_prefetch = 0 : i64, scratch_operands = 0 : i64, tpu.core_type = #tpu.core_type<tc>, window_params = [{transform_indices = @transform_0, window_bounds = array<i64: 1, 16, 4>}, {transform_indices = @transform_1, window_bounds = array<i64: 1, 16, 1>}, {pipeline_mode = #tpu.pipeline_mode<synchronous>, transform_indices = @transform_2, window_bounds = array<i64: 13, 32>}, {transform_indices = @transform_3, window_bounds = array<i64: 1, 16, 32>}]} {
    %c0 = arith.constant 0 : index
    %c0_0 = arith.constant 0 : index
    %c0_1 = arith.constant 0 : index
    %0 = vector.load %arg1[%c0, %c0_0, %c0_1] : memref<1x16x4xf32, #tpu.memory_space<vmem>>, vector<1x16x4xf32>
    %1 = vector.shape_cast %0 : vector<1x16x4xf32> to vector<16x4xf32>
    %c0_2 = arith.constant 0 : index
    %c0_3 = arith.constant 0 : index
    %c0_4 = arith.constant 0 : index
    %2 = vector.load %arg2[%c0_2, %c0_3, %c0_4] : memref<1x16x1xf32, #tpu.memory_space<vmem>>, vector<1x16x1xf32>
    %3 = vector.shape_cast %2 : vector<1x16x1xf32> to vector<16x1xf32>
    %4 = vector.extract_strided_slice %1 {offsets = [15, 0], sizes = [1, 4], strides = [1, 1]} : vector<16x4xf32> to vector<1x4xf32>
    %5 = vector.extract_strided_slice %1 {offsets = [0, 0], sizes = [15, 4], strides = [1, 1]} : vector<16x4xf32> to vector<15x4xf32>
    %6 = tpu.concatenate %4, %5 in 0 : vector<1x4xf32>, vector<15x4xf32> -> vector<16x4xf32>
    %7 = vector.extract_strided_slice %1 {offsets = [1, 0], sizes = [15, 4], strides = [1, 1]} : vector<16x4xf32> to vector<15x4xf32>
    %8 = vector.extract_strided_slice %1 {offsets = [0, 0], sizes = [1, 4], strides = [1, 1]} : vector<16x4xf32> to vector<1x4xf32>
    %9 = tpu.concatenate %7, %8 in 0 : vector<15x4xf32>, vector<1x4xf32> -> vector<16x4xf32>
    %10 = tpu.concatenate %6, %1, %9, %3 in 1 : vector<16x4xf32>, vector<16x4xf32>, vector<16x4xf32>, vector<16x1xf32> -> vector<16x13xf32>
    %11 = arith.truncf %10 : vector<16x13xf32> to vector<16x13xbf16>
    %c0_5 = arith.constant 0 : index
    %c0_6 = arith.constant 0 : index
    %12 = vector.load %arg3[%c0_5, %c0_6] : memref<13x32xbf16, #tpu.memory_space<vmem>>, vector<13x32xbf16>
    %cst = arith.constant dense<0.000000e+00> : vector<16x32xf32>
    %13 = tpu.matmul %11, %12, %cst {dimension_numbers = #tpu.dot_dimension_numbers<[1], [0], [0], [1], [0, 0, 1, 1], [], []>} : vector<16x13xbf16>, vector<13x32xbf16>, vector<16x32xf32> -> vector<16x32xf32>
    %c0_7 = arith.constant 0 : index
    %c0_8 = arith.constant 0 : index
    %c0_9 = arith.constant 0 : index
    %14 = vector.load %arg4[%c0_7, %c0_8, %c0_9] : memref<1x16x32xf32, #tpu.memory_space<vmem>>, vector<1x16x32xf32>
    %15 = vector.shape_cast %14 : vector<1x16x32xf32> to vector<16x32xf32>
    %16 = vector.shape_cast %13 : vector<16x32xf32> to vector<1x16x32xf32>
    tpu.vector_store %arg4[%c0_7, %c0_8, %c0_9], %16 {strides = array<i32>} : memref<1x16x32xf32, #tpu.memory_space<vmem>>, vector<1x16x32xf32>,
    return
  }
  func.func @transform_0(%arg0: i32) -> (i32, i32, i32) {
    %c0_i32 = arith.constant 0 : i32
    %c0_i32_0 = arith.constant 0 : i32
    %c0_i32_1 = arith.constant 0 : i32
    return %arg0, %c0_i32, %c0_i32_0 : i32, i32, i32
  }
  func.func @transform_1(%arg0: i32) -> (i32, i32, i32) {
    %c0_i32 = arith.constant 0 : i32
    %c0_i32_0 = arith.constant 0 : i32
    %c0_i32_1 = arith.constant 0 : i32
    return %arg0, %c0_i32, %c0_i32_0 : i32, i32, i32
  }
  func.func @transform_2(%arg0: i32) -> (i32, i32) {
    %c0_i32 = arith.constant 0 : i32
    %c0_i32_0 = arith.constant 0 : i32
    %c0_i32_1 = arith.constant 0 : i32
    return %c0_i32, %c0_i32_0 : i32, i32
  }
  func.func @transform_3(%arg0: i32) -> (i32, i32, i32) {
    %c0_i32 = arith.constant 0 : i32
    %c0_i32_0 = arith.constant 0 : i32
    %c0_i32_1 = arith.constant 0 : i32
    return %arg0, %c0_i32, %c0_i32_0 : i32, i32, i32
  }
}

module attributes {stable_mosaic.version = 11 : i64} {
  func.func @_autocorr_kernel(%arg0: i32, %arg1: memref<1x16x32xf32, #tpu.memory_space<vmem>>, %arg2: memref<1x16x32xf32, #tpu.memory_space<vmem>>, %arg3: memref<1x1x16xf32, #tpu.memory_space<vmem>>) attributes {dimension_semantics = [#tpu.dimension_semantics<parallel>], iteration_bounds = array<i64: 2>, scalar_prefetch = 0 : i64, scratch_operands = 0 : i64, tpu.core_type = #tpu.core_type<tc>, window_params = [{transform_indices = @transform_0, window_bounds = array<i64: 1, 16, 32>}, {transform_indices = @transform_1, window_bounds = array<i64: 1, 16, 32>}, {transform_indices = @transform_2, window_bounds = array<i64: 1, 1, 16>}]} {
    %c0 = arith.constant 0 : index
    %c0_0 = arith.constant 0 : index
    %c0_1 = arith.constant 0 : index
    %0 = vector.load %arg1[%c0, %c0_0, %c0_1] : memref<1x16x32xf32, #tpu.memory_space<vmem>>, vector<1x16x32xf32>
    %1 = vector.shape_cast %0 : vector<1x16x32xf32> to vector<16x32xf32>
    %2 = arith.truncf %1 : vector<16x32xf32> to vector<16x32xbf16>
    %c0_2 = arith.constant 0 : index
    %c0_3 = arith.constant 0 : index
    %c0_4 = arith.constant 0 : index
    %3 = vector.load %arg2[%c0_2, %c0_3, %c0_4] : memref<1x16x32xf32, #tpu.memory_space<vmem>>, vector<1x16x32xf32>
    %4 = vector.shape_cast %3 : vector<1x16x32xf32> to vector<16x32xf32>
    %5 = arith.truncf %4 : vector<16x32xf32> to vector<16x32xbf16>
    %cst = arith.constant dense<0.000000e+00> : vector<16x16xf32>
    %6 = tpu.matmul %5, %2, %cst {dimension_numbers = #tpu.dot_dimension_numbers<[1], [1], [0], [0], [0, 0, 1, 0], [], []>} : vector<16x32xbf16>, vector<16x32xbf16>, vector<16x16xf32> -> vector<16x16xf32>
    %7 = tpu.concatenate %6, %6 in 1 : vector<16x16xf32>, vector<16x16xf32> -> vector<16x32xf32>
    %cst_5 = arith.constant 0.000000e+00 : f32
    %8 = vector.broadcast %cst_5 : f32 to vector<1x16xf32>
    %9 = vector.extract_strided_slice %7 {offsets = [0, 0], sizes = [1, 16], strides = [1, 1]} : vector<16x32xf32> to vector<1x16xf32>
    %10 = arith.addf %8, %9 : vector<1x16xf32>
    %11 = vector.extract_strided_slice %7 {offsets = [1, 1], sizes = [1, 16], strides = [1, 1]} : vector<16x32xf32> to vector<1x16xf32>
    %12 = arith.addf %10, %11 : vector<1x16xf32>
    %13 = vector.extract_strided_slice %7 {offsets = [2, 2], sizes = [1, 16], strides = [1, 1]} : vector<16x32xf32> to vector<1x16xf32>
    %14 = arith.addf %12, %13 : vector<1x16xf32>
    %15 = vector.extract_strided_slice %7 {offsets = [3, 3], sizes = [1, 16], strides = [1, 1]} : vector<16x32xf32> to vector<1x16xf32>
    %16 = arith.addf %14, %15 : vector<1x16xf32>
    %17 = vector.extract_strided_slice %7 {offsets = [4, 4], sizes = [1, 16], strides = [1, 1]} : vector<16x32xf32> to vector<1x16xf32>
    %18 = arith.addf %16, %17 : vector<1x16xf32>
    %19 = vector.extract_strided_slice %7 {offsets = [5, 5], sizes = [1, 16], strides = [1, 1]} : vector<16x32xf32> to vector<1x16xf32>
    %20 = arith.addf %18, %19 : vector<1x16xf32>
    %21 = vector.extract_strided_slice %7 {offsets = [6, 6], sizes = [1, 16], strides = [1, 1]} : vector<16x32xf32> to vector<1x16xf32>
    %22 = arith.addf %20, %21 : vector<1x16xf32>
    %23 = vector.extract_strided_slice %7 {offsets = [7, 7], sizes = [1, 16], strides = [1, 1]} : vector<16x32xf32> to vector<1x16xf32>
    %24 = arith.addf %22, %23 : vector<1x16xf32>
    %25 = vector.extract_strided_slice %7 {offsets = [8, 8], sizes = [1, 16], strides = [1, 1]} : vector<16x32xf32> to vector<1x16xf32>
    %26 = arith.addf %24, %25 : vector<1x16xf32>
    %27 = vector.extract_strided_slice %7 {offsets = [9, 9], sizes = [1, 16], strides = [1, 1]} : vector<16x32xf32> to vector<1x16xf32>
    %28 = arith.addf %26, %27 : vector<1x16xf32>
    %29 = vector.extract_strided_slice %7 {offsets = [10, 10], sizes = [1, 16], strides = [1, 1]} : vector<16x32xf32> to vector<1x16xf32>
    %30 = arith.addf %28, %29 : vector<1x16xf32>
    %31 = vector.extract_strided_slice %7 {offsets = [11, 11], sizes = [1, 16], strides = [1, 1]} : vector<16x32xf32> to vector<1x16xf32>
    %32 = arith.addf %30, %31 : vector<1x16xf32>
    %33 = vector.extract_strided_slice %7 {offsets = [12, 12], sizes = [1, 16], strides = [1, 1]} : vector<16x32xf32> to vector<1x16xf32>
    %34 = arith.addf %32, %33 : vector<1x16xf32>
    %35 = vector.extract_strided_slice %7 {offsets = [13, 13], sizes = [1, 16], strides = [1, 1]} : vector<16x32xf32> to vector<1x16xf32>
    %36 = arith.addf %34, %35 : vector<1x16xf32>
    %37 = vector.extract_strided_slice %7 {offsets = [14, 14], sizes = [1, 16], strides = [1, 1]} : vector<16x32xf32> to vector<1x16xf32>
    %38 = arith.addf %36, %37 : vector<1x16xf32>
    %39 = vector.extract_strided_slice %7 {offsets = [15, 15], sizes = [1, 16], strides = [1, 1]} : vector<16x32xf32> to vector<1x16xf32>
    %40 = arith.addf %38, %39 : vector<1x16xf32>
    %cst_6 = arith.constant 3.125000e-02 : f32
    %41 = vector.broadcast %cst_6 : f32 to vector<1x16xf32>
    %42 = arith.mulf %40, %41 : vector<1x16xf32>
    %c0_7 = arith.constant 0 : index
    %c0_8 = arith.constant 0 : index
    %c0_9 = arith.constant 0 : index
    %43 = vector.load %arg3[%c0_7, %c0_8, %c0_9] : memref<1x1x16xf32, #tpu.memory_space<vmem>>, vector<1x1x16xf32>
    %44 = vector.shape_cast %43 : vector<1x1x16xf32> to vector<1x16xf32>
    %45 = vector.shape_cast %42 : vector<1x16xf32> to vector<1x1x16xf32>
    tpu.vector_store %arg3[%c0_7, %c0_8, %c0_9], %45 {strides = array<i32>} : memref<1x1x16xf32, #tpu.memory_space<vmem>>, vector<1x1x16xf32>,
    return
  }
  func.func @transform_0(%arg0: i32) -> (i32, i32, i32) {
    %c0_i32 = arith.constant 0 : i32
    %c0_i32_0 = arith.constant 0 : i32
    %c0_i32_1 = arith.constant 0 : i32
    return %arg0, %c0_i32, %c0_i32_0 : i32, i32, i32
  }
  func.func @transform_1(%arg0: i32) -> (i32, i32, i32) {
    %c0_i32 = arith.constant 0 : i32
    %c0_i32_0 = arith.constant 0 : i32
    %c0_i32_1 = arith.constant 0 : i32
    return %arg0, %c0_i32, %c0_i32_0 : i32, i32, i32
  }
  func.func @transform_2(%arg0: i32) -> (i32, i32, i32) {
    %c0_i32 = arith.constant 0 : i32
    %c0_i32_0 = arith.constant 0 : i32
    %c0_i32_1 = arith.constant 0 : i32
    return %arg0, %c0_i32, %c0_i32_0 : i32, i32, i32
  }
}

module attributes {stable_mosaic.version = 11 : i64} {
  func.func @_linear_kernel(%arg0: i32, %arg1: memref<32x32xf32, #tpu.memory_space<vmem>>, %arg2: memref<32x32xbf16, #tpu.memory_space<vmem>>, %arg3: memref<1x32xf32, #tpu.memory_space<vmem>>, %arg4: memref<32x32xf32, #tpu.memory_space<vmem>>) attributes {dimension_semantics = [#tpu.dimension_semantics<parallel>], iteration_bounds = array<i64: 1>, scalar_prefetch = 0 : i64, scratch_operands = 0 : i64, tpu.core_type = #tpu.core_type<tc>, window_params = [{transform_indices = @transform_0, window_bounds = array<i64: 32, 32>}, {pipeline_mode = #tpu.pipeline_mode<synchronous>, transform_indices = @transform_1, window_bounds = array<i64: 32, 32>}, {pipeline_mode = #tpu.pipeline_mode<synchronous>, transform_indices = @transform_2, window_bounds = array<i64: 1, 32>}, {transform_indices = @transform_3, window_bounds = array<i64: 32, 32>}]} {
    %c0 = arith.constant 0 : index
    %c0_0 = arith.constant 0 : index
    %0 = vector.load %arg1[%c0, %c0_0] : memref<32x32xf32, #tpu.memory_space<vmem>>, vector<32x32xf32>
    %1 = arith.truncf %0 : vector<32x32xf32> to vector<32x32xbf16>
    %c0_1 = arith.constant 0 : index
    %c0_2 = arith.constant 0 : index
    %2 = vector.load %arg2[%c0_1, %c0_2] : memref<32x32xbf16, #tpu.memory_space<vmem>>, vector<32x32xbf16>
    %cst = arith.constant dense<0.000000e+00> : vector<32x32xf32>
    %3 = tpu.matmul %1, %2, %cst {dimension_numbers = #tpu.dot_dimension_numbers<[1], [0], [0], [1], [0, 0, 1, 1], [], []>} : vector<32x32xbf16>, vector<32x32xbf16>, vector<32x32xf32> -> vector<32x32xf32>
    %c0_3 = arith.constant 0 : index
    %c0_4 = arith.constant 0 : index
    %4 = vector.load %arg3[%c0_3, %c0_4] : memref<1x32xf32, #tpu.memory_space<vmem>>, vector<1x32xf32>
    %5 = vector.broadcast %4 : vector<1x32xf32> to vector<32x32xf32>
    %6 = arith.addf %3, %5 : vector<32x32xf32>
    %c0_5 = arith.constant 0 : index
    %c0_6 = arith.constant 0 : index
    %7 = vector.load %arg4[%c0_5, %c0_6] : memref<32x32xf32, #tpu.memory_space<vmem>>, vector<32x32xf32>
    tpu.vector_store %arg4[%c0_5, %c0_6], %6 {strides = array<i32>} : memref<32x32xf32, #tpu.memory_space<vmem>>, vector<32x32xf32>,
    return
  }
  func.func @transform_0(%arg0: i32) -> (i32, i32) {
    %c0_i32 = arith.constant 0 : i32
    %c0_i32_0 = arith.constant 0 : i32
    return %arg0, %c0_i32 : i32, i32
  }
  func.func @transform_1(%arg0: i32) -> (i32, i32) {
    %c0_i32 = arith.constant 0 : i32
    %c0_i32_0 = arith.constant 0 : i32
    %c0_i32_1 = arith.constant 0 : i32
    return %c0_i32, %c0_i32_0 : i32, i32
  }
  func.func @transform_2(%arg0: i32) -> (i32, i32) {
    %c0_i32 = arith.constant 0 : i32
    %c0_i32_0 = arith.constant 0 : i32
    %c0_i32_1 = arith.constant 0 : i32
    return %c0_i32, %c0_i32_0 : i32, i32
  }
  func.func @transform_3(%arg0: i32) -> (i32, i32) {
    %c0_i32 = arith.constant 0 : i32
    %c0_i32_0 = arith.constant 0 : i32
    return %arg0, %c0_i32 : i32, i32
  }
}

module attributes {stable_mosaic.version = 11 : i64} {
  func.func @_agg_proj_decomp_kernel(%arg0: i32, %arg1: memref<2x2xi32, #tpu.memory_space<smem>>, %arg2: memref<2x2xf32, #tpu.memory_space<smem>>, %arg3: memref<1x16x32xf32, #tpu.memory_space<vmem>>, %arg4: memref<1x16x32xf32, #tpu.memory_space<vmem>>, %arg5: memref<32x32xbf16, #tpu.memory_space<vmem>>, %arg6: memref<1x32xf32, #tpu.memory_space<vmem>>, %arg7: memref<1x16x32xf32, #tpu.memory_space<vmem>>) attributes {dimension_semantics = [#tpu.dimension_semantics<parallel>], iteration_bounds = array<i64: 2>, scalar_prefetch = 0 : i64, scratch_operands = 0 : i64, tpu.core_type = #tpu.core_type<tc>, window_params = [{transform_indices = @transform_0, window_bounds = array<i64: 2, 2>}, {transform_indices = @transform_1, window_bounds = array<i64: 2, 2>}, {transform_indices = @transform_2, window_bounds = array<i64: 1, 16, 32>}, {transform_indices = @transform_3, window_bounds = array<i64: 1, 16, 32>}, {pipeline_mode = #tpu.pipeline_mode<synchronous>, transform_indices = @transform_4, window_bounds = array<i64: 32, 32>}, {pipeline_mode = #tpu.pipeline_mode<synchronous>, transform_indices = @transform_5, window_bounds = array<i64: 1, 32>}, {transform_indices = @transform_6, window_bounds = array<i64: 1, 16, 32>}]} {
    %c0 = arith.constant 0 : index
    %c0_0 = arith.constant 0 : index
    %c0_1 = arith.constant 0 : index
    %0 = vector.load %arg3[%c0, %c0_0, %c0_1] : memref<1x16x32xf32, #tpu.memory_space<vmem>>, vector<1x16x32xf32>
    %1 = vector.shape_cast %0 : vector<1x16x32xf32> to vector<16x32xf32>
    %c0_2 = arith.constant 0 : index
    %c0_3 = arith.constant 0 : index
    %c0_4 = arith.constant 0 : index
    %2 = vector.load %arg4[%c0_2, %c0_3, %c0_4] : memref<1x16x32xf32, #tpu.memory_space<vmem>>, vector<1x16x32xf32>
    %3 = vector.shape_cast %2 : vector<1x16x32xf32> to vector<16x32xf32>
    %4 = tpu.iota {dimensions = array<i32: 0>} : vector<16x16xi32>
    %5 = tpu.iota {dimensions = array<i32: 1>} : vector<16x16xi32>
    %cst = arith.constant 0.000000e+00 : f32
    %6 = vector.broadcast %cst : f32 to vector<16x16xf32>
    %7 = arith.index_cast %arg0 : i32 to index
    %c0_5 = arith.constant 0 : index
    %8 = memref.load %arg1[%7, %c0_5] : memref<2x2xi32, #tpu.memory_space<smem>>
    %9 = arith.index_cast %arg0 : i32 to index
    %c0_6 = arith.constant 0 : index
    %10 = memref.load %arg2[%9, %c0_6] : memref<2x2xf32, #tpu.memory_space<smem>>
    %11 = vector.broadcast %8 : i32 to vector<16x16xi32>
    %12 = arith.addi %4, %11 : vector<16x16xi32>
    %c16_i32 = arith.constant 16 : i32
    %13 = vector.broadcast %c16_i32 : i32 to vector<16x16xi32>
    %14 = arith.cmpi sge, %12, %13 : vector<16x16xi32>
    %c16_i32_7 = arith.constant 16 : i32
    %15 = vector.broadcast %c16_i32_7 : i32 to vector<16x16xi32>
    %16 = arith.subi %12, %15 : vector<16x16xi32>
    %17 = arith.select %14, %16, %12 : vector<16x16xi1>, vector<16x16xi32>
    %18 = arith.cmpi eq, %5, %17 : vector<16x16xi32>
    %cst_8 = arith.constant 0.000000e+00 : f32
    %19 = vector.broadcast %10 : f32 to vector<16x16xf32>
    %20 = vector.broadcast %cst_8 : f32 to vector<16x16xf32>
    %21 = arith.select %18, %19, %20 : vector<16x16xi1>, vector<16x16xf32>
    %22 = arith.addf %6, %21 : vector<16x16xf32>
    %23 = arith.index_cast %arg0 : i32 to index
    %c1 = arith.constant 1 : index
    %24 = memref.load %arg1[%23, %c1] : memref<2x2xi32, #tpu.memory_space<smem>>
    %25 = arith.index_cast %arg0 : i32 to index
    %c1_9 = arith.constant 1 : index
    %26 = memref.load %arg2[%25, %c1_9] : memref<2x2xf32, #tpu.memory_space<smem>>
    %27 = vector.broadcast %24 : i32 to vector<16x16xi32>
    %28 = arith.addi %4, %27 : vector<16x16xi32>
    %c16_i32_10 = arith.constant 16 : i32
    %29 = vector.broadcast %c16_i32_10 : i32 to vector<16x16xi32>
    %30 = arith.cmpi sge, %28, %29 : vector<16x16xi32>
    %c16_i32_11 = arith.constant 16 : i32
    %31 = vector.broadcast %c16_i32_11 : i32 to vector<16x16xi32>
    %32 = arith.subi %28, %31 : vector<16x16xi32>
    %33 = arith.select %30, %32, %28 : vector<16x16xi1>, vector<16x16xi32>
    %34 = arith.cmpi eq, %5, %33 : vector<16x16xi32>
    %cst_12 = arith.constant 0.000000e+00 : f32
    %35 = vector.broadcast %26 : f32 to vector<16x16xf32>
    %36 = vector.broadcast %cst_12 : f32 to vector<16x16xf32>
    %37 = arith.select %34, %35, %36 : vector<16x16xi1>, vector<16x16xf32>
    %38 = arith.addf %22, %37 : vector<16x16xf32>
    %39 = arith.truncf %38 : vector<16x16xf32> to vector<16x16xbf16>
    %40 = arith.truncf %1 : vector<16x32xf32> to vector<16x32xbf16>
    %cst_13 = arith.constant dense<0.000000e+00> : vector<16x32xf32>
    %41 = tpu.matmul %39, %40, %cst_13 {dimension_numbers = #tpu.dot_dimension_numbers<[1], [0], [0], [1], [0, 0, 1, 1], [], []>} : vector<16x16xbf16>, vector<16x32xbf16>, vector<16x32xf32> -> vector<16x32xf32>
    %42 = arith.truncf %41 : vector<16x32xf32> to vector<16x32xbf16>
    %c0_14 = arith.constant 0 : index
    %c0_15 = arith.constant 0 : index
    %43 = vector.load %arg5[%c0_14, %c0_15] : memref<32x32xbf16, #tpu.memory_space<vmem>>, vector<32x32xbf16>
    %cst_16 = arith.constant dense<0.000000e+00> : vector<16x32xf32>
    %44 = tpu.matmul %42, %43, %cst_16 {dimension_numbers = #tpu.dot_dimension_numbers<[1], [0], [0], [1], [0, 0, 1, 1], [], []>} : vector<16x32xbf16>, vector<32x32xbf16>, vector<16x32xf32> -> vector<16x32xf32>
    %c0_17 = arith.constant 0 : index
    %c0_18 = arith.constant 0 : index
    %45 = vector.load %arg6[%c0_17, %c0_18] : memref<1x32xf32, #tpu.memory_space<vmem>>, vector<1x32xf32>
    %46 = vector.broadcast %45 : vector<1x32xf32> to vector<16x32xf32>
    %47 = arith.addf %44, %46 : vector<16x32xf32>
    %48 = arith.addf %3, %47 : vector<16x32xf32>
    %49 = vector.extract_strided_slice %48 {offsets = [0, 0], sizes = [1, 32], strides = [1, 1]} : vector<16x32xf32> to vector<1x32xf32>
    %50 = vector.shape_cast %49 : vector<1x32xf32> to vector<1x32xf32>
    %51 = vector.broadcast %50 : vector<1x32xf32> to vector<2x32xf32>
    %52 = vector.extract_strided_slice %48 {offsets = [15, 0], sizes = [1, 32], strides = [1, 1]} : vector<16x32xf32> to vector<1x32xf32>
    %53 = vector.shape_cast %52 : vector<1x32xf32> to vector<1x32xf32>
    %54 = vector.broadcast %53 : vector<1x32xf32> to vector<2x32xf32>
    %55 = tpu.concatenate %51, %48, %54 in 0 : vector<2x32xf32>, vector<16x32xf32>, vector<2x32xf32> -> vector<20x32xf32>
    %56 = vector.extract_strided_slice %55 {offsets = [0, 0], sizes = [16, 32], strides = [1, 1]} : vector<20x32xf32> to vector<16x32xf32>
    %57 = vector.extract_strided_slice %55 {offsets = [1, 0], sizes = [16, 32], strides = [1, 1]} : vector<20x32xf32> to vector<16x32xf32>
    %58 = arith.addf %56, %57 : vector<16x32xf32>
    %59 = vector.extract_strided_slice %55 {offsets = [2, 0], sizes = [16, 32], strides = [1, 1]} : vector<20x32xf32> to vector<16x32xf32>
    %60 = arith.addf %58, %59 : vector<16x32xf32>
    %61 = vector.extract_strided_slice %55 {offsets = [3, 0], sizes = [16, 32], strides = [1, 1]} : vector<20x32xf32> to vector<16x32xf32>
    %62 = arith.addf %60, %61 : vector<16x32xf32>
    %63 = vector.extract_strided_slice %55 {offsets = [4, 0], sizes = [16, 32], strides = [1, 1]} : vector<20x32xf32> to vector<16x32xf32>
    %64 = arith.addf %62, %63 : vector<16x32xf32>
    %cst_19 = arith.constant 2.000000e-01 : f32
    %65 = vector.broadcast %cst_19 : f32 to vector<16x32xf32>
    %66 = arith.mulf %64, %65 : vector<16x32xf32>
    %67 = arith.subf %48, %66 : vector<16x32xf32>
    %c0_20 = arith.constant 0 : index
    %c0_21 = arith.constant 0 : index
    %c0_22 = arith.constant 0 : index
    %68 = vector.load %arg7[%c0_20, %c0_21, %c0_22] : memref<1x16x32xf32, #tpu.memory_space<vmem>>, vector<1x16x32xf32>
    %69 = vector.shape_cast %68 : vector<1x16x32xf32> to vector<16x32xf32>
    %70 = vector.shape_cast %67 : vector<16x32xf32> to vector<1x16x32xf32>
    tpu.vector_store %arg7[%c0_20, %c0_21, %c0_22], %70 {strides = array<i32>} : memref<1x16x32xf32, #tpu.memory_space<vmem>>, vector<1x16x32xf32>,
    return
  }
  func.func @transform_0(%arg0: i32) -> (i32, i32) {
    %c0_i32 = arith.constant 0 : i32
    %c0_i32_0 = arith.constant 0 : i32
    %c0_i32_1 = arith.constant 0 : i32
    return %c0_i32, %c0_i32_0 : i32, i32
  }
  func.func @transform_1(%arg0: i32) -> (i32, i32) {
    %c0_i32 = arith.constant 0 : i32
    %c0_i32_0 = arith.constant 0 : i32
    %c0_i32_1 = arith.constant 0 : i32
    return %c0_i32, %c0_i32_0 : i32, i32
  }
  func.func @transform_2(%arg0: i32) -> (i32, i32, i32) {
    %c0_i32 = arith.constant 0 : i32
    %c0_i32_0 = arith.constant 0 : i32
    %c0_i32_1 = arith.constant 0 : i32
    return %arg0, %c0_i32, %c0_i32_0 : i32, i32, i32
  }
  func.func @transform_3(%arg0: i32) -> (i32, i32, i32) {
    %c0_i32 = arith.constant 0 : i32
    %c0_i32_0 = arith.constant 0 : i32
    %c0_i32_1 = arith.constant 0 : i32
    return %arg0, %c0_i32, %c0_i32_0 : i32, i32, i32
  }
  func.func @transform_4(%arg0: i32) -> (i32, i32) {
    %c0_i32 = arith.constant 0 : i32
    %c0_i32_0 = arith.constant 0 : i32
    %c0_i32_1 = arith.constant 0 : i32
    return %c0_i32, %c0_i32_0 : i32, i32
  }
  func.func @transform_5(%arg0: i32) -> (i32, i32) {
    %c0_i32 = arith.constant 0 : i32
    %c0_i32_0 = arith.constant 0 : i32
    %c0_i32_1 = arith.constant 0 : i32
    return %c0_i32, %c0_i32_0 : i32, i32
  }
  func.func @transform_6(%arg0: i32) -> (i32, i32, i32) {
    %c0_i32 = arith.constant 0 : i32
    %c0_i32_0 = arith.constant 0 : i32
    %c0_i32_1 = arith.constant 0 : i32
    return %arg0, %c0_i32, %c0_i32_0 : i32, i32, i32
  }
}

module attributes {stable_mosaic.version = 11 : i64} {
  func.func @_agg_proj_decomp_kernel(%arg0: i32, %arg1: memref<2x2xi32, #tpu.memory_space<smem>>, %arg2: memref<2x2xf32, #tpu.memory_space<smem>>, %arg3: memref<1x16x32xf32, #tpu.memory_space<vmem>>, %arg4: memref<1x16x32xf32, #tpu.memory_space<vmem>>, %arg5: memref<32x32xbf16, #tpu.memory_space<vmem>>, %arg6: memref<1x32xf32, #tpu.memory_space<vmem>>, %arg7: memref<1x16x32xf32, #tpu.memory_space<vmem>>, %arg8: memref<1x16x32xf32, #tpu.memory_space<vmem>>) attributes {dimension_semantics = [#tpu.dimension_semantics<parallel>], iteration_bounds = array<i64: 2>, scalar_prefetch = 0 : i64, scratch_operands = 0 : i64, tpu.core_type = #tpu.core_type<tc>, window_params = [{transform_indices = @transform_0, window_bounds = array<i64: 2, 2>}, {transform_indices = @transform_1, window_bounds = array<i64: 2, 2>}, {transform_indices = @transform_2, window_bounds = array<i64: 1, 16, 32>}, {transform_indices = @transform_3, window_bounds = array<i64: 1, 16, 32>}, {pipeline_mode = #tpu.pipeline_mode<synchronous>, transform_indices = @transform_4, window_bounds = array<i64: 32, 32>}, {pipeline_mode = #tpu.pipeline_mode<synchronous>, transform_indices = @transform_5, window_bounds = array<i64: 1, 32>}, {transform_indices = @transform_6, window_bounds = array<i64: 1, 16, 32>}, {transform_indices = @transform_7, window_bounds = array<i64: 1, 16, 32>}]} {
    %c0 = arith.constant 0 : index
    %c0_0 = arith.constant 0 : index
    %c0_1 = arith.constant 0 : index
    %0 = vector.load %arg3[%c0, %c0_0, %c0_1] : memref<1x16x32xf32, #tpu.memory_space<vmem>>, vector<1x16x32xf32>
    %1 = vector.shape_cast %0 : vector<1x16x32xf32> to vector<16x32xf32>
    %c0_2 = arith.constant 0 : index
    %c0_3 = arith.constant 0 : index
    %c0_4 = arith.constant 0 : index
    %2 = vector.load %arg4[%c0_2, %c0_3, %c0_4] : memref<1x16x32xf32, #tpu.memory_space<vmem>>, vector<1x16x32xf32>
    %3 = vector.shape_cast %2 : vector<1x16x32xf32> to vector<16x32xf32>
    %4 = tpu.iota {dimensions = array<i32: 0>} : vector<16x16xi32>
    %5 = tpu.iota {dimensions = array<i32: 1>} : vector<16x16xi32>
    %cst = arith.constant 0.000000e+00 : f32
    %6 = vector.broadcast %cst : f32 to vector<16x16xf32>
    %7 = arith.index_cast %arg0 : i32 to index
    %c0_5 = arith.constant 0 : index
    %8 = memref.load %arg1[%7, %c0_5] : memref<2x2xi32, #tpu.memory_space<smem>>
    %9 = arith.index_cast %arg0 : i32 to index
    %c0_6 = arith.constant 0 : index
    %10 = memref.load %arg2[%9, %c0_6] : memref<2x2xf32, #tpu.memory_space<smem>>
    %11 = vector.broadcast %8 : i32 to vector<16x16xi32>
    %12 = arith.addi %4, %11 : vector<16x16xi32>
    %c16_i32 = arith.constant 16 : i32
    %13 = vector.broadcast %c16_i32 : i32 to vector<16x16xi32>
    %14 = arith.cmpi sge, %12, %13 : vector<16x16xi32>
    %c16_i32_7 = arith.constant 16 : i32
    %15 = vector.broadcast %c16_i32_7 : i32 to vector<16x16xi32>
    %16 = arith.subi %12, %15 : vector<16x16xi32>
    %17 = arith.select %14, %16, %12 : vector<16x16xi1>, vector<16x16xi32>
    %18 = arith.cmpi eq, %5, %17 : vector<16x16xi32>
    %cst_8 = arith.constant 0.000000e+00 : f32
    %19 = vector.broadcast %10 : f32 to vector<16x16xf32>
    %20 = vector.broadcast %cst_8 : f32 to vector<16x16xf32>
    %21 = arith.select %18, %19, %20 : vector<16x16xi1>, vector<16x16xf32>
    %22 = arith.addf %6, %21 : vector<16x16xf32>
    %23 = arith.index_cast %arg0 : i32 to index
    %c1 = arith.constant 1 : index
    %24 = memref.load %arg1[%23, %c1] : memref<2x2xi32, #tpu.memory_space<smem>>
    %25 = arith.index_cast %arg0 : i32 to index
    %c1_9 = arith.constant 1 : index
    %26 = memref.load %arg2[%25, %c1_9] : memref<2x2xf32, #tpu.memory_space<smem>>
    %27 = vector.broadcast %24 : i32 to vector<16x16xi32>
    %28 = arith.addi %4, %27 : vector<16x16xi32>
    %c16_i32_10 = arith.constant 16 : i32
    %29 = vector.broadcast %c16_i32_10 : i32 to vector<16x16xi32>
    %30 = arith.cmpi sge, %28, %29 : vector<16x16xi32>
    %c16_i32_11 = arith.constant 16 : i32
    %31 = vector.broadcast %c16_i32_11 : i32 to vector<16x16xi32>
    %32 = arith.subi %28, %31 : vector<16x16xi32>
    %33 = arith.select %30, %32, %28 : vector<16x16xi1>, vector<16x16xi32>
    %34 = arith.cmpi eq, %5, %33 : vector<16x16xi32>
    %cst_12 = arith.constant 0.000000e+00 : f32
    %35 = vector.broadcast %26 : f32 to vector<16x16xf32>
    %36 = vector.broadcast %cst_12 : f32 to vector<16x16xf32>
    %37 = arith.select %34, %35, %36 : vector<16x16xi1>, vector<16x16xf32>
    %38 = arith.addf %22, %37 : vector<16x16xf32>
    %39 = arith.truncf %38 : vector<16x16xf32> to vector<16x16xbf16>
    %40 = arith.truncf %1 : vector<16x32xf32> to vector<16x32xbf16>
    %cst_13 = arith.constant dense<0.000000e+00> : vector<16x32xf32>
    %41 = tpu.matmul %39, %40, %cst_13 {dimension_numbers = #tpu.dot_dimension_numbers<[1], [0], [0], [1], [0, 0, 1, 1], [], []>} : vector<16x16xbf16>, vector<16x32xbf16>, vector<16x32xf32> -> vector<16x32xf32>
    %42 = arith.truncf %41 : vector<16x32xf32> to vector<16x32xbf16>
    %c0_14 = arith.constant 0 : index
    %c0_15 = arith.constant 0 : index
    %43 = vector.load %arg5[%c0_14, %c0_15] : memref<32x32xbf16, #tpu.memory_space<vmem>>, vector<32x32xbf16>
    %cst_16 = arith.constant dense<0.000000e+00> : vector<16x32xf32>
    %44 = tpu.matmul %42, %43, %cst_16 {dimension_numbers = #tpu.dot_dimension_numbers<[1], [0], [0], [1], [0, 0, 1, 1], [], []>} : vector<16x32xbf16>, vector<32x32xbf16>, vector<16x32xf32> -> vector<16x32xf32>
    %c0_17 = arith.constant 0 : index
    %c0_18 = arith.constant 0 : index
    %45 = vector.load %arg6[%c0_17, %c0_18] : memref<1x32xf32, #tpu.memory_space<vmem>>, vector<1x32xf32>
    %46 = vector.broadcast %45 : vector<1x32xf32> to vector<16x32xf32>
    %47 = arith.addf %44, %46 : vector<16x32xf32>
    %48 = arith.addf %3, %47 : vector<16x32xf32>
    %49 = vector.extract_strided_slice %48 {offsets = [0, 0], sizes = [1, 32], strides = [1, 1]} : vector<16x32xf32> to vector<1x32xf32>
    %50 = vector.shape_cast %49 : vector<1x32xf32> to vector<1x32xf32>
    %51 = vector.broadcast %50 : vector<1x32xf32> to vector<2x32xf32>
    %52 = vector.extract_strided_slice %48 {offsets = [15, 0], sizes = [1, 32], strides = [1, 1]} : vector<16x32xf32> to vector<1x32xf32>
    %53 = vector.shape_cast %52 : vector<1x32xf32> to vector<1x32xf32>
    %54 = vector.broadcast %53 : vector<1x32xf32> to vector<2x32xf32>
    %55 = tpu.concatenate %51, %48, %54 in 0 : vector<2x32xf32>, vector<16x32xf32>, vector<2x32xf32> -> vector<20x32xf32>
    %56 = vector.extract_strided_slice %55 {offsets = [0, 0], sizes = [16, 32], strides = [1, 1]} : vector<20x32xf32> to vector<16x32xf32>
    %57 = vector.extract_strided_slice %55 {offsets = [1, 0], sizes = [16, 32], strides = [1, 1]} : vector<20x32xf32> to vector<16x32xf32>
    %58 = arith.addf %56, %57 : vector<16x32xf32>
    %59 = vector.extract_strided_slice %55 {offsets = [2, 0], sizes = [16, 32], strides = [1, 1]} : vector<20x32xf32> to vector<16x32xf32>
    %60 = arith.addf %58, %59 : vector<16x32xf32>
    %61 = vector.extract_strided_slice %55 {offsets = [3, 0], sizes = [16, 32], strides = [1, 1]} : vector<20x32xf32> to vector<16x32xf32>
    %62 = arith.addf %60, %61 : vector<16x32xf32>
    %63 = vector.extract_strided_slice %55 {offsets = [4, 0], sizes = [16, 32], strides = [1, 1]} : vector<20x32xf32> to vector<16x32xf32>
    %64 = arith.addf %62, %63 : vector<16x32xf32>
    %cst_19 = arith.constant 2.000000e-01 : f32
    %65 = vector.broadcast %cst_19 : f32 to vector<16x32xf32>
    %66 = arith.mulf %64, %65 : vector<16x32xf32>
    %67 = arith.subf %48, %66 : vector<16x32xf32>
    %c0_20 = arith.constant 0 : index
    %c0_21 = arith.constant 0 : index
    %c0_22 = arith.constant 0 : index
    %68 = vector.load %arg7[%c0_20, %c0_21, %c0_22] : memref<1x16x32xf32, #tpu.memory_space<vmem>>, vector<1x16x32xf32>
    %69 = vector.shape_cast %68 : vector<1x16x32xf32> to vector<16x32xf32>
    %70 = vector.shape_cast %67 : vector<16x32xf32> to vector<1x16x32xf32>
    tpu.vector_store %arg7[%c0_20, %c0_21, %c0_22], %70 {strides = array<i32>} : memref<1x16x32xf32, #tpu.memory_space<vmem>>, vector<1x16x32xf32>,
    %c0_23 = arith.constant 0 : index
    %c0_24 = arith.constant 0 : index
    %c0_25 = arith.constant 0 : index
    %71 = vector.load %arg8[%c0_23, %c0_24, %c0_25] : memref<1x16x32xf32, #tpu.memory_space<vmem>>, vector<1x16x32xf32>
    %72 = vector.shape_cast %71 : vector<1x16x32xf32> to vector<16x32xf32>
    %73 = vector.shape_cast %66 : vector<16x32xf32> to vector<1x16x32xf32>
    tpu.vector_store %arg8[%c0_23, %c0_24, %c0_25], %73 {strides = array<i32>} : memref<1x16x32xf32, #tpu.memory_space<vmem>>, vector<1x16x32xf32>,
    return
  }
  func.func @transform_0(%arg0: i32) -> (i32, i32) {
    %c0_i32 = arith.constant 0 : i32
    %c0_i32_0 = arith.constant 0 : i32
    %c0_i32_1 = arith.constant 0 : i32
    return %c0_i32, %c0_i32_0 : i32, i32
  }
  func.func @transform_1(%arg0: i32) -> (i32, i32) {
    %c0_i32 = arith.constant 0 : i32
    %c0_i32_0 = arith.constant 0 : i32
    %c0_i32_1 = arith.constant 0 : i32
    return %c0_i32, %c0_i32_0 : i32, i32
  }
  func.func @transform_2(%arg0: i32) -> (i32, i32, i32) {
    %c0_i32 = arith.constant 0 : i32
    %c0_i32_0 = arith.constant 0 : i32
    %c0_i32_1 = arith.constant 0 : i32
    return %arg0, %c0_i32, %c0_i32_0 : i32, i32, i32
  }
  func.func @transform_3(%arg0: i32) -> (i32, i32, i32) {
    %c0_i32 = arith.constant 0 : i32
    %c0_i32_0 = arith.constant 0 : i32
    %c0_i32_1 = arith.constant 0 : i32
    return %arg0, %c0_i32, %c0_i32_0 : i32, i32, i32
  }
  func.func @transform_4(%arg0: i32) -> (i32, i32) {
    %c0_i32 = arith.constant 0 : i32
    %c0_i32_0 = arith.constant 0 : i32
    %c0_i32_1 = arith.constant 0 : i32
    return %c0_i32, %c0_i32_0 : i32, i32
  }
  func.func @transform_5(%arg0: i32) -> (i32, i32) {
    %c0_i32 = arith.constant 0 : i32
    %c0_i32_0 = arith.constant 0 : i32
    %c0_i32_1 = arith.constant 0 : i32
    return %c0_i32, %c0_i32_0 : i32, i32
  }
  func.func @transform_6(%arg0: i32) -> (i32, i32, i32) {
    %c0_i32 = arith.constant 0 : i32
    %c0_i32_0 = arith.constant 0 : i32
    %c0_i32_1 = arith.constant 0 : i32
    return %arg0, %c0_i32, %c0_i32_0 : i32, i32, i32
  }
  func.func @transform_7(%arg0: i32) -> (i32, i32, i32) {
    %c0_i32 = arith.constant 0 : i32
    %c0_i32_0 = arith.constant 0 : i32
    %c0_i32_1 = arith.constant 0 : i32
    return %arg0, %c0_i32, %c0_i32_0 : i32, i32, i32
  }
}

module attributes {stable_mosaic.version = 11 : i64} {
  func.func @_my_layernorm_kernel(%arg0: i32, %arg1: memref<1x16x32xf32, #tpu.memory_space<vmem>>, %arg2: memref<1x32xf32, #tpu.memory_space<vmem>>, %arg3: memref<1x32xf32, #tpu.memory_space<vmem>>, %arg4: memref<1x16x32xf32, #tpu.memory_space<vmem>>) attributes {dimension_semantics = [#tpu.dimension_semantics<parallel>], iteration_bounds = array<i64: 2>, scalar_prefetch = 0 : i64, scratch_operands = 0 : i64, tpu.core_type = #tpu.core_type<tc>, window_params = [{transform_indices = @transform_0, window_bounds = array<i64: 1, 16, 32>}, {pipeline_mode = #tpu.pipeline_mode<synchronous>, transform_indices = @transform_1, window_bounds = array<i64: 1, 32>}, {pipeline_mode = #tpu.pipeline_mode<synchronous>, transform_indices = @transform_2, window_bounds = array<i64: 1, 32>}, {transform_indices = @transform_3, window_bounds = array<i64: 1, 16, 32>}]} {
    %c0 = arith.constant 0 : index
    %c0_0 = arith.constant 0 : index
    %c0_1 = arith.constant 0 : index
    %0 = vector.load %arg1[%c0, %c0_0, %c0_1] : memref<1x16x32xf32, #tpu.memory_space<vmem>>, vector<1x16x32xf32>
    %1 = vector.shape_cast %0 : vector<1x16x32xf32> to vector<16x32xf32>
    %c0_2 = arith.constant 0 : index
    %c0_3 = arith.constant 0 : index
    %2 = vector.load %arg2[%c0_2, %c0_3] : memref<1x32xf32, #tpu.memory_space<vmem>>, vector<1x32xf32>
    %c0_4 = arith.constant 0 : index
    %c0_5 = arith.constant 0 : index
    %3 = vector.load %arg3[%c0_4, %c0_5] : memref<1x32xf32, #tpu.memory_space<vmem>>, vector<1x32xf32>
    %cst = arith.constant dense<0.000000e+00> : vector<16xf32>
    %4 = vector.multi_reduction <add>, %1, %cst [1] : vector<16x32xf32> to vector<16xf32>
    %5 = vector.shape_cast %4 : vector<16xf32> to vector<16x1xf32>
    %cst_6 = arith.constant 3.200000e+01 : f32
    %6 = vector.broadcast %cst_6 : f32 to vector<16x1xf32>
    %7 = arith.divf %5, %6 : vector<16x1xf32>
    %8 = vector.broadcast %7 : vector<16x1xf32> to vector<16x32xf32>
    %9 = arith.subf %1, %8 : vector<16x32xf32>
    %10 = arith.mulf %9, %9 : vector<16x32xf32>
    %cst_7 = arith.constant dense<0.000000e+00> : vector<16xf32>
    %11 = vector.multi_reduction <add>, %10, %cst_7 [1] : vector<16x32xf32> to vector<16xf32>
    %12 = vector.shape_cast %11 : vector<16xf32> to vector<16x1xf32>
    %cst_8 = arith.constant 3.200000e+01 : f32
    %13 = vector.broadcast %cst_8 : f32 to vector<16x1xf32>
    %14 = arith.divf %12, %13 : vector<16x1xf32>
    %15 = vector.broadcast %7 : vector<16x1xf32> to vector<16x32xf32>
    %16 = arith.subf %1, %15 : vector<16x32xf32>
    %cst_9 = arith.constant 9.99999974E-6 : f32
    %17 = vector.broadcast %cst_9 : f32 to vector<16x1xf32>
    %18 = arith.addf %14, %17 : vector<16x1xf32>
    %19 = math.rsqrt %18 : vector<16x1xf32>
    %20 = vector.broadcast %19 : vector<16x1xf32> to vector<16x32xf32>
    %21 = arith.mulf %16, %20 : vector<16x32xf32>
    %22 = vector.broadcast %2 : vector<1x32xf32> to vector<16x32xf32>
    %23 = arith.mulf %21, %22 : vector<16x32xf32>
    %24 = vector.broadcast %3 : vector<1x32xf32> to vector<16x32xf32>
    %25 = arith.addf %23, %24 : vector<16x32xf32>
    %cst_10 = arith.constant dense<0.000000e+00> : vector<32xf32>
    %26 = vector.multi_reduction <add>, %25, %cst_10 [0] : vector<16x32xf32> to vector<32xf32>
    %27 = vector.shape_cast %26 : vector<32xf32> to vector<1x32xf32>
    %cst_11 = arith.constant 1.600000e+01 : f32
    %28 = vector.broadcast %cst_11 : f32 to vector<1x32xf32>
    %29 = arith.divf %27, %28 : vector<1x32xf32>
    %30 = vector.broadcast %29 : vector<1x32xf32> to vector<16x32xf32>
    %31 = arith.subf %25, %30 : vector<16x32xf32>
    %c0_12 = arith.constant 0 : index
    %c0_13 = arith.constant 0 : index
    %c0_14 = arith.constant 0 : index
    %32 = vector.load %arg4[%c0_12, %c0_13, %c0_14] : memref<1x16x32xf32, #tpu.memory_space<vmem>>, vector<1x16x32xf32>
    %33 = vector.shape_cast %32 : vector<1x16x32xf32> to vector<16x32xf32>
    %34 = vector.shape_cast %31 : vector<16x32xf32> to vector<1x16x32xf32>
    tpu.vector_store %arg4[%c0_12, %c0_13, %c0_14], %34 {strides = array<i32>} : memref<1x16x32xf32, #tpu.memory_space<vmem>>, vector<1x16x32xf32>,
    return
  }
  func.func @transform_0(%arg0: i32) -> (i32, i32, i32) {
    %c0_i32 = arith.constant 0 : i32
    %c0_i32_0 = arith.constant 0 : i32
    %c0_i32_1 = arith.constant 0 : i32
    return %arg0, %c0_i32, %c0_i32_0 : i32, i32, i32
  }
  func.func @transform_1(%arg0: i32) -> (i32, i32) {
    %c0_i32 = arith.constant 0 : i32
    %c0_i32_0 = arith.constant 0 : i32
    %c0_i32_1 = arith.constant 0 : i32
    return %c0_i32, %c0_i32_0 : i32, i32
  }
  func.func @transform_2(%arg0: i32) -> (i32, i32) {
    %c0_i32 = arith.constant 0 : i32
    %c0_i32_0 = arith.constant 0 : i32
    %c0_i32_1 = arith.constant 0 : i32
    return %c0_i32, %c0_i32_0 : i32, i32
  }
  func.func @transform_3(%arg0: i32) -> (i32, i32, i32) {
    %c0_i32 = arith.constant 0 : i32
    %c0_i32_0 = arith.constant 0 : i32
    %c0_i32_1 = arith.constant 0 : i32
    return %arg0, %c0_i32, %c0_i32_0 : i32, i32, i32
  }
}

module attributes {stable_mosaic.version = 11 : i64} {
  func.func @_ffn_decomp_kernel(%arg0: i32, %arg1: memref<1x16x32xf32, #tpu.memory_space<vmem>>, %arg2: memref<32x64xbf16, #tpu.memory_space<vmem>>, %arg3: memref<64x32xbf16, #tpu.memory_space<vmem>>, %arg4: memref<1x16x32xf32, #tpu.memory_space<vmem>>) attributes {dimension_semantics = [#tpu.dimension_semantics<parallel>], iteration_bounds = array<i64: 2>, scalar_prefetch = 0 : i64, scratch_operands = 0 : i64, tpu.core_type = #tpu.core_type<tc>, window_params = [{transform_indices = @transform_0, window_bounds = array<i64: 1, 16, 32>}, {pipeline_mode = #tpu.pipeline_mode<synchronous>, transform_indices = @transform_1, window_bounds = array<i64: 32, 64>}, {pipeline_mode = #tpu.pipeline_mode<synchronous>, transform_indices = @transform_2, window_bounds = array<i64: 64, 32>}, {transform_indices = @transform_3, window_bounds = array<i64: 1, 16, 32>}]} {
    %c0 = arith.constant 0 : index
    %c0_0 = arith.constant 0 : index
    %c0_1 = arith.constant 0 : index
    %0 = vector.load %arg1[%c0, %c0_0, %c0_1] : memref<1x16x32xf32, #tpu.memory_space<vmem>>, vector<1x16x32xf32>
    %1 = vector.shape_cast %0 : vector<1x16x32xf32> to vector<16x32xf32>
    %2 = arith.truncf %1 : vector<16x32xf32> to vector<16x32xbf16>
    %c0_2 = arith.constant 0 : index
    %c0_3 = arith.constant 0 : index
    %3 = vector.load %arg2[%c0_2, %c0_3] : memref<32x64xbf16, #tpu.memory_space<vmem>>, vector<32x64xbf16>
    %cst = arith.constant dense<0.000000e+00> : vector<16x64xf32>
    %4 = tpu.matmul %2, %3, %cst {dimension_numbers = #tpu.dot_dimension_numbers<[1], [0], [0], [1], [0, 0, 1, 1], [], []>} : vector<16x32xbf16>, vector<32x64xbf16>, vector<16x64xf32> -> vector<16x64xf32>
    %cst_4 = arith.constant 0.000000e+00 : f32
    %5 = vector.broadcast %cst_4 : f32 to vector<16x64xf32>
    %6 = arith.maximumf %4, %5 : vector<16x64xf32>
    %7 = arith.truncf %6 : vector<16x64xf32> to vector<16x64xbf16>
    %c0_5 = arith.constant 0 : index
    %c0_6 = arith.constant 0 : index
    %8 = vector.load %arg3[%c0_5, %c0_6] : memref<64x32xbf16, #tpu.memory_space<vmem>>, vector<64x32xbf16>
    %cst_7 = arith.constant dense<0.000000e+00> : vector<16x32xf32>
    %9 = tpu.matmul %7, %8, %cst_7 {dimension_numbers = #tpu.dot_dimension_numbers<[1], [0], [0], [1], [0, 0, 1, 1], [], []>} : vector<16x64xbf16>, vector<64x32xbf16>, vector<16x32xf32> -> vector<16x32xf32>
    %10 = arith.addf %1, %9 : vector<16x32xf32>
    %11 = vector.extract_strided_slice %10 {offsets = [0, 0], sizes = [1, 32], strides = [1, 1]} : vector<16x32xf32> to vector<1x32xf32>
    %12 = vector.shape_cast %11 : vector<1x32xf32> to vector<1x32xf32>
    %13 = vector.broadcast %12 : vector<1x32xf32> to vector<2x32xf32>
    %14 = vector.extract_strided_slice %10 {offsets = [15, 0], sizes = [1, 32], strides = [1, 1]} : vector<16x32xf32> to vector<1x32xf32>
    %15 = vector.shape_cast %14 : vector<1x32xf32> to vector<1x32xf32>
    %16 = vector.broadcast %15 : vector<1x32xf32> to vector<2x32xf32>
    %17 = tpu.concatenate %13, %10, %16 in 0 : vector<2x32xf32>, vector<16x32xf32>, vector<2x32xf32> -> vector<20x32xf32>
    %18 = vector.extract_strided_slice %17 {offsets = [0, 0], sizes = [16, 32], strides = [1, 1]} : vector<20x32xf32> to vector<16x32xf32>
    %19 = vector.extract_strided_slice %17 {offsets = [1, 0], sizes = [16, 32], strides = [1, 1]} : vector<20x32xf32> to vector<16x32xf32>
    %20 = arith.addf %18, %19 : vector<16x32xf32>
    %21 = vector.extract_strided_slice %17 {offsets = [2, 0], sizes = [16, 32], strides = [1, 1]} : vector<20x32xf32> to vector<16x32xf32>
    %22 = arith.addf %20, %21 : vector<16x32xf32>
    %23 = vector.extract_strided_slice %17 {offsets = [3, 0], sizes = [16, 32], strides = [1, 1]} : vector<20x32xf32> to vector<16x32xf32>
    %24 = arith.addf %22, %23 : vector<16x32xf32>
    %25 = vector.extract_strided_slice %17 {offsets = [4, 0], sizes = [16, 32], strides = [1, 1]} : vector<20x32xf32> to vector<16x32xf32>
    %26 = arith.addf %24, %25 : vector<16x32xf32>
    %cst_8 = arith.constant 2.000000e-01 : f32
    %27 = vector.broadcast %cst_8 : f32 to vector<16x32xf32>
    %28 = arith.mulf %26, %27 : vector<16x32xf32>
    %29 = arith.subf %10, %28 : vector<16x32xf32>
    %c0_9 = arith.constant 0 : index
    %c0_10 = arith.constant 0 : index
    %c0_11 = arith.constant 0 : index
    %30 = vector.load %arg4[%c0_9, %c0_10, %c0_11] : memref<1x16x32xf32, #tpu.memory_space<vmem>>, vector<1x16x32xf32>
    %31 = vector.shape_cast %30 : vector<1x16x32xf32> to vector<16x32xf32>
    %32 = vector.shape_cast %29 : vector<16x32xf32> to vector<1x16x32xf32>
    tpu.vector_store %arg4[%c0_9, %c0_10, %c0_11], %32 {strides = array<i32>} : memref<1x16x32xf32, #tpu.memory_space<vmem>>, vector<1x16x32xf32>,
    return
  }
  func.func @transform_0(%arg0: i32) -> (i32, i32, i32) {
    %c0_i32 = arith.constant 0 : i32
    %c0_i32_0 = arith.constant 0 : i32
    %c0_i32_1 = arith.constant 0 : i32
    return %arg0, %c0_i32, %c0_i32_0 : i32, i32, i32
  }
  func.func @transform_1(%arg0: i32) -> (i32, i32) {
    %c0_i32 = arith.constant 0 : i32
    %c0_i32_0 = arith.constant 0 : i32
    %c0_i32_1 = arith.constant 0 : i32
    return %c0_i32, %c0_i32_0 : i32, i32
  }
  func.func @transform_2(%arg0: i32) -> (i32, i32) {
    %c0_i32 = arith.constant 0 : i32
    %c0_i32_0 = arith.constant 0 : i32
    %c0_i32_1 = arith.constant 0 : i32
    return %c0_i32, %c0_i32_0 : i32, i32
  }
  func.func @transform_3(%arg0: i32) -> (i32, i32, i32) {
    %c0_i32 = arith.constant 0 : i32
    %c0_i32_0 = arith.constant 0 : i32
    %c0_i32_1 = arith.constant 0 : i32
    return %arg0, %c0_i32, %c0_i32_0 : i32, i32, i32
  }
}

module attributes {stable_mosaic.version = 11 : i64} {
  func.func @_linear_kernel(%arg0: i32, %arg1: memref<32x32xf32, #tpu.memory_space<vmem>>, %arg2: memref<32x64xbf16, #tpu.memory_space<vmem>>, %arg3: memref<1x64xf32, #tpu.memory_space<vmem>>, %arg4: memref<32x64xf32, #tpu.memory_space<vmem>>) attributes {dimension_semantics = [#tpu.dimension_semantics<parallel>], iteration_bounds = array<i64: 1>, scalar_prefetch = 0 : i64, scratch_operands = 0 : i64, tpu.core_type = #tpu.core_type<tc>, window_params = [{transform_indices = @transform_0, window_bounds = array<i64: 32, 32>}, {pipeline_mode = #tpu.pipeline_mode<synchronous>, transform_indices = @transform_1, window_bounds = array<i64: 32, 64>}, {pipeline_mode = #tpu.pipeline_mode<synchronous>, transform_indices = @transform_2, window_bounds = array<i64: 1, 64>}, {transform_indices = @transform_3, window_bounds = array<i64: 32, 64>}]} {
    %c0 = arith.constant 0 : index
    %c0_0 = arith.constant 0 : index
    %0 = vector.load %arg1[%c0, %c0_0] : memref<32x32xf32, #tpu.memory_space<vmem>>, vector<32x32xf32>
    %1 = arith.truncf %0 : vector<32x32xf32> to vector<32x32xbf16>
    %c0_1 = arith.constant 0 : index
    %c0_2 = arith.constant 0 : index
    %2 = vector.load %arg2[%c0_1, %c0_2] : memref<32x64xbf16, #tpu.memory_space<vmem>>, vector<32x64xbf16>
    %cst = arith.constant dense<0.000000e+00> : vector<32x64xf32>
    %3 = tpu.matmul %1, %2, %cst {dimension_numbers = #tpu.dot_dimension_numbers<[1], [0], [0], [1], [0, 0, 1, 1], [], []>} : vector<32x32xbf16>, vector<32x64xbf16>, vector<32x64xf32> -> vector<32x64xf32>
    %c0_3 = arith.constant 0 : index
    %c0_4 = arith.constant 0 : index
    %4 = vector.load %arg3[%c0_3, %c0_4] : memref<1x64xf32, #tpu.memory_space<vmem>>, vector<1x64xf32>
    %5 = vector.broadcast %4 : vector<1x64xf32> to vector<32x64xf32>
    %6 = arith.addf %3, %5 : vector<32x64xf32>
    %c0_5 = arith.constant 0 : index
    %c0_6 = arith.constant 0 : index
    %7 = vector.load %arg4[%c0_5, %c0_6] : memref<32x64xf32, #tpu.memory_space<vmem>>, vector<32x64xf32>
    tpu.vector_store %arg4[%c0_5, %c0_6], %6 {strides = array<i32>} : memref<32x64xf32, #tpu.memory_space<vmem>>, vector<32x64xf32>,
    return
  }
  func.func @transform_0(%arg0: i32) -> (i32, i32) {
    %c0_i32 = arith.constant 0 : i32
    %c0_i32_0 = arith.constant 0 : i32
    return %arg0, %c0_i32 : i32, i32
  }
  func.func @transform_1(%arg0: i32) -> (i32, i32) {
    %c0_i32 = arith.constant 0 : i32
    %c0_i32_0 = arith.constant 0 : i32
    %c0_i32_1 = arith.constant 0 : i32
    return %c0_i32, %c0_i32_0 : i32, i32
  }
  func.func @transform_2(%arg0: i32) -> (i32, i32) {
    %c0_i32 = arith.constant 0 : i32
    %c0_i32_0 = arith.constant 0 : i32
    %c0_i32_1 = arith.constant 0 : i32
    return %c0_i32, %c0_i32_0 : i32, i32
  }
  func.func @transform_3(%arg0: i32) -> (i32, i32) {
    %c0_i32 = arith.constant 0 : i32
    %c0_i32_0 = arith.constant 0 : i32
    return %arg0, %c0_i32 : i32, i32
  }
}

module attributes {stable_mosaic.version = 11 : i64} {
  func.func @_ffn_decomp_kernel(%arg0: i32, %arg1: memref<1x16x32xf32, #tpu.memory_space<vmem>>, %arg2: memref<32x64xbf16, #tpu.memory_space<vmem>>, %arg3: memref<64x32xbf16, #tpu.memory_space<vmem>>, %arg4: memref<1x16x32xf32, #tpu.memory_space<vmem>>, %arg5: memref<1x16x32xf32, #tpu.memory_space<vmem>>) attributes {dimension_semantics = [#tpu.dimension_semantics<parallel>], iteration_bounds = array<i64: 2>, scalar_prefetch = 0 : i64, scratch_operands = 0 : i64, tpu.core_type = #tpu.core_type<tc>, window_params = [{transform_indices = @transform_0, window_bounds = array<i64: 1, 16, 32>}, {pipeline_mode = #tpu.pipeline_mode<synchronous>, transform_indices = @transform_1, window_bounds = array<i64: 32, 64>}, {pipeline_mode = #tpu.pipeline_mode<synchronous>, transform_indices = @transform_2, window_bounds = array<i64: 64, 32>}, {transform_indices = @transform_3, window_bounds = array<i64: 1, 16, 32>}, {transform_indices = @transform_4, window_bounds = array<i64: 1, 16, 32>}]} {
    %c0 = arith.constant 0 : index
    %c0_0 = arith.constant 0 : index
    %c0_1 = arith.constant 0 : index
    %0 = vector.load %arg1[%c0, %c0_0, %c0_1] : memref<1x16x32xf32, #tpu.memory_space<vmem>>, vector<1x16x32xf32>
    %1 = vector.shape_cast %0 : vector<1x16x32xf32> to vector<16x32xf32>
    %2 = arith.truncf %1 : vector<16x32xf32> to vector<16x32xbf16>
    %c0_2 = arith.constant 0 : index
    %c0_3 = arith.constant 0 : index
    %3 = vector.load %arg2[%c0_2, %c0_3] : memref<32x64xbf16, #tpu.memory_space<vmem>>, vector<32x64xbf16>
    %cst = arith.constant dense<0.000000e+00> : vector<16x64xf32>
    %4 = tpu.matmul %2, %3, %cst {dimension_numbers = #tpu.dot_dimension_numbers<[1], [0], [0], [1], [0, 0, 1, 1], [], []>} : vector<16x32xbf16>, vector<32x64xbf16>, vector<16x64xf32> -> vector<16x64xf32>
    %cst_4 = arith.constant 0.000000e+00 : f32
    %5 = vector.broadcast %cst_4 : f32 to vector<16x64xf32>
    %6 = arith.maximumf %4, %5 : vector<16x64xf32>
    %7 = arith.truncf %6 : vector<16x64xf32> to vector<16x64xbf16>
    %c0_5 = arith.constant 0 : index
    %c0_6 = arith.constant 0 : index
    %8 = vector.load %arg3[%c0_5, %c0_6] : memref<64x32xbf16, #tpu.memory_space<vmem>>, vector<64x32xbf16>
    %cst_7 = arith.constant dense<0.000000e+00> : vector<16x32xf32>
    %9 = tpu.matmul %7, %8, %cst_7 {dimension_numbers = #tpu.dot_dimension_numbers<[1], [0], [0], [1], [0, 0, 1, 1], [], []>} : vector<16x64xbf16>, vector<64x32xbf16>, vector<16x32xf32> -> vector<16x32xf32>
    %10 = arith.addf %1, %9 : vector<16x32xf32>
    %11 = vector.extract_strided_slice %10 {offsets = [0, 0], sizes = [1, 32], strides = [1, 1]} : vector<16x32xf32> to vector<1x32xf32>
    %12 = vector.shape_cast %11 : vector<1x32xf32> to vector<1x32xf32>
    %13 = vector.broadcast %12 : vector<1x32xf32> to vector<2x32xf32>
    %14 = vector.extract_strided_slice %10 {offsets = [15, 0], sizes = [1, 32], strides = [1, 1]} : vector<16x32xf32> to vector<1x32xf32>
    %15 = vector.shape_cast %14 : vector<1x32xf32> to vector<1x32xf32>
    %16 = vector.broadcast %15 : vector<1x32xf32> to vector<2x32xf32>
    %17 = tpu.concatenate %13, %10, %16 in 0 : vector<2x32xf32>, vector<16x32xf32>, vector<2x32xf32> -> vector<20x32xf32>
    %18 = vector.extract_strided_slice %17 {offsets = [0, 0], sizes = [16, 32], strides = [1, 1]} : vector<20x32xf32> to vector<16x32xf32>
    %19 = vector.extract_strided_slice %17 {offsets = [1, 0], sizes = [16, 32], strides = [1, 1]} : vector<20x32xf32> to vector<16x32xf32>
    %20 = arith.addf %18, %19 : vector<16x32xf32>
    %21 = vector.extract_strided_slice %17 {offsets = [2, 0], sizes = [16, 32], strides = [1, 1]} : vector<20x32xf32> to vector<16x32xf32>
    %22 = arith.addf %20, %21 : vector<16x32xf32>
    %23 = vector.extract_strided_slice %17 {offsets = [3, 0], sizes = [16, 32], strides = [1, 1]} : vector<20x32xf32> to vector<16x32xf32>
    %24 = arith.addf %22, %23 : vector<16x32xf32>
    %25 = vector.extract_strided_slice %17 {offsets = [4, 0], sizes = [16, 32], strides = [1, 1]} : vector<20x32xf32> to vector<16x32xf32>
    %26 = arith.addf %24, %25 : vector<16x32xf32>
    %cst_8 = arith.constant 2.000000e-01 : f32
    %27 = vector.broadcast %cst_8 : f32 to vector<16x32xf32>
    %28 = arith.mulf %26, %27 : vector<16x32xf32>
    %29 = arith.subf %10, %28 : vector<16x32xf32>
    %c0_9 = arith.constant 0 : index
    %c0_10 = arith.constant 0 : index
    %c0_11 = arith.constant 0 : index
    %30 = vector.load %arg4[%c0_9, %c0_10, %c0_11] : memref<1x16x32xf32, #tpu.memory_space<vmem>>, vector<1x16x32xf32>
    %31 = vector.shape_cast %30 : vector<1x16x32xf32> to vector<16x32xf32>
    %32 = vector.shape_cast %29 : vector<16x32xf32> to vector<1x16x32xf32>
    tpu.vector_store %arg4[%c0_9, %c0_10, %c0_11], %32 {strides = array<i32>} : memref<1x16x32xf32, #tpu.memory_space<vmem>>, vector<1x16x32xf32>,
    %c0_12 = arith.constant 0 : index
    %c0_13 = arith.constant 0 : index
    %c0_14 = arith.constant 0 : index
    %33 = vector.load %arg5[%c0_12, %c0_13, %c0_14] : memref<1x16x32xf32, #tpu.memory_space<vmem>>, vector<1x16x32xf32>
    %34 = vector.shape_cast %33 : vector<1x16x32xf32> to vector<16x32xf32>
    %35 = vector.shape_cast %28 : vector<16x32xf32> to vector<1x16x32xf32>
    tpu.vector_store %arg5[%c0_12, %c0_13, %c0_14], %35 {strides = array<i32>} : memref<1x16x32xf32, #tpu.memory_space<vmem>>, vector<1x16x32xf32>,
    return
  }
  func.func @transform_0(%arg0: i32) -> (i32, i32, i32) {
    %c0_i32 = arith.constant 0 : i32
    %c0_i32_0 = arith.constant 0 : i32
    %c0_i32_1 = arith.constant 0 : i32
    return %arg0, %c0_i32, %c0_i32_0 : i32, i32, i32
  }
  func.func @transform_1(%arg0: i32) -> (i32, i32) {
    %c0_i32 = arith.constant 0 : i32
    %c0_i32_0 = arith.constant 0 : i32
    %c0_i32_1 = arith.constant 0 : i32
    return %c0_i32, %c0_i32_0 : i32, i32
  }
  func.func @transform_2(%arg0: i32) -> (i32, i32) {
    %c0_i32 = arith.constant 0 : i32
    %c0_i32_0 = arith.constant 0 : i32
    %c0_i32_1 = arith.constant 0 : i32
    return %c0_i32, %c0_i32_0 : i32, i32
  }
  func.func @transform_3(%arg0: i32) -> (i32, i32, i32) {
    %c0_i32 = arith.constant 0 : i32
    %c0_i32_0 = arith.constant 0 : i32
    %c0_i32_1 = arith.constant 0 : i32
    return %arg0, %c0_i32, %c0_i32_0 : i32, i32, i32
  }
  func.func @transform_4(%arg0: i32) -> (i32, i32, i32) {
    %c0_i32 = arith.constant 0 : i32
    %c0_i32_0 = arith.constant 0 : i32
    %c0_i32_1 = arith.constant 0 : i32
    return %arg0, %c0_i32, %c0_i32_0 : i32, i32, i32
  }
}

module attributes {stable_mosaic.version = 11 : i64} {
  func.func @_circ_conv_kernel(%arg0: i32, %arg1: memref<1x16x32xf32, #tpu.memory_space<vmem>>, %arg2: memref<1x16x32xf32, #tpu.memory_space<vmem>>, %arg3: memref<1x16x32xf32, #tpu.memory_space<vmem>>, %arg4: memref<1x16x4xf32, #tpu.memory_space<vmem>>, %arg5: memref<96x4xbf16, #tpu.memory_space<vmem>>, %arg6: memref<1x16x4xf32, #tpu.memory_space<vmem>>) attributes {dimension_semantics = [#tpu.dimension_semantics<parallel>], iteration_bounds = array<i64: 2>, scalar_prefetch = 0 : i64, scratch_operands = 0 : i64, tpu.core_type = #tpu.core_type<tc>, window_params = [{transform_indices = @transform_0, window_bounds = array<i64: 1, 16, 32>}, {transform_indices = @transform_1, window_bounds = array<i64: 1, 16, 32>}, {transform_indices = @transform_2, window_bounds = array<i64: 1, 16, 32>}, {transform_indices = @transform_3, window_bounds = array<i64: 1, 16, 4>}, {pipeline_mode = #tpu.pipeline_mode<synchronous>, transform_indices = @transform_4, window_bounds = array<i64: 96, 4>}, {transform_indices = @transform_5, window_bounds = array<i64: 1, 16, 4>}]} {
    %c0 = arith.constant 0 : index
    %c0_0 = arith.constant 0 : index
    %c0_1 = arith.constant 0 : index
    %0 = vector.load %arg1[%c0, %c0_0, %c0_1] : memref<1x16x32xf32, #tpu.memory_space<vmem>>, vector<1x16x32xf32>
    %1 = vector.shape_cast %0 : vector<1x16x32xf32> to vector<16x32xf32>
    %c0_2 = arith.constant 0 : index
    %c0_3 = arith.constant 0 : index
    %c0_4 = arith.constant 0 : index
    %2 = vector.load %arg2[%c0_2, %c0_3, %c0_4] : memref<1x16x32xf32, #tpu.memory_space<vmem>>, vector<1x16x32xf32>
    %3 = vector.shape_cast %2 : vector<1x16x32xf32> to vector<16x32xf32>
    %4 = arith.addf %1, %3 : vector<16x32xf32>
    %c0_5 = arith.constant 0 : index
    %c0_6 = arith.constant 0 : index
    %c0_7 = arith.constant 0 : index
    %5 = vector.load %arg3[%c0_5, %c0_6, %c0_7] : memref<1x16x32xf32, #tpu.memory_space<vmem>>, vector<1x16x32xf32>
    %6 = vector.shape_cast %5 : vector<1x16x32xf32> to vector<16x32xf32>
    %7 = arith.addf %4, %6 : vector<16x32xf32>
    %c0_8 = arith.constant 0 : index
    %c0_9 = arith.constant 0 : index
    %c0_10 = arith.constant 0 : index
    %8 = vector.load %arg4[%c0_8, %c0_9, %c0_10] : memref<1x16x4xf32, #tpu.memory_space<vmem>>, vector<1x16x4xf32>
    %9 = vector.shape_cast %8 : vector<1x16x4xf32> to vector<16x4xf32>
    %10 = vector.extract_strided_slice %7 {offsets = [15, 0], sizes = [1, 32], strides = [1, 1]} : vector<16x32xf32> to vector<1x32xf32>
    %11 = vector.extract_strided_slice %7 {offsets = [0, 0], sizes = [15, 32], strides = [1, 1]} : vector<16x32xf32> to vector<15x32xf32>
    %12 = tpu.concatenate %10, %11 in 0 : vector<1x32xf32>, vector<15x32xf32> -> vector<16x32xf32>
    %13 = vector.extract_strided_slice %7 {offsets = [1, 0], sizes = [15, 32], strides = [1, 1]} : vector<16x32xf32> to vector<15x32xf32>
    %14 = vector.extract_strided_slice %7 {offsets = [0, 0], sizes = [1, 32], strides = [1, 1]} : vector<16x32xf32> to vector<1x32xf32>
    %15 = tpu.concatenate %13, %14 in 0 : vector<15x32xf32>, vector<1x32xf32> -> vector<16x32xf32>
    %16 = tpu.concatenate %12, %7, %15 in 1 : vector<16x32xf32>, vector<16x32xf32>, vector<16x32xf32> -> vector<16x96xf32>
    %17 = arith.truncf %16 : vector<16x96xf32> to vector<16x96xbf16>
    %c0_11 = arith.constant 0 : index
    %c0_12 = arith.constant 0 : index
    %18 = vector.load %arg5[%c0_11, %c0_12] : memref<96x4xbf16, #tpu.memory_space<vmem>>, vector<96x4xbf16>
    %cst = arith.constant dense<0.000000e+00> : vector<16x4xf32>
    %19 = tpu.matmul %17, %18, %cst {dimension_numbers = #tpu.dot_dimension_numbers<[1], [0], [0], [1], [0, 0, 1, 1], [], []>} : vector<16x96xbf16>, vector<96x4xbf16>, vector<16x4xf32> -> vector<16x4xf32>
    %20 = arith.addf %19, %9 : vector<16x4xf32>
    %c0_13 = arith.constant 0 : index
    %c0_14 = arith.constant 0 : index
    %c0_15 = arith.constant 0 : index
    %21 = vector.load %arg6[%c0_13, %c0_14, %c0_15] : memref<1x16x4xf32, #tpu.memory_space<vmem>>, vector<1x16x4xf32>
    %22 = vector.shape_cast %21 : vector<1x16x4xf32> to vector<16x4xf32>
    %23 = vector.shape_cast %20 : vector<16x4xf32> to vector<1x16x4xf32>
    tpu.vector_store %arg6[%c0_13, %c0_14, %c0_15], %23 {strides = array<i32>} : memref<1x16x4xf32, #tpu.memory_space<vmem>>, vector<1x16x4xf32>,
    return
  }
  func.func @transform_0(%arg0: i32) -> (i32, i32, i32) {
    %c0_i32 = arith.constant 0 : i32
    %c0_i32_0 = arith.constant 0 : i32
    %c0_i32_1 = arith.constant 0 : i32
    return %arg0, %c0_i32, %c0_i32_0 : i32, i32, i32
  }
  func.func @transform_1(%arg0: i32) -> (i32, i32, i32) {
    %c0_i32 = arith.constant 0 : i32
    %c0_i32_0 = arith.constant 0 : i32
    %c0_i32_1 = arith.constant 0 : i32
    return %arg0, %c0_i32, %c0_i32_0 : i32, i32, i32
  }
  func.func @transform_2(%arg0: i32) -> (i32, i32, i32) {
    %c0_i32 = arith.constant 0 : i32
    %c0_i32_0 = arith.constant 0 : i32
    %c0_i32_1 = arith.constant 0 : i32
    return %arg0, %c0_i32, %c0_i32_0 : i32, i32, i32
  }
  func.func @transform_3(%arg0: i32) -> (i32, i32, i32) {
    %c0_i32 = arith.constant 0 : i32
    %c0_i32_0 = arith.constant 0 : i32
    %c0_i32_1 = arith.constant 0 : i32
    return %arg0, %c0_i32, %c0_i32_0 : i32, i32, i32
  }
  func.func @transform_4(%arg0: i32) -> (i32, i32) {
    %c0_i32 = arith.constant 0 : i32
    %c0_i32_0 = arith.constant 0 : i32
    %c0_i32_1 = arith.constant 0 : i32
    return %c0_i32, %c0_i32_0 : i32, i32
  }
  func.func @transform_5(%arg0: i32) -> (i32, i32, i32) {
    %c0_i32 = arith.constant 0 : i32
    %c0_i32_0 = arith.constant 0 : i32
    %c0_i32_1 = arith.constant 0 : i32
    return %arg0, %c0_i32, %c0_i32_0 : i32, i32, i32
  }
}

module attributes {stable_mosaic.version = 11 : i64} {
  func.func @_my_layernorm_kernel(%arg0: i32, %arg1: memref<1x16x32xf32, #tpu.memory_space<vmem>>, %arg2: memref<1x32xf32, #tpu.memory_space<vmem>>, %arg3: memref<1x32xf32, #tpu.memory_space<vmem>>, %arg4: memref<32x4xbf16, #tpu.memory_space<vmem>>, %arg5: memref<1x4xf32, #tpu.memory_space<vmem>>, %arg6: memref<1x16x4xf32, #tpu.memory_space<vmem>>) attributes {dimension_semantics = [#tpu.dimension_semantics<parallel>], iteration_bounds = array<i64: 2>, scalar_prefetch = 0 : i64, scratch_operands = 0 : i64, tpu.core_type = #tpu.core_type<tc>, window_params = [{transform_indices = @transform_0, window_bounds = array<i64: 1, 16, 32>}, {pipeline_mode = #tpu.pipeline_mode<synchronous>, transform_indices = @transform_1, window_bounds = array<i64: 1, 32>}, {pipeline_mode = #tpu.pipeline_mode<synchronous>, transform_indices = @transform_2, window_bounds = array<i64: 1, 32>}, {pipeline_mode = #tpu.pipeline_mode<synchronous>, transform_indices = @transform_3, window_bounds = array<i64: 32, 4>}, {pipeline_mode = #tpu.pipeline_mode<synchronous>, transform_indices = @transform_4, window_bounds = array<i64: 1, 4>}, {transform_indices = @transform_5, window_bounds = array<i64: 1, 16, 4>}]} {
    %c0 = arith.constant 0 : index
    %c0_0 = arith.constant 0 : index
    %c0_1 = arith.constant 0 : index
    %0 = vector.load %arg1[%c0, %c0_0, %c0_1] : memref<1x16x32xf32, #tpu.memory_space<vmem>>, vector<1x16x32xf32>
    %1 = vector.shape_cast %0 : vector<1x16x32xf32> to vector<16x32xf32>
    %c0_2 = arith.constant 0 : index
    %c0_3 = arith.constant 0 : index
    %2 = vector.load %arg2[%c0_2, %c0_3] : memref<1x32xf32, #tpu.memory_space<vmem>>, vector<1x32xf32>
    %c0_4 = arith.constant 0 : index
    %c0_5 = arith.constant 0 : index
    %3 = vector.load %arg3[%c0_4, %c0_5] : memref<1x32xf32, #tpu.memory_space<vmem>>, vector<1x32xf32>
    %cst = arith.constant dense<0.000000e+00> : vector<16xf32>
    %4 = vector.multi_reduction <add>, %1, %cst [1] : vector<16x32xf32> to vector<16xf32>
    %5 = vector.shape_cast %4 : vector<16xf32> to vector<16x1xf32>
    %cst_6 = arith.constant 3.200000e+01 : f32
    %6 = vector.broadcast %cst_6 : f32 to vector<16x1xf32>
    %7 = arith.divf %5, %6 : vector<16x1xf32>
    %8 = vector.broadcast %7 : vector<16x1xf32> to vector<16x32xf32>
    %9 = arith.subf %1, %8 : vector<16x32xf32>
    %10 = arith.mulf %9, %9 : vector<16x32xf32>
    %cst_7 = arith.constant dense<0.000000e+00> : vector<16xf32>
    %11 = vector.multi_reduction <add>, %10, %cst_7 [1] : vector<16x32xf32> to vector<16xf32>
    %12 = vector.shape_cast %11 : vector<16xf32> to vector<16x1xf32>
    %cst_8 = arith.constant 3.200000e+01 : f32
    %13 = vector.broadcast %cst_8 : f32 to vector<16x1xf32>
    %14 = arith.divf %12, %13 : vector<16x1xf32>
    %15 = vector.broadcast %7 : vector<16x1xf32> to vector<16x32xf32>
    %16 = arith.subf %1, %15 : vector<16x32xf32>
    %cst_9 = arith.constant 9.99999974E-6 : f32
    %17 = vector.broadcast %cst_9 : f32 to vector<16x1xf32>
    %18 = arith.addf %14, %17 : vector<16x1xf32>
    %19 = math.rsqrt %18 : vector<16x1xf32>
    %20 = vector.broadcast %19 : vector<16x1xf32> to vector<16x32xf32>
    %21 = arith.mulf %16, %20 : vector<16x32xf32>
    %22 = vector.broadcast %2 : vector<1x32xf32> to vector<16x32xf32>
    %23 = arith.mulf %21, %22 : vector<16x32xf32>
    %24 = vector.broadcast %3 : vector<1x32xf32> to vector<16x32xf32>
    %25 = arith.addf %23, %24 : vector<16x32xf32>
    %cst_10 = arith.constant dense<0.000000e+00> : vector<32xf32>
    %26 = vector.multi_reduction <add>, %25, %cst_10 [0] : vector<16x32xf32> to vector<32xf32>
    %27 = vector.shape_cast %26 : vector<32xf32> to vector<1x32xf32>
    %cst_11 = arith.constant 1.600000e+01 : f32
    %28 = vector.broadcast %cst_11 : f32 to vector<1x32xf32>
    %29 = arith.divf %27, %28 : vector<1x32xf32>
    %30 = vector.broadcast %29 : vector<1x32xf32> to vector<16x32xf32>
    %31 = arith.subf %25, %30 : vector<16x32xf32>
    %c0_12 = arith.constant 0 : index
    %c0_13 = arith.constant 0 : index
    %32 = vector.load %arg4[%c0_12, %c0_13] : memref<32x4xbf16, #tpu.memory_space<vmem>>, vector<32x4xbf16>
    %c0_14 = arith.constant 0 : index
    %c0_15 = arith.constant 0 : index
    %33 = vector.load %arg5[%c0_14, %c0_15] : memref<1x4xf32, #tpu.memory_space<vmem>>, vector<1x4xf32>
    %34 = arith.truncf %31 : vector<16x32xf32> to vector<16x32xbf16>
    %cst_16 = arith.constant dense<0.000000e+00> : vector<16x4xf32>
    %35 = tpu.matmul %34, %32, %cst_16 {dimension_numbers = #tpu.dot_dimension_numbers<[1], [0], [0], [1], [0, 0, 1, 1], [], []>} : vector<16x32xbf16>, vector<32x4xbf16>, vector<16x4xf32> -> vector<16x4xf32>
    %36 = vector.broadcast %33 : vector<1x4xf32> to vector<16x4xf32>
    %37 = arith.addf %35, %36 : vector<16x4xf32>
    %c0_17 = arith.constant 0 : index
    %c0_18 = arith.constant 0 : index
    %c0_19 = arith.constant 0 : index
    %38 = vector.load %arg6[%c0_17, %c0_18, %c0_19] : memref<1x16x4xf32, #tpu.memory_space<vmem>>, vector<1x16x4xf32>
    %39 = vector.shape_cast %38 : vector<1x16x4xf32> to vector<16x4xf32>
    %40 = vector.shape_cast %37 : vector<16x4xf32> to vector<1x16x4xf32>
    tpu.vector_store %arg6[%c0_17, %c0_18, %c0_19], %40 {strides = array<i32>} : memref<1x16x4xf32, #tpu.memory_space<vmem>>, vector<1x16x4xf32>,
    return
  }
  func.func @transform_0(%arg0: i32) -> (i32, i32, i32) {
    %c0_i32 = arith.constant 0 : i32
    %c0_i32_0 = arith.constant 0 : i32
    %c0_i32_1 = arith.constant 0 : i32
    return %arg0, %c0_i32, %c0_i32_0 : i32, i32, i32
  }
  func.func @transform_1(%arg0: i32) -> (i32, i32) {
    %c0_i32 = arith.constant 0 : i32
    %c0_i32_0 = arith.constant 0 : i32
    %c0_i32_1 = arith.constant 0 : i32
    return %c0_i32, %c0_i32_0 : i32, i32
  }
  func.func @transform_2(%arg0: i32) -> (i32, i32) {
    %c0_i32 = arith.constant 0 : i32
    %c0_i32_0 = arith.constant 0 : i32
    %c0_i32_1 = arith.constant 0 : i32
    return %c0_i32, %c0_i32_0 : i32, i32
  }
  func.func @transform_3(%arg0: i32) -> (i32, i32) {
    %c0_i32 = arith.constant 0 : i32
    %c0_i32_0 = arith.constant 0 : i32
    %c0_i32_1 = arith.constant 0 : i32
    return %c0_i32, %c0_i32_0 : i32, i32
  }
  func.func @transform_4(%arg0: i32) -> (i32, i32) {
    %c0_i32 = arith.constant 0 : i32
    %c0_i32_0 = arith.constant 0 : i32
    %c0_i32_1 = arith.constant 0 : i32
    return %c0_i32, %c0_i32_0 : i32, i32
  }
  func.func @transform_5(%arg0: i32) -> (i32, i32, i32) {
    %c0_i32 = arith.constant 0 : i32
    %c0_i32_0 = arith.constant 0 : i32
    %c0_i32_1 = arith.constant 0 : i32
    return %arg0, %c0_i32, %c0_i32_0 : i32, i32, i32
  }
}

</mosaic_0001>

<llo_original>
// kernel: _lambda_.18
$region0: #{_lambda_.18}
  #allocation0 [shape = 'u32[]', space=smem, size = 0x4, offset = 0x4, fixed_abs, tag = 'smem constant byte address 0x4 - core index']
  #allocation1 [shape = 'u32[144,128]{1,0:T(1,128)}', space=vmem, size = 0x12000, scoped, tag = 'internal scratch']
  %s0 = inlined_call_operand.vmem [shape: f32[2,16,4], index: 0, kind: input, shape index: {}]
  %s1 = inlined_call_operand.vmem [shape: f32[2,16,4], index: 1, kind: output, shape index: {0}]
  %s2 = inlined_call_operand.vmem [shape: f32[2,16,4], index: 2, kind: output, shape index: {1}]
  %3 = xla_tuple %s1, %s2
  %s4 = sld [smem:[#allocation0]]
  $region45: #{_lambda_.18} parent=0
    _
  %s6 = ssub.s32 1, %s4
  %s7 = scalar_select 0, %s6, %s4
  loop: start=0, step=1, limit=4
  $region2: #{_lambda_.18} parent=0 // loop_pre_header
    _
  $region3: #{_lambda_.18} parent=0 // loop_header
    %s9 = sphi 0, %s13
    %p10 = scmp.ge.s32.totalorder %s9, 4
    %s19 = sphi 0, %s21
    %s22 = sphi 0, %s19
    %s23 = sphi 0, %s22
    %s39 = sphi 0, %s23
    %s45 = sphi 0, %s47
    %s48 = sphi 0, %s45
    %s49 = sphi 0, %s48
    %s65 = sphi 0, %s49
    %s71 = sphi 0, %s73
    %s74 = sphi 0, %s71
    %s75 = sphi 0, %s74
    %s91 = sphi 0, %s75
  $region4: #{_lambda_.18} parent=0 // loop_header_branch
    %12 = sbr.rel (%p10) target = $region8
  $region5: #{_lambda_.18} parent=0 // loop_body
    %s14 = ssub.s32 %s9, 1
    %s15 = ssub.s32 %s9, 2
    %s16 = sadd.s32 %s9, 1
    %s17 = ssub.s32 %s9, %s16
    %p18 = scmp.eq.s32.totalorder %s17, 0
    %s20 = sadd.s32 %s19, 1
    %s21 = scalar_select %p18, %s19, %s20
    %p24 = pneg %p18
    %p25 = scmp.eq.s32.totalorder %s9, 1
    %p26 = por %p24, %p25
    %p27 = scmp.ne.s32.totalorder %s19, %s22
    %p28 = scmp.eq.s32.totalorder %s9, 0
    %p29 = por %p27, %p28
    %p30 = scmp.ne.s32.totalorder %s19, %s22
    %p31 = scmp.eq.s32.totalorder %s14, 1
    %p32 = por %p30, %p31
    %p33 = scmp.ne.s32.totalorder %s22, %s23
    %p34 = scmp.eq.s32.totalorder %s14, 0
    %p35 = por %p33, %p34
    %p36 = scmp.ne.s32.totalorder %s22, %s23
    %p37 = scmp.eq.s32.totalorder %s15, 1
    %p38 = por %p36, %p37
    %p40 = scmp.ne.s32.totalorder %s23, %s39
    %p41 = scmp.eq.s32.totalorder %s15, 0
    %p42 = por %p40, %p41
    %s43 = ssub.s32 %s9, %s16
    %p44 = scmp.eq.s32.totalorder %s43, 0
    %s46 = sadd.s32 %s45, 1
    %s47 = scalar_select %p44, %s45, %s46
    %p50 = pneg %p44
    %p51 = scmp.eq.s32.totalorder %s9, 1
    %p52 = por %p50, %p51
    %p53 = scmp.ne.s32.totalorder %s45, %s48
    %p54 = scmp.eq.s32.totalorder %s9, 0
    %p55 = por %p53, %p54
    %p56 = scmp.ne.s32.totalorder %s45, %s48
    %p57 = scmp.eq.s32.totalorder %s14, 1
    %p58 = por %p56, %p57
    %p59 = scmp.ne.s32.totalorder %s48, %s49
    %p60 = scmp.eq.s32.totalorder %s14, 0
    %p61 = por %p59, %p60
    %p62 = scmp.ne.s32.totalorder %s48, %s49
    %p63 = scmp.eq.s32.totalorder %s15, 1
    %p64 = por %p62, %p63
    %p66 = scmp.ne.s32.totalorder %s49, %s65
    %p67 = scmp.eq.s32.totalorder %s15, 0
    %p68 = por %p66, %p67
    %s69 = ssub.s32 %s9, %s16
    %p70 = scmp.eq.s32.totalorder %s69, 0
    %s72 = sadd.s32 %s71, 1
    %s73 = scalar_select %p70, %s71, %s72
    %p76 = pneg %p70
    %p77 = scmp.eq.s32.totalorder %s9, 1
    %p78 = por %p76, %p77
    %p79 = scmp.ne.s32.totalorder %s71, %s74
    %p80 = scmp.eq.s32.totalorder %s9, 0
    %p81 = por %p79, %p80
    %p82 = scmp.ne.s32.totalorder %s71, %s74
    %p83 = scmp.eq.s32.totalorder %s14, 1
    %p84 = por %p82, %p83
    %p85 = scmp.ne.s32.totalorder %s74, %s75
    %p86 = scmp.eq.s32.totalorder %s14, 0
    %p87 = por %p85, %p86
    %p88 = scmp.ne.s32.totalorder %s74, %s75
    %p89 = scmp.eq.s32.totalorder %s15, 1
    %p90 = por %p88, %p89
    %p92 = scmp.ne.s32.totalorder %s75, %s91
    %p93 = scmp.eq.s32.totalorder %s15, 0
    %p94 = por %p92, %p93
    %p95 = scmp.le.s32.totalorder 1, %s9
    %p96 = scmp.lt.s32.totalorder %s9, 3
    %p97 = pnand %p95, %p96
    %p98 = pneg %p97
    // Predicated region
    $region9: #{_lambda_.18} parent=5 // pred_check
      _
    $region10: #{_lambda_.18} parent=5 // pred_check_branch
      %100 = sbr.rel (%p97) target = $region12
    $region11: #{_lambda_.18} parent=5 // pred_region
      %s101 = ssub.s32 %s9, 1
    $region12: #{_lambda_.18} parent=5 // pred_fallthru
      _
    %p102 = scmp.lt.s32.totalorder %s9, 2
    // Predicated region
    $region13: #{_lambda_.18} parent=5 // pred_check
      %p103 = pneg %p102
    $region14: #{_lambda_.18} parent=5 // pred_check_branch
      %105 = sbr.rel (%p103) target = $region16
    $region15: #{_lambda_.18} parent=5 // pred_region
      // Predicated region
      $region17: #{_lambda_.18} parent=15 // pred_check
        %p106 = pneg %p29
      $region18: #{_lambda_.18} parent=15 // pred_check_branch
        %108 = sbr.rel (%p106) target = $region20
      $region19: #{_lambda_.18} parent=15 // pred_region
        %p109 = scmp.lt.s32.totalorder %s9, 1
        %s110 = scalar_select %p109, %s9, 1
        %s111 = smul.addr %s110, 2
        %s112 = smul.addr %s111, 8
        %s113 = scalar_lea.vmem %s0, %s112
      $region20: #{_lambda_.18} parent=15 // pred_fallthru
        _
    $region16: #{_lambda_.18} parent=5 // pred_fallthru
      _
    %p114 = scmp.le.s32.totalorder 1, %s9
    %p115 = scmp.lt.s32.totalorder %s9, 3
    %p116 = pnand %p114, %p115
    %p117 = pneg %p116
    // Predicated region
    $region21: #{_lambda_.18} parent=5 // pred_check
      _
    $region22: #{_lambda_.18} parent=5 // pred_check_branch
      %119 = sbr.rel (%p116) target = $region24
    $region23: #{_lambda_.18} parent=5 // pred_region
      %s120 = ssub.s32 %s9, 1
      %p121 = scmp.lt.s32.totalorder %s14, 1
      %s122 = scalar_select %p121, %s14, 1
      %s123 = smul.addr %s122, 2
      %s124 = smul.addr %s123, 8
      %s125 = scalar_lea.vmem %s0, %s124
      %p126 = pneg %p35
      %p127 = pneg %p32
      %p128 = pneg %p61
      %p129 = pneg %p58
      %p130 = scmp.lt.s32.totalorder %s14, 1
      %s131 = scalar_select %p130, %s14, 1
      %s132 = smul.addr %s131, 2
      %s133 = smul.addr %s132, 8
      %s134 = scalar_lea.vmem %s1, %s133
      %p135 = pneg %p87
      %p136 = pneg %p84
      %p137 = scmp.lt.s32.totalorder %s14, 1
      %s138 = scalar_select %p137, %s14, 1
      %s139 = smul.addr %s138, 2
      %s140 = smul.addr %s139, 8
      %s141 = scalar_lea.vmem %s2, %s140
      %p142 = scmp.lt.s32.totalorder %s14, 1
      %s143 = scalar_select %p142, %s14, 1
      %s144 = smul.addr %s143, 2
      %s145 = smul.addr %s144, 8
      %s146 = scalar_lea.vmem %s0, %s145
      %p147 = scmp.lt.s32.totalorder %s14, 1
      %s148 = scalar_select %p147, %s14, 1
      %s149 = smul.addr %s148, 2
      %s150 = smul.addr %s149, 8
      %s151 = scalar_lea.vmem %s1, %s150
      %p152 = scmp.lt.s32.totalorder %s14, 1
      %s153 = scalar_select %p152, %s14, 1
      %s154 = smul.addr %s153, 2
      %s155 = smul.addr %s154, 8
      %s156 = scalar_lea.vmem %s2, %s155
      %v157 = vld [vmem:[%s146] sm:$0xff]
      %v158 = vld [vmem:[%s146 + $0x8] sm:$0xff]
      %v159 = vlaneseq
      %v160 = vshrl.u32 %v159, 7
      %v161 = vsub.s32 0, %v160
      %v162 = vrot.slane %v157, %v161
      %v163 = vlaneseq
      %v164 = vshrl.u32 %v163, 7
      %v165 = vsub.s32 7, %v164
      %v166 = vrot.slane %v158, %v165
      %vm169 = vcmask 1041408
      %v170 = vrot.slane %v157, 6
      %v171 = vrot.slane %v158, 6
      %v172 = vsel %vm169, %v170, %v171
      %v176 = vsel %vm169, %v162, %v170
      %v177 = vsel %vm169, %v171, %v166
      %vm180 = vcmask 1046528
      %v181 = vrot.slane %v176, 1
      %v182 = vrot.slane %v172, 1
      %v183 = vsel %vm180, %v181, %v182
      %v184 = vrot.slane %v177, 1
      %v185 = vsel %vm180, %v182, %v184
      %v188 = vadd.f32 %v176, %v183
      %v189 = vadd.f32 %v172, %v185
      %vm190 = vcmask 1045504
      %v191 = vrot.slane %v176, 2
      %v192 = vrot.slane %v172, 2
      %v193 = vsel %vm190, %v191, %v192
      %v194 = vrot.slane %v177, 2
      %v195 = vsel %vm190, %v192, %v194
      %v198 = vadd.f32 %v188, %v193
      %v199 = vadd.f32 %v189, %v195
      %vm200 = vcmask 1044480
      %v201 = vrot.slane %v176, 3
      %v202 = vrot.slane %v172, 3
      %v203 = vsel %vm200, %v201, %v202
      %v204 = vrot.slane %v177, 3
      %v205 = vsel %vm200, %v202, %v204
      %v208 = vadd.f32 %v198, %v203
      %v209 = vadd.f32 %v199, %v205
      %vm210 = vcmask 1043456
      %v211 = vrot.slane %v176, 4
      %v212 = vrot.slane %v172, 4
      %v213 = vsel %vm210, %v211, %v212
      %v214 = vrot.slane %v177, 4
      %v215 = vsel %vm210, %v212, %v214
      %v218 = vadd.f32 %v208, %v213
      %v219 = vadd.f32 %v209, %v215
      %v220 = vmul.f32 %v218, 0.2
      %v221 = vmul.f32 %v219, 0.2
      %vm222 = vcmask 31744
      %223 = vst.msk [vmem:[%s156] sm:$0xff] %vm222, %v220
      %224 = vst.msk [vmem:[%s156 + $0x8] sm:$0xff] %vm222, %v221
      %v225 = vsub.f32 %v157, %v220
      %v226 = vsub.f32 %v158, %v221
      %227 = vst.msk [vmem:[%s151] sm:$0xff] %vm222, %v225
      %228 = vst.msk [vmem:[%s151 + $0x8] sm:$0xff] %vm222, %v226
      %p229 = scmp.lt.s32.totalorder %s14, 1
      %s230 = scalar_select %p229, %s14, 1
      %s231 = smul.addr %s230, 2
      %s232 = smul.addr %s231, 8
      %s233 = scalar_lea.vmem %s1, %s232
      %p234 = scmp.lt.s32.totalorder %s14, 1
      %s235 = scalar_select %p234, %s14, 1
      %s236 = smul.addr %s235, 2
      %s237 = smul.addr %s236, 8
      %s238 = scalar_lea.vmem %s2, %s237
      // Predicated region
      $region25: #{_lambda_.18} parent=23 // pred_check
        %p239 = pneg %p58
      $region26: #{_lambda_.18} parent=23 // pred_check_branch
        %241 = sbr.rel (%p239) target = $region28
      $region27: #{_lambda_.18} parent=23 // pred_region
        _
      $region28: #{_lambda_.18} parent=23 // pred_fallthru
        _
      // Predicated region
      $region29: #{_lambda_.18} parent=23 // pred_check
        %p242 = pneg %p84
      $region30: #{_lambda_.18} parent=23 // pred_check_branch
        %244 = sbr.rel (%p242) target = $region32
      $region31: #{_lambda_.18} parent=23 // pred_region
        _
      $region32: #{_lambda_.18} parent=23 // pred_fallthru
        _
    $region24: #{_lambda_.18} parent=5 // pred_fallthru
      _
    %p245 = scmp.le.s32.totalorder 2, %s9
    // Predicated region
    $region33: #{_lambda_.18} parent=5 // pred_check
      %p246 = pneg %p245
    $region34: #{_lambda_.18} parent=5 // pred_check_branch
      %248 = sbr.rel (%p246) target = $region36
    $region35: #{_lambda_.18} parent=5 // pred_region
      %s249 = ssub.s32 %s9, 2
      // Predicated region
      $region37: #{_lambda_.18} parent=35 // pred_check
        %p250 = pneg %p64
      $region38: #{_lambda_.18} parent=35 // pred_check_branch
        %252 = sbr.rel (%p250) target = $region40
      $region39: #{_lambda_.18} parent=35 // pred_region
        %p253 = scmp.lt.s32.totalorder %s15, 1
        %s254 = scalar_select %p253, %s15, 1
        %s255 = smul.addr %s254, 2
        %s256 = smul.addr %s255, 8
        %s257 = scalar_lea.vmem %s1, %s256
      $region40: #{_lambda_.18} parent=35 // pred_fallthru
        _
      // Predicated region
      $region41: #{_lambda_.18} parent=35 // pred_check
        %p258 = pneg %p90
      $region42: #{_lambda_.18} parent=35 // pred_check_branch
        %260 = sbr.rel (%p258) target = $region44
      $region43: #{_lambda_.18} parent=35 // pred_region
        %p261 = scmp.lt.s32.totalorder %s15, 1
        %s262 = scalar_select %p261, %s15, 1
        %s263 = smul.addr %s262, 2
        %s264 = smul.addr %s263, 8
        %s265 = scalar_lea.vmem %s2, %s264
      $region44: #{_lambda_.18} parent=35 // pred_fallthru
        _
    $region36: #{_lambda_.18} parent=5 // pred_fallthru
      _
  $region6: #{_lambda_.18} parent=0 // loop_footer
    %s13 = sadd.s32 1, %s9
  $region7: #{_lambda_.18} parent=0 // loop_footer_branch
    %8 = sbr.rel target = $region3
  $region8: #{_lambda_.18} parent=0 // loop_exit
    _

// kernel: _lambda_.26
$region0: #{_lambda_.26}
  #allocation0 [shape = 'u32[]', space=smem, size = 0x4, offset = 0x4, fixed_abs, tag = 'smem constant byte address 0x4 - core index']
  #allocation1 [shape = 'u32[144,128]{1,0:T(1,128)}', space=vmem, size = 0x12000, scoped, tag = 'internal scratch']
  %s0 = inlined_call_operand.vmem [shape: f32[32,32], index: 0, kind: input, shape index: {}]
  %s1 = inlined_call_operand.vmem [shape: bf16[32,96], index: 1, kind: input, shape index: {}]
  %s2 = inlined_call_operand.vmem [shape: f32[1,96], index: 2, kind: input, shape index: {}]
  %s3 = inlined_call_operand.vmem [shape: f32[32,96], index: 3, kind: output, shape index: {}]
  %s4 = sld [smem:[#allocation0]]
  $region22: #{_lambda_.26} parent=0
    _
  %s6 = ssub.s32 1, %s4
  %s7 = scalar_select 0, %s6, %s4
  // Predicated region
  $region2: #{_lambda_.26} parent=0 // pred_check
    _
  $region3: #{_lambda_.26} parent=0 // pred_check_branch
    %9 = sbr.rel (0) target = $region5
  $region4: #{_lambda_.26} parent=0 // pred_region
    _
  $region5: #{_lambda_.26} parent=0 // pred_fallthru
    _
  // Predicated region
  $region6: #{_lambda_.26} parent=0 // pred_check
    _
  $region7: #{_lambda_.26} parent=0 // pred_check_branch
    %11 = sbr.rel (0) target = $region9
  $region8: #{_lambda_.26} parent=0 // pred_region
    _
  $region9: #{_lambda_.26} parent=0 // pred_fallthru
    _
  // Predicated region
  $region10: #{_lambda_.26} parent=0 // pred_check
    _
  $region11: #{_lambda_.26} parent=0 // pred_check_branch
    %13 = sbr.rel (0) target = $region13
  $region12: #{_lambda_.26} parent=0 // pred_region
    _
  $region13: #{_lambda_.26} parent=0 // pred_fallthru
    _
  %v15 = vld [vmem:[%s0] sm:$0xff]
  %v16 = vld [vmem:[%s0 + $0x8] sm:$0xff]
  %v17 = vld [vmem:[%s0 + $0x10] sm:$0xff]
  %v18 = vld [vmem:[%s0 + $0x18] sm:$0xff]
  %v19 = vpack.c.bf16 %v16, %v15
  %v20 = vpack.c.bf16 %v18, %v17
  %v21 = vld [vmem:[%s1] sm:$0xf]
  %v22 = vld [vmem:[%s1 + $0x4] sm:$0xf]
  %v23 = vld [vmem:[%s1 + $0x8] sm:$0xf]
  %v24 = vld [vmem:[%s1 + $0xc] sm:$0xf]
  %v25 = vld [vmem:[%s2] sm:$0x1]
  %v27 = vlaneseq
  %v28 = vshrl.u32 %v27, 7
  %v29 = vsub.s32 0, %v28
  %v30 = vrot.slane %v25, %v29
  %v36 = vunpack.c.l.b16 %v21
  %v37 = vunpack.c.l.b16 %v22
  %v38 = vunpack.c.l.b16 %v23
  %v39 = vunpack.c.l.b16 %v24
  %v40 = vpack.c.b16 %v37, %v36
  %v41 = vpack.c.b16 %v39, %v38
  %vm44 = vcmask 261120
  %v46 = vsel %vm44, %v19, 0
  %v49 = vsel %vm44, %v20, 0
  %51 = vmatprep.subr.bf16.mxu0 0
  %52 = vmatpush1.bf16.msra.mxu0 %v40
  %53 = vmatprep.subr.bf16.mxu0 0
  %54 = vmatpush1.bf16.msra.mxu0 %v41
  %55 = vmatprep.subr.bf16.mxu0 0
  %56 = vmatpush1.bf16.msra.mxu0 0
  %57 = vmatprep.subr.bf16.mxu0 0
  %58 = vmatpush1.bf16.msra.mxu0 0
  %59 = vmatprep.subr.bf16.mxu0 0
  %60 = vmatpush1.bf16.msra.mxu0 0
  %61 = vmatprep.subr.bf16.mxu0 0
  %62 = vmatpush1.bf16.msra.mxu0 0
  %63 = vmatprep.subr.bf16.mxu0 0
  %64 = vmatpush1.bf16.msra.mxu0 0
  %65 = vmatprep.subr.bf16.mxu0 0
  %66 = vmatpush1.bf16.msra.mxu0 0
  %67 = vmatprep.subr.bf16.mxu0 0
  %68 = vmatpush1.bf16.msra.mxu0 0
  %69 = vmatprep.subr.bf16.mxu0 0
  %70 = vmatpush1.bf16.msra.mxu0 0
  %71 = vmatprep.subr.bf16.mxu0 0
  %72 = vmatpush1.bf16.msra.mxu0 0
  %73 = vmatprep.subr.bf16.mxu0 0
  %74 = vmatpush1.bf16.msra.mxu0 0
  %75 = vmatprep.subr.bf16.mxu0 0
  %76 = vmatpush1.bf16.msra.mxu0 0
  %77 = vmatprep.subr.bf16.mxu0 0
  %78 = vmatpush1.bf16.msra.mxu0 0
  %79 = vmatprep.subr.bf16.mxu0 0
  %80 = vmatpush1.bf16.msra.mxu0 0
  %81 = vmatprep.subr.bf16.mxu0 0
  %82 = vmatpush1.bf16.msra.mxu0 0
  %83 = vmatprep.mubr.bf16.mxu0 0
  %84 = vmatmul.mubr.bf16.gmra.mrb[0].mxu0 %v46
  %v85 = vpop.f32.mrb[0].mxu0
  %v86 = vadd.f32 %v30, %v85
  %v87 = vpop.f32.mrb[0].mxu0
  %v88 = vpop.f32.mrb[0].mxu0
  %v89 = vadd.f32 %v30, %v88
  %v90 = vpop.f32.mrb[0].mxu0
  %91 = vmatprep.mubr.bf16.mxu0 0
  %92 = vmatmul.mubr.bf16.gmra.mrb[0].mxu0 %v49
  %v93 = vpop.f32.mrb[0].mxu0
  %v94 = vadd.f32 %v30, %v93
  %v95 = vpop.f32.mrb[0].mxu0
  %v96 = vpop.f32.mrb[0].mxu0
  %v97 = vadd.f32 %v30, %v96
  %v98 = vpop.f32.mrb[0].mxu0
  %99 = vdwg.mxu0
  %vm100 = vcmask 785408
  %101 = vst.msk [vmem:[%s3] sm:$0xff] %vm100, %v86
  %102 = vst.msk [vmem:[%s3 + $0x8] sm:$0xff] %vm100, %v89
  %103 = vst.msk [vmem:[%s3 + $0x10] sm:$0xff] %vm100, %v94
  %104 = vst.msk [vmem:[%s3 + $0x18] sm:$0xff] %vm100, %v97
  // Predicated region
  $region14: #{_lambda_.26} parent=0 // pred_check
    _
  $region15: #{_lambda_.26} parent=0 // pred_check_branch
    %106 = sbr.rel (0) target = $region17
  $region16: #{_lambda_.26} parent=0 // pred_region
    _
  $region17: #{_lambda_.26} parent=0 // pred_fallthru
    _
  // Predicated region
  $region18: #{_lambda_.26} parent=0 // pred_check
    _
  $region19: #{_lambda_.26} parent=0 // pred_check_branch
    %108 = sbr.rel (0) target = $region21
  $region20: #{_lambda_.26} parent=0 // pred_region
    _
  $region21: #{_lambda_.26} parent=0 // pred_fallthru
    _

// kernel: _lambda_.25
$region0: #{_lambda_.25}
  #allocation0 [shape = 'u32[]', space=smem, size = 0x4, offset = 0x4, fixed_abs, tag = 'smem constant byte address 0x4 - core index']
  #allocation1 [shape = 'u32[144,128]{1,0:T(1,128)}', space=vmem, size = 0x12000, scoped, tag = 'internal scratch']
  %s0 = inlined_call_operand.vmem [shape: f32[2,16,4], index: 0, kind: input, shape index: {}]
  %s1 = inlined_call_operand.vmem [shape: f32[2,16,1], index: 1, kind: input, shape index: {}]
  %s2 = inlined_call_operand.vmem [shape: bf16[13,32], index: 2, kind: input, shape index: {}]
  %s3 = inlined_call_operand.vmem [shape: f32[2,16,32], index: 3, kind: output, shape index: {}]
  %s4 = sld [smem:[#allocation0]]
  $region45: #{_lambda_.25} parent=0
    _
  %s6 = ssub.s32 1, %s4
  %s7 = scalar_select 0, %s6, %s4
  loop: start=0, step=1, limit=4
  $region2: #{_lambda_.25} parent=0 // loop_pre_header
    _
  $region3: #{_lambda_.25} parent=0 // loop_header
    %s9 = sphi 0, %s13
    %p10 = scmp.ge.s32.totalorder %s9, 4
    %s19 = sphi 0, %s21
    %s22 = sphi 0, %s19
    %s23 = sphi 0, %s22
    %s39 = sphi 0, %s23
    %s45 = sphi 0, %s47
    %s48 = sphi 0, %s45
    %s49 = sphi 0, %s48
    %s65 = sphi 0, %s49
    %s69 = sphi 0, %s69
    %s71 = sphi 0, %s69
    %s72 = sphi 0, %s71
    %s86 = sphi 0, %s72
    %s92 = sphi 0, %s94
    %s95 = sphi 0, %s92
    %s96 = sphi 0, %s95
    %s112 = sphi 0, %s96
  $region4: #{_lambda_.25} parent=0 // loop_header_branch
    %12 = sbr.rel (%p10) target = $region8
  $region5: #{_lambda_.25} parent=0 // loop_body
    %s14 = ssub.s32 %s9, 1
    %s15 = ssub.s32 %s9, 2
    %s16 = sadd.s32 %s9, 1
    %s17 = ssub.s32 %s9, %s16
    %p18 = scmp.eq.s32.totalorder %s17, 0
    %s20 = sadd.s32 %s19, 1
    %s21 = scalar_select %p18, %s19, %s20
    %p24 = pneg %p18
    %p25 = scmp.eq.s32.totalorder %s9, 1
    %p26 = por %p24, %p25
    %p27 = scmp.ne.s32.totalorder %s19, %s22
    %p28 = scmp.eq.s32.totalorder %s9, 0
    %p29 = por %p27, %p28
    %p30 = scmp.ne.s32.totalorder %s19, %s22
    %p31 = scmp.eq.s32.totalorder %s14, 1
    %p32 = por %p30, %p31
    %p33 = scmp.ne.s32.totalorder %s22, %s23
    %p34 = scmp.eq.s32.totalorder %s14, 0
    %p35 = por %p33, %p34
    %p36 = scmp.ne.s32.totalorder %s22, %s23
    %p37 = scmp.eq.s32.totalorder %s15, 1
    %p38 = por %p36, %p37
    %p40 = scmp.ne.s32.totalorder %s23, %s39
    %p41 = scmp.eq.s32.totalorder %s15, 0
    %p42 = por %p40, %p41
    %s43 = ssub.s32 %s9, %s16
    %p44 = scmp.eq.s32.totalorder %s43, 0
    %s46 = sadd.s32 %s45, 1
    %s47 = scalar_select %p44, %s45, %s46
    %p50 = pneg %p44
    %p51 = scmp.eq.s32.totalorder %s9, 1
    %p52 = por %p50, %p51
    %p53 = scmp.ne.s32.totalorder %s45, %s48
    %p54 = scmp.eq.s32.totalorder %s9, 0
    %p55 = por %p53, %p54
    %p56 = scmp.ne.s32.totalorder %s45, %s48
    %p57 = scmp.eq.s32.totalorder %s14, 1
    %p58 = por %p56, %p57
    %p59 = scmp.ne.s32.totalorder %s48, %s49
    %p60 = scmp.eq.s32.totalorder %s14, 0
    %p61 = por %p59, %p60
    %p62 = scmp.ne.s32.totalorder %s48, %s49
    %p63 = scmp.eq.s32.totalorder %s15, 1
    %p64 = por %p62, %p63
    %p66 = scmp.ne.s32.totalorder %s49, %s65
    %p67 = scmp.eq.s32.totalorder %s15, 0
    %p68 = por %p66, %p67
    %s70 = sadd.s32 %s69, 1
    %p73 = scmp.eq.s32.totalorder %s9, 1
    %p74 = scmp.ne.s32.totalorder %s69, %s71
    %p75 = scmp.eq.s32.totalorder %s9, 0
    %p76 = por %p74, %p75
    %p77 = scmp.ne.s32.totalorder %s69, %s71
    %p78 = scmp.eq.s32.totalorder %s14, 1
    %p79 = por %p77, %p78
    %p80 = scmp.ne.s32.totalorder %s71, %s72
    %p81 = scmp.eq.s32.totalorder %s14, 0
    %p82 = por %p80, %p81
    %p83 = scmp.ne.s32.totalorder %s71, %s72
    %p84 = scmp.eq.s32.totalorder %s15, 1
    %p85 = por %p83, %p84
    %p87 = scmp.ne.s32.totalorder %s72, %s86
    %p88 = scmp.eq.s32.totalorder %s15, 0
    %p89 = por %p87, %p88
    %s90 = ssub.s32 %s9, %s16
    %p91 = scmp.eq.s32.totalorder %s90, 0
    %s93 = sadd.s32 %s92, 1
    %s94 = scalar_select %p91, %s92, %s93
    %p97 = pneg %p91
    %p98 = scmp.eq.s32.totalorder %s9, 1
    %p99 = por %p97, %p98
    %p100 = scmp.ne.s32.totalorder %s92, %s95
    %p101 = scmp.eq.s32.totalorder %s9, 0
    %p102 = por %p100, %p101
    %p103 = scmp.ne.s32.totalorder %s92, %s95
    %p104 = scmp.eq.s32.totalorder %s14, 1
    %p105 = por %p103, %p104
    %p106 = scmp.ne.s32.totalorder %s95, %s96
    %p107 = scmp.eq.s32.totalorder %s14, 0
    %p108 = por %p106, %p107
    %p109 = scmp.ne.s32.totalorder %s95, %s96
    %p110 = scmp.eq.s32.totalorder %s15, 1
    %p111 = por %p109, %p110
    %p113 = scmp.ne.s32.totalorder %s96, %s112
    %p114 = scmp.eq.s32.totalorder %s15, 0
    %p115 = por %p113, %p114
    %p116 = scmp.le.s32.totalorder 1, %s9
    %p117 = scmp.lt.s32.totalorder %s9, 3
    %p118 = pnand %p116, %p117
    %p119 = pneg %p118
    // Predicated region
    $region9: #{_lambda_.25} parent=5 // pred_check
      _
    $region10: #{_lambda_.25} parent=5 // pred_check_branch
      %121 = sbr.rel (%p118) target = $region12
    $region11: #{_lambda_.25} parent=5 // pred_region
      %s122 = ssub.s32 %s9, 1
      // Predicated region
      $region13: #{_lambda_.25} parent=11 // pred_check
        %p123 = pneg %p82
      $region14: #{_lambda_.25} parent=11 // pred_check_branch
        %125 = sbr.rel (%p123) target = $region16
      $region15: #{_lambda_.25} parent=11 // pred_region
        _
      $region16: #{_lambda_.25} parent=11 // pred_fallthru
        _
    $region12: #{_lambda_.25} parent=5 // pred_fallthru
      _
    %p126 = scmp.lt.s32.totalorder %s9, 2
    // Predicated region
    $region17: #{_lambda_.25} parent=5 // pred_check
      %p127 = pneg %p126
    $region18: #{_lambda_.25} parent=5 // pred_check_branch
      %129 = sbr.rel (%p127) target = $region20
    $region19: #{_lambda_.25} parent=5 // pred_region
      // Predicated region
      $region21: #{_lambda_.25} parent=19 // pred_check
        %p130 = pneg %p29
      $region22: #{_lambda_.25} parent=19 // pred_check_branch
        %132 = sbr.rel (%p130) target = $region24
      $region23: #{_lambda_.25} parent=19 // pred_region
        %p133 = scmp.lt.s32.totalorder %s9, 1
        %s134 = scalar_select %p133, %s9, 1
        %s135 = smul.addr %s134, 2
        %s136 = smul.addr %s135, 8
        %s137 = scalar_lea.vmem %s0, %s136
      $region24: #{_lambda_.25} parent=19 // pred_fallthru
        _
      // Predicated region
      $region25: #{_lambda_.25} parent=19 // pred_check
        %p138 = pneg %p55
      $region26: #{_lambda_.25} parent=19 // pred_check_branch
        %140 = sbr.rel (%p138) target = $region28
      $region27: #{_lambda_.25} parent=19 // pred_region
        %p141 = scmp.lt.s32.totalorder %s9, 1
        %s142 = scalar_select %p141, %s9, 1
        %s143 = smul.addr %s142, 2
        %s144 = smul.addr %s143, 8
        %s145 = scalar_lea.vmem %s1, %s144
      $region28: #{_lambda_.25} parent=19 // pred_fallthru
        _
    $region20: #{_lambda_.25} parent=5 // pred_fallthru
      _
    %p146 = scmp.le.s32.totalorder 1, %s9
    %p147 = scmp.lt.s32.totalorder %s9, 3
    %p148 = pnand %p146, %p147
    %p149 = pneg %p148
    // Predicated region
    $region29: #{_lambda_.25} parent=5 // pred_check
      _
    $region30: #{_lambda_.25} parent=5 // pred_check_branch
      %151 = sbr.rel (%p148) target = $region32
    $region31: #{_lambda_.25} parent=5 // pred_region
      %s152 = ssub.s32 %s9, 1
      %p153 = scmp.lt.s32.totalorder %s14, 1
      %s154 = scalar_select %p153, %s14, 1
      %s155 = smul.addr %s154, 2
      %s156 = smul.addr %s155, 8
      %s157 = scalar_lea.vmem %s0, %s156
      %p158 = pneg %p35
      %p159 = pneg %p32
      %p160 = scmp.lt.s32.totalorder %s14, 1
      %s161 = scalar_select %p160, %s14, 1
      %s162 = smul.addr %s161, 2
      %s163 = smul.addr %s162, 8
      %s164 = scalar_lea.vmem %s1, %s163
      %p165 = pneg %p61
      %p166 = pneg %p58
      %p167 = pneg %p82
      %p168 = pneg %p79
      %p169 = pneg %p108
      %p170 = pneg %p105
      %p171 = scmp.lt.s32.totalorder %s14, 1
      %s172 = scalar_select %p171, %s14, 1
      %s173 = smul.addr %s172, 2
      %s174 = smul.addr %s173, 8
      %s175 = scalar_lea.vmem %s3, %s174
      %p176 = scmp.lt.s32.totalorder %s14, 1
      %s177 = scalar_select %p176, %s14, 1
      %s178 = smul.addr %s177, 2
      %s179 = smul.addr %s178, 8
      %s180 = scalar_lea.vmem %s0, %s179
      %p181 = scmp.lt.s32.totalorder %s14, 1
      %s182 = scalar_select %p181, %s14, 1
      %s183 = smul.addr %s182, 2
      %s184 = smul.addr %s183, 8
      %s185 = scalar_lea.vmem %s1, %s184
      %p186 = scmp.lt.s32.totalorder %s14, 1
      %s187 = scalar_select %p186, %s14, 1
      %s188 = smul.addr %s187, 2
      %s189 = smul.addr %s188, 8
      %s190 = scalar_lea.vmem %s3, %s189
      %v192 = vld [vmem:[%s180] sm:$0xff]
      %v193 = vld [vmem:[%s180 + $0x8] sm:$0xff]
      %v194 = vld [vmem:[%s185] sm:$0xff]
      %v195 = vld [vmem:[%s185 + $0x8] sm:$0xff]
      %v197 = vrot.slane %v193, 7
      %vm200 = vcmask 1040384
      %v201 = vrot.slane %v192, 7
      %v202 = vsel %vm200, %v201, %v197
      %v205 = vsel %vm200, %v197, %v201
      %vm206 = vcmask 1046528
      %v207 = vrot.slane %v192, 1
      %v208 = vrot.slane %v193, 1
      %v209 = vsel %vm206, %v207, %v208
      %v212 = vsel %vm206, %v208, %v207
      %213 = vrot.lane.b32.xlu0 %v192, 4
      %v214 = vpop.permute.xlu0 %213
      %215 = vrot.lane.b32.xlu0 %v193, 4
      %v216 = vpop.permute.xlu0 %215
      %220 = vrot.lane.b32.xlu0 %v209, 8
      %v221 = vpop.permute.xlu0 %220
      %222 = vrot.lane.b32.xlu0 %v212, 8
      %v223 = vpop.permute.xlu0 %222
      %228 = vrot.lane.b32.xlu0 %v194, 12
      %v229 = vpop.permute.xlu0 %228
      %230 = vrot.lane.b32.xlu0 %v195, 12
      %v231 = vpop.permute.xlu0 %230
      %vm234 = vcmask 31744
      %v235 = vsel %vm234, %v205, %v214
      %v236 = vsel %vm234, %v202, %v216
      %vm237 = vcmask 64512
      %v238 = vsel %vm237, %v235, %v221
      %v239 = vsel %vm237, %v236, %v223
      %vm240 = vcmask 97280
      %v241 = vsel %vm240, %v238, %v229
      %v242 = vsel %vm240, %v239, %v231
      %v243 = vpack.c.bf16 %v242, %v241
      %v244 = vld [vmem:[%s2] sm:$0xf]
      %v245 = vld [vmem:[%s2 + $0x4] sm:$0x7]
      %v248 = vunpack.c.l.b16 %v244
      %v249 = vunpack.c.l.b16 %v245
      %v250 = vpack.c.b16 %v249, %v248
      %vm251 = vcmask 105472
      %v253 = vsel %vm251, %v243, 0
      %vm255 = vcmask 1045504
      %v256 = vsel %vm255, 4294967295, 65535
      %v257 = vsel %vm206, %v256, 0
      %v259 = vand.u32 %v250, %v257
      %261 = vmatprep.subr.bf16.mxu0 0
      %262 = vmatpush1.bf16.msra.mxu0 %v259
      %263 = vmatprep.subr.bf16.mxu0 0
      %264 = vmatpush1.bf16.msra.mxu0 0
      %265 = vmatprep.subr.bf16.mxu0 0
      %266 = vmatpush1.bf16.msra.mxu0 0
      %267 = vmatprep.subr.bf16.mxu0 0
      %268 = vmatpush1.bf16.msra.mxu0 0
      %269 = vmatprep.subr.bf16.mxu0 0
      %270 = vmatpush1.bf16.msra.mxu0 0
      %271 = vmatprep.subr.bf16.mxu0 0
      %272 = vmatpush1.bf16.msra.mxu0 0
      %273 = vmatprep.subr.bf16.mxu0 0
      %274 = vmatpush1.bf16.msra.mxu0 0
      %275 = vmatprep.subr.bf16.mxu0 0
      %276 = vmatpush1.bf16.msra.mxu0 0
      %277 = vmatprep.subr.bf16.mxu0 0
      %278 = vmatpush1.bf16.msra.mxu0 0
      %279 = vmatprep.subr.bf16.mxu0 0
      %280 = vmatpush1.bf16.msra.mxu0 0
      %281 = vmatprep.subr.bf16.mxu0 0
      %282 = vmatpush1.bf16.msra.mxu0 0
      %283 = vmatprep.subr.bf16.mxu0 0
      %284 = vmatpush1.bf16.msra.mxu0 0
      %285 = vmatprep.subr.bf16.mxu0 0
      %286 = vmatpush1.bf16.msra.mxu0 0
      %287 = vmatprep.subr.bf16.mxu0 0
      %288 = vmatpush1.bf16.msra.mxu0 0
      %289 = vmatprep.subr.bf16.mxu0 0
      %290 = vmatpush1.bf16.msra.mxu0 0
      %291 = vmatprep.subr.bf16.mxu0 0
      %292 = vmatpush1.bf16.msra.mxu0 0
      %293 = vmatprep.mubr.bf16.mxu0 0
      %294 = vmatmul.mubr.bf16.gmra.mrb[0].mxu0 %v253
      %v295 = vpop.f32.mrb[0].mxu0
      %v296 = vadd.f32 0.0, %v295
      %v297 = vpop.f32.mrb[0].mxu0
      %v298 = vpop.f32.mrb[0].mxu0
      %v299 = vadd.f32 0.0, %v298
      %v300 = vpop.f32.mrb[0].mxu0
      %301 = vdwg.mxu0
      %vm302 = vcmask 261120
      %303 = vst.msk [vmem:[%s190] sm:$0xff] %vm302, %v296
      %304 = vst.msk [vmem:[%s190 + $0x8] sm:$0xff] %vm302, %v299
      %p305 = scmp.lt.s32.totalorder %s14, 1
      %s306 = scalar_select %p305, %s14, 1
      %s307 = smul.addr %s306, 2
      %s308 = smul.addr %s307, 8
      %s309 = scalar_lea.vmem %s3, %s308
      // Predicated region
      $region33: #{_lambda_.25} parent=31 // pred_check
        %p310 = pneg %p105
      $region34: #{_lambda_.25} parent=31 // pred_check_branch
        %312 = sbr.rel (%p310) target = $region36
      $region35: #{_lambda_.25} parent=31 // pred_region
        _
      $region36: #{_lambda_.25} parent=31 // pred_fallthru
        _
    $region32: #{_lambda_.25} parent=5 // pred_fallthru
      _
    %p313 = scmp.le.s32.totalorder 2, %s9
    // Predicated region
    $region37: #{_lambda_.25} parent=5 // pred_check
      %p314 = pneg %p313
    $region38: #{_lambda_.25} parent=5 // pred_check_branch
      %316 = sbr.rel (%p314) target = $region40
    $region39: #{_lambda_.25} parent=5 // pred_region
      %s317 = ssub.s32 %s9, 2
      // Predicated region
      $region41: #{_lambda_.25} parent=39 // pred_check
        %p318 = pneg %p111
      $region42: #{_lambda_.25} parent=39 // pred_check_branch
        %320 = sbr.rel (%p318) target = $region44
      $region43: #{_lambda_.25} parent=39 // pred_region
        %p321 = scmp.lt.s32.totalorder %s15, 1
        %s322 = scalar_select %p321, %s15, 1
        %s323 = smul.addr %s322, 2
        %s324 = smul.addr %s323, 8
        %s325 = scalar_lea.vmem %s3, %s324
      $region44: #{_lambda_.25} parent=39 // pred_fallthru
        _
    $region40: #{_lambda_.25} parent=5 // pred_fallthru
      _
  $region6: #{_lambda_.25} parent=0 // loop_footer
    %s13 = sadd.s32 1, %s9
  $region7: #{_lambda_.25} parent=0 // loop_footer_branch
    %8 = sbr.rel target = $region3
  $region8: #{_lambda_.25} parent=0 // loop_exit
    _

// kernel: _lambda_.27
$region0: #{_lambda_.27}
  #allocation0 [shape = 'u32[]', space=smem, size = 0x4, offset = 0x4, fixed_abs, tag = 'smem constant byte address 0x4 - core index']
  #allocation1 [shape = 'u32[144,128]{1,0:T(1,128)}', space=vmem, size = 0x12000, scoped, tag = 'internal scratch']
  %s0 = inlined_call_operand.vmem [shape: f32[2,16,32], index: 0, kind: input, shape index: {}]
  %s1 = inlined_call_operand.vmem [shape: f32[2,16,32], index: 1, kind: input, shape index: {}]
  %s2 = inlined_call_operand.vmem [shape: f32[2,1,16], index: 2, kind: output, shape index: {}]
  %s3 = sld [smem:[#allocation0]]
  $region41: #{_lambda_.27} parent=0
    _
  %s5 = ssub.s32 1, %s3
  %s6 = scalar_select 0, %s5, %s3
  loop: start=0, step=1, limit=4
  $region2: #{_lambda_.27} parent=0 // loop_pre_header
    _
  $region3: #{_lambda_.27} parent=0 // loop_header
    %s8 = sphi 0, %s12
    %p9 = scmp.ge.s32.totalorder %s8, 4
    %s18 = sphi 0, %s20
    %s21 = sphi 0, %s18
    %s22 = sphi 0, %s21
    %s38 = sphi 0, %s22
    %s44 = sphi 0, %s46
    %s47 = sphi 0, %s44
    %s48 = sphi 0, %s47
    %s64 = sphi 0, %s48
    %s70 = sphi 0, %s72
    %s73 = sphi 0, %s70
    %s74 = sphi 0, %s73
    %s90 = sphi 0, %s74
  $region4: #{_lambda_.27} parent=0 // loop_header_branch
    %11 = sbr.rel (%p9) target = $region8
  $region5: #{_lambda_.27} parent=0 // loop_body
    %s13 = ssub.s32 %s8, 1
    %s14 = ssub.s32 %s8, 2
    %s15 = sadd.s32 %s8, 1
    %s16 = ssub.s32 %s8, %s15
    %p17 = scmp.eq.s32.totalorder %s16, 0
    %s19 = sadd.s32 %s18, 1
    %s20 = scalar_select %p17, %s18, %s19
    %p23 = pneg %p17
    %p24 = scmp.eq.s32.totalorder %s8, 1
    %p25 = por %p23, %p24
    %p26 = scmp.ne.s32.totalorder %s18, %s21
    %p27 = scmp.eq.s32.totalorder %s8, 0
    %p28 = por %p26, %p27
    %p29 = scmp.ne.s32.totalorder %s18, %s21
    %p30 = scmp.eq.s32.totalorder %s13, 1
    %p31 = por %p29, %p30
    %p32 = scmp.ne.s32.totalorder %s21, %s22
    %p33 = scmp.eq.s32.totalorder %s13, 0
    %p34 = por %p32, %p33
    %p35 = scmp.ne.s32.totalorder %s21, %s22
    %p36 = scmp.eq.s32.totalorder %s14, 1
    %p37 = por %p35, %p36
    %p39 = scmp.ne.s32.totalorder %s22, %s38
    %p40 = scmp.eq.s32.totalorder %s14, 0
    %p41 = por %p39, %p40
    %s42 = ssub.s32 %s8, %s15
    %p43 = scmp.eq.s32.totalorder %s42, 0
    %s45 = sadd.s32 %s44, 1
    %s46 = scalar_select %p43, %s44, %s45
    %p49 = pneg %p43
    %p50 = scmp.eq.s32.totalorder %s8, 1
    %p51 = por %p49, %p50
    %p52 = scmp.ne.s32.totalorder %s44, %s47
    %p53 = scmp.eq.s32.totalorder %s8, 0
    %p54 = por %p52, %p53
    %p55 = scmp.ne.s32.totalorder %s44, %s47
    %p56 = scmp.eq.s32.totalorder %s13, 1
    %p57 = por %p55, %p56
    %p58 = scmp.ne.s32.totalorder %s47, %s48
    %p59 = scmp.eq.s32.totalorder %s13, 0
    %p60 = por %p58, %p59
    %p61 = scmp.ne.s32.totalorder %s47, %s48
    %p62 = scmp.eq.s32.totalorder %s14, 1
    %p63 = por %p61, %p62
    %p65 = scmp.ne.s32.totalorder %s48, %s64
    %p66 = scmp.eq.s32.totalorder %s14, 0
    %p67 = por %p65, %p66
    %s68 = ssub.s32 %s8, %s15
    %p69 = scmp.eq.s32.totalorder %s68, 0
    %s71 = sadd.s32 %s70, 1
    %s72 = scalar_select %p69, %s70, %s71
    %p75 = pneg %p69
    %p76 = scmp.eq.s32.totalorder %s8, 1
    %p77 = por %p75, %p76
    %p78 = scmp.ne.s32.totalorder %s70, %s73
    %p79 = scmp.eq.s32.totalorder %s8, 0
    %p80 = por %p78, %p79
    %p81 = scmp.ne.s32.totalorder %s70, %s73
    %p82 = scmp.eq.s32.totalorder %s13, 1
    %p83 = por %p81, %p82
    %p84 = scmp.ne.s32.totalorder %s73, %s74
    %p85 = scmp.eq.s32.totalorder %s13, 0
    %p86 = por %p84, %p85
    %p87 = scmp.ne.s32.totalorder %s73, %s74
    %p88 = scmp.eq.s32.totalorder %s14, 1
    %p89 = por %p87, %p88
    %p91 = scmp.ne.s32.totalorder %s74, %s90
    %p92 = scmp.eq.s32.totalorder %s14, 0
    %p93 = por %p91, %p92
    %p94 = scmp.le.s32.totalorder 1, %s8
    %p95 = scmp.lt.s32.totalorder %s8, 3
    %p96 = pnand %p94, %p95
    %p97 = pneg %p96
    // Predicated region
    $region9: #{_lambda_.27} parent=5 // pred_check
      _
    $region10: #{_lambda_.27} parent=5 // pred_check_branch
      %99 = sbr.rel (%p96) target = $region12
    $region11: #{_lambda_.27} parent=5 // pred_region
      %s100 = ssub.s32 %s8, 1
    $region12: #{_lambda_.27} parent=5 // pred_fallthru
      _
    %p101 = scmp.lt.s32.totalorder %s8, 2
    // Predicated region
    $region13: #{_lambda_.27} parent=5 // pred_check
      %p102 = pneg %p101
    $region14: #{_lambda_.27} parent=5 // pred_check_branch
      %104 = sbr.rel (%p102) target = $region16
    $region15: #{_lambda_.27} parent=5 // pred_region
      // Predicated region
      $region17: #{_lambda_.27} parent=15 // pred_check
        %p105 = pneg %p28
      $region18: #{_lambda_.27} parent=15 // pred_check_branch
        %107 = sbr.rel (%p105) target = $region20
      $region19: #{_lambda_.27} parent=15 // pred_region
        %p108 = scmp.lt.s32.totalorder %s8, 1
        %s109 = scalar_select %p108, %s8, 1
        %s110 = smul.addr %s109, 2
        %s111 = smul.addr %s110, 8
        %s112 = scalar_lea.vmem %s0, %s111
      $region20: #{_lambda_.27} parent=15 // pred_fallthru
        _
      // Predicated region
      $region21: #{_lambda_.27} parent=15 // pred_check
        %p113 = pneg %p54
      $region22: #{_lambda_.27} parent=15 // pred_check_branch
        %115 = sbr.rel (%p113) target = $region24
      $region23: #{_lambda_.27} parent=15 // pred_region
        %p116 = scmp.lt.s32.totalorder %s8, 1
        %s117 = scalar_select %p116, %s8, 1
        %s118 = smul.addr %s117, 2
        %s119 = smul.addr %s118, 8
        %s120 = scalar_lea.vmem %s1, %s119
      $region24: #{_lambda_.27} parent=15 // pred_fallthru
        _
    $region16: #{_lambda_.27} parent=5 // pred_fallthru
      _
    %p121 = scmp.le.s32.totalorder 1, %s8
    %p122 = scmp.lt.s32.totalorder %s8, 3
    %p123 = pnand %p121, %p122
    %p124 = pneg %p123
    // Predicated region
    $region25: #{_lambda_.27} parent=5 // pred_check
      _
    $region26: #{_lambda_.27} parent=5 // pred_check_branch
      %126 = sbr.rel (%p123) target = $region28
    $region27: #{_lambda_.27} parent=5 // pred_region
      %s127 = ssub.s32 %s8, 1
      %p128 = scmp.lt.s32.totalorder %s13, 1
      %s129 = scalar_select %p128, %s13, 1
      %s130 = smul.addr %s129, 2
      %s131 = smul.addr %s130, 8
      %s132 = scalar_lea.vmem %s0, %s131
      %p133 = pneg %p34
      %p134 = pneg %p31
      %p135 = scmp.lt.s32.totalorder %s13, 1
      %s136 = scalar_select %p135, %s13, 1
      %s137 = smul.addr %s136, 2
      %s138 = smul.addr %s137, 8
      %s139 = scalar_lea.vmem %s1, %s138
      %p140 = pneg %p60
      %p141 = pneg %p57
      %p142 = pneg %p86
      %p143 = pneg %p83
      %p144 = scmp.lt.s32.totalorder %s13, 1
      %s145 = scalar_select %p144, %s13, 1
      %s146 = scalar_lea.vmem %s2, %s145
      %p147 = scmp.lt.s32.totalorder %s13, 1
      %s148 = scalar_select %p147, %s13, 1
      %s149 = smul.addr %s148, 2
      %s150 = smul.addr %s149, 8
      %s151 = scalar_lea.vmem %s0, %s150
      %p152 = scmp.lt.s32.totalorder %s13, 1
      %s153 = scalar_select %p152, %s13, 1
      %s154 = smul.addr %s153, 2
      %s155 = smul.addr %s154, 8
      %s156 = scalar_lea.vmem %s1, %s155
      %p157 = scmp.lt.s32.totalorder %s13, 1
      %s158 = scalar_select %p157, %s13, 1
      %s159 = scalar_lea.vmem %s2, %s158
      %v161 = vld [vmem:[%s151] sm:$0xff]
      %v162 = vld [vmem:[%s151 + $0x8] sm:$0xff]
      %v163 = vpack.c.bf16 %v162, %v161
      %v164 = vld [vmem:[%s156] sm:$0xff]
      %v165 = vld [vmem:[%s156 + $0x8] sm:$0xff]
      %v166 = vpack.c.bf16 %v165, %v164
      %vm167 = vcmask 261120
      %v169 = vsel %vm167, %v166, 0
      %v172 = vsel %vm167, %v163, 0
      %174 = vmatprep.subr.bf16.mxu0 0
      %175 = vmatpush1.bf16.xpose.msra.mxu0 %v172
      %176 = vmatprep.subr.bf16.mxu0 0
      %177 = vmatpush1.bf16.xpose.msra.mxu0 0
      %178 = vmatprep.subr.bf16.mxu0 0
      %179 = vmatpush1.bf16.xpose.msra.mxu0 0
      %180 = vmatprep.subr.bf16.mxu0 0
      %181 = vmatpush1.bf16.xpose.msra.mxu0 0
      %182 = vmatprep.subr.bf16.mxu0 0
      %183 = vmatpush1.bf16.xpose.msra.mxu0 0
      %184 = vmatprep.subr.bf16.mxu0 0
      %185 = vmatpush1.bf16.xpose.msra.mxu0 0
      %186 = vmatprep.subr.bf16.mxu0 0
      %187 = vmatpush1.bf16.xpose.msra.mxu0 0
      %188 = vmatprep.subr.bf16.mxu0 0
      %189 = vmatpush1.bf16.xpose.msra.mxu0 0
      %190 = vmatprep.subr.bf16.mxu0 0
      %191 = vmatpush1.bf16.xpose.msra.mxu0 0
      %192 = vmatprep.subr.bf16.mxu0 0
      %193 = vmatpush1.bf16.xpose.msra.mxu0 0
      %194 = vmatprep.subr.bf16.mxu0 0
      %195 = vmatpush1.bf16.xpose.msra.mxu0 0
      %196 = vmatprep.subr.bf16.mxu0 0
      %197 = vmatpush1.bf16.xpose.msra.mxu0 0
      %198 = vmatprep.subr.bf16.mxu0 0
      %199 = vmatpush1.bf16.xpose.msra.mxu0 0
      %200 = vmatprep.subr.bf16.mxu0 0
      %201 = vmatpush1.bf16.xpose.msra.mxu0 0
      %202 = vmatprep.subr.bf16.mxu0 0
      %203 = vmatpush1.bf16.xpose.msra.mxu0 0
      %204 = vmatprep.subr.bf16.mxu0 0
      %205 = vmatpush1.bf16.xpose.msra.mxu0 0
      %206 = vmatprep.mubr.bf16.mxu0 0
      %207 = vmatmul.mubr.bf16.gmra.mrb[0].mxu0 %v169
      %v208 = vpop.f32.mrb[0].mxu0
      %v209 = vadd.f32 0.0, %v208
      %v210 = vpop.f32.mrb[0].mxu0
      %v211 = vpop.f32.mrb[0].mxu0
      %v212 = vadd.f32 0.0, %v211
      %v213 = vpop.f32.mrb[0].mxu0
      %214 = vdwg.mxu0
      %217 = vrot.lane.b32.xlu0 %v209, 16
      %v218 = vpop.permute.xlu0 %217
      %219 = vrot.lane.b32.xlu0 %v212, 16
      %v220 = vpop.permute.xlu0 %219
      %vm223 = vcmask 130048
      %v224 = vsel %vm223, %v209, %v218
      %v225 = vsel %vm223, %v212, %v220
      %v226 = vadd.f32 %v224, 0.0
      %v228 = vrot.slane %v224, 1
      %229 = vrot.lane.b32.xlu0 %v228, 127
      %v230 = vpop.permute.xlu0 %229
      %v232 = vadd.f32 %v226, %v230
      %v233 = vrot.slane %v224, 2
      %234 = vrot.lane.b32.xlu0 %v233, 126
      %v235 = vpop.permute.xlu0 %234
      %v237 = vadd.f32 %v232, %v235
      %v238 = vrot.slane %v224, 3
      %239 = vrot.lane.b32.xlu0 %v238, 125
      %v240 = vpop.permute.xlu0 %239
      %v242 = vadd.f32 %v237, %v240
      %v243 = vrot.slane %v224, 4
      %244 = vrot.lane.b32.xlu0 %v243, 124
      %v245 = vpop.permute.xlu0 %244
      %v247 = vadd.f32 %v242, %v245
      %v248 = vrot.slane %v224, 5
      %249 = vrot.lane.b32.xlu0 %v248, 123
      %v250 = vpop.permute.xlu0 %249
      %v252 = vadd.f32 %v247, %v250
      %v253 = vrot.slane %v224, 6
      %254 = vrot.lane.b32.xlu0 %v253, 122
      %v255 = vpop.permute.xlu0 %254
      %v257 = vadd.f32 %v252, %v255
      %v258 = vrot.slane %v224, 7
      %259 = vrot.lane.b32.xlu0 %v258, 121
      %v260 = vpop.permute.xlu0 %259
      %v262 = vadd.f32 %v257, %v260
      %264 = vrot.lane.b32.xlu0 %v225, 120
      %v265 = vpop.permute.xlu0 %264
      %v267 = vadd.f32 %v262, %v265
      %v268 = vrot.slane %v225, 1
      %269 = vrot.lane.b32.xlu0 %v268, 119
      %v270 = vpop.permute.xlu0 %269
      %v272 = vadd.f32 %v267, %v270
      %v273 = vrot.slane %v225, 2
      %274 = vrot.lane.b32.xlu0 %v273, 118
      %v275 = vpop.permute.xlu0 %274
      %v277 = vadd.f32 %v272, %v275
      %v278 = vrot.slane %v225, 3
      %279 = vrot.lane.b32.xlu0 %v278, 117
      %v280 = vpop.permute.xlu0 %279
      %v282 = vadd.f32 %v277, %v280
      %v283 = vrot.slane %v225, 4
      %284 = vrot.lane.b32.xlu0 %v283, 116
      %v285 = vpop.permute.xlu0 %284
      %v287 = vadd.f32 %v282, %v285
      %v288 = vrot.slane %v225, 5
      %289 = vrot.lane.b32.xlu0 %v288, 115
      %v290 = vpop.permute.xlu0 %289
      %v292 = vadd.f32 %v287, %v290
      %v293 = vrot.slane %v225, 6
      %294 = vrot.lane.b32.xlu0 %v293, 114
      %v295 = vpop.permute.xlu0 %294
      %v297 = vadd.f32 %v292, %v295
      %v298 = vrot.slane %v225, 7
      %299 = vrot.lane.b32.xlu0 %v298, 113
      %v300 = vpop.permute.xlu0 %299
      %v302 = vadd.f32 %v297, %v300
      %v303 = vmul.f32 %v302, 0.03125
      %vm304 = vcmask 122880
      %305 = vst.msk [vmem:[%s159] sm:$0x1] %vm304, %v303
      %p306 = scmp.lt.s32.totalorder %s13, 1
      %s307 = scalar_select %p306, %s13, 1
      %s308 = scalar_lea.vmem %s2, %s307
      // Predicated region
      $region29: #{_lambda_.27} parent=27 // pred_check
        %p309 = pneg %p83
      $region30: #{_lambda_.27} parent=27 // pred_check_branch
        %311 = sbr.rel (%p309) target = $region32
      $region31: #{_lambda_.27} parent=27 // pred_region
        _
      $region32: #{_lambda_.27} parent=27 // pred_fallthru
        _
    $region28: #{_lambda_.27} parent=5 // pred_fallthru
      _
    %p312 = scmp.le.s32.totalorder 2, %s8
    // Predicated region
    $region33: #{_lambda_.27} parent=5 // pred_check
      %p313 = pneg %p312
    $region34: #{_lambda_.27} parent=5 // pred_check_branch
      %315 = sbr.rel (%p313) target = $region36
    $region35: #{_lambda_.27} parent=5 // pred_region
      %s316 = ssub.s32 %s8, 2
      // Predicated region
      $region37: #{_lambda_.27} parent=35 // pred_check
        %p317 = pneg %p89
      $region38: #{_lambda_.27} parent=35 // pred_check_branch
        %319 = sbr.rel (%p317) target = $region40
      $region39: #{_lambda_.27} parent=35 // pred_region
        %p320 = scmp.lt.s32.totalorder %s14, 1
        %s321 = scalar_select %p320, %s14, 1
        %s322 = scalar_lea.vmem %s2, %s321
      $region40: #{_lambda_.27} parent=35 // pred_fallthru
        _
    $region36: #{_lambda_.27} parent=5 // pred_fallthru
      _
  $region6: #{_lambda_.27} parent=0 // loop_footer
    %s12 = sadd.s32 1, %s8
  $region7: #{_lambda_.27} parent=0 // loop_footer_branch
    %7 = sbr.rel target = $region3
  $region8: #{_lambda_.27} parent=0 // loop_exit
    _

// kernel: _lambda_.29
$region0: #{_lambda_.29}
  #allocation0 [shape = 'u32[]', space=smem, size = 0x4, offset = 0x4, fixed_abs, tag = 'smem constant byte address 0x4 - core index']
  #allocation1 [shape = 'u32[144,128]{1,0:T(1,128)}', space=vmem, size = 0x12000, scoped, tag = 'internal scratch']
  %s0 = inlined_call_operand.vmem [shape: f32[32,32], index: 0, kind: input, shape index: {}]
  %s1 = inlined_call_operand.vmem [shape: bf16[32,32], index: 1, kind: input, shape index: {}]
  %s2 = inlined_call_operand.vmem [shape: f32[1,32], index: 2, kind: input, shape index: {}]
  %s3 = inlined_call_operand.vmem [shape: f32[32,32], index: 3, kind: output, shape index: {}]
  %s4 = sld [smem:[#allocation0]]
  $region22: #{_lambda_.29} parent=0
    _
  %s6 = ssub.s32 1, %s4
  %s7 = scalar_select 0, %s6, %s4
  // Predicated region
  $region2: #{_lambda_.29} parent=0 // pred_check
    _
  $region3: #{_lambda_.29} parent=0 // pred_check_branch
    %9 = sbr.rel (0) target = $region5
  $region4: #{_lambda_.29} parent=0 // pred_region
    _
  $region5: #{_lambda_.29} parent=0 // pred_fallthru
    _
  // Predicated region
  $region6: #{_lambda_.29} parent=0 // pred_check
    _
  $region7: #{_lambda_.29} parent=0 // pred_check_branch
    %11 = sbr.rel (0) target = $region9
  $region8: #{_lambda_.29} parent=0 // pred_region
    _
  $region9: #{_lambda_.29} parent=0 // pred_fallthru
    _
  // Predicated region
  $region10: #{_lambda_.29} parent=0 // pred_check
    _
  $region11: #{_lambda_.29} parent=0 // pred_check_branch
    %13 = sbr.rel (0) target = $region13
  $region12: #{_lambda_.29} parent=0 // pred_region
    _
  $region13: #{_lambda_.29} parent=0 // pred_fallthru
    _
  %v15 = vld [vmem:[%s0] sm:$0xff]
  %v16 = vld [vmem:[%s0 + $0x8] sm:$0xff]
  %v17 = vld [vmem:[%s0 + $0x10] sm:$0xff]
  %v18 = vld [vmem:[%s0 + $0x18] sm:$0xff]
  %v19 = vpack.c.bf16 %v16, %v15
  %v20 = vpack.c.bf16 %v18, %v17
  %v21 = vld [vmem:[%s1] sm:$0xf]
  %v22 = vld [vmem:[%s1 + $0x4] sm:$0xf]
  %v23 = vld [vmem:[%s1 + $0x8] sm:$0xf]
  %v24 = vld [vmem:[%s1 + $0xc] sm:$0xf]
  %v25 = vld [vmem:[%s2] sm:$0x1]
  %v27 = vlaneseq
  %v28 = vshrl.u32 %v27, 7
  %v29 = vsub.s32 0, %v28
  %v30 = vrot.slane %v25, %v29
  %v36 = vunpack.c.l.b16 %v21
  %v37 = vunpack.c.l.b16 %v22
  %v38 = vunpack.c.l.b16 %v23
  %v39 = vunpack.c.l.b16 %v24
  %v40 = vpack.c.b16 %v37, %v36
  %v41 = vpack.c.b16 %v39, %v38
  %vm44 = vcmask 261120
  %v46 = vsel %vm44, %v19, 0
  %v49 = vsel %vm44, %v20, 0
  %51 = vmatprep.subr.bf16.mxu0 0
  %52 = vmatpush1.bf16.msra.mxu0 %v40
  %53 = vmatprep.subr.bf16.mxu0 0
  %54 = vmatpush1.bf16.msra.mxu0 %v41
  %55 = vmatprep.subr.bf16.mxu0 0
  %56 = vmatpush1.bf16.msra.mxu0 0
  %57 = vmatprep.subr.bf16.mxu0 0
  %58 = vmatpush1.bf16.msra.mxu0 0
  %59 = vmatprep.subr.bf16.mxu0 0
  %60 = vmatpush1.bf16.msra.mxu0 0
  %61 = vmatprep.subr.bf16.mxu0 0
  %62 = vmatpush1.bf16.msra.mxu0 0
  %63 = vmatprep.subr.bf16.mxu0 0
  %64 = vmatpush1.bf16.msra.mxu0 0
  %65 = vmatprep.subr.bf16.mxu0 0
  %66 = vmatpush1.bf16.msra.mxu0 0
  %67 = vmatprep.subr.bf16.mxu0 0
  %68 = vmatpush1.bf16.msra.mxu0 0
  %69 = vmatprep.subr.bf16.mxu0 0
  %70 = vmatpush1.bf16.msra.mxu0 0
  %71 = vmatprep.subr.bf16.mxu0 0
  %72 = vmatpush1.bf16.msra.mxu0 0
  %73 = vmatprep.subr.bf16.mxu0 0
  %74 = vmatpush1.bf16.msra.mxu0 0
  %75 = vmatprep.subr.bf16.mxu0 0
  %76 = vmatpush1.bf16.msra.mxu0 0
  %77 = vmatprep.subr.bf16.mxu0 0
  %78 = vmatpush1.bf16.msra.mxu0 0
  %79 = vmatprep.subr.bf16.mxu0 0
  %80 = vmatpush1.bf16.msra.mxu0 0
  %81 = vmatprep.subr.bf16.mxu0 0
  %82 = vmatpush1.bf16.msra.mxu0 0
  %83 = vmatprep.mubr.bf16.mxu0 0
  %84 = vmatmul.mubr.bf16.gmra.mrb[0].mxu0 %v46
  %v85 = vpop.f32.mrb[0].mxu0
  %v86 = vadd.f32 %v30, %v85
  %v87 = vpop.f32.mrb[0].mxu0
  %v88 = vpop.f32.mrb[0].mxu0
  %v89 = vadd.f32 %v30, %v88
  %v90 = vpop.f32.mrb[0].mxu0
  %91 = vmatprep.mubr.bf16.mxu0 0
  %92 = vmatmul.mubr.bf16.gmra.mrb[0].mxu0 %v49
  %v93 = vpop.f32.mrb[0].mxu0
  %v94 = vadd.f32 %v30, %v93
  %v95 = vpop.f32.mrb[0].mxu0
  %v96 = vpop.f32.mrb[0].mxu0
  %v97 = vadd.f32 %v30, %v96
  %v98 = vpop.f32.mrb[0].mxu0
  %99 = vdwg.mxu0
  %100 = vst.msk [vmem:[%s3] sm:$0xff] %vm44, %v86
  %101 = vst.msk [vmem:[%s3 + $0x8] sm:$0xff] %vm44, %v89
  %102 = vst.msk [vmem:[%s3 + $0x10] sm:$0xff] %vm44, %v94
  %103 = vst.msk [vmem:[%s3 + $0x18] sm:$0xff] %vm44, %v97
  // Predicated region
  $region14: #{_lambda_.29} parent=0 // pred_check
    _
  $region15: #{_lambda_.29} parent=0 // pred_check_branch
    %105 = sbr.rel (0) target = $region17
  $region16: #{_lambda_.29} parent=0 // pred_region
    _
  $region17: #{_lambda_.29} parent=0 // pred_fallthru
    _
  // Predicated region
  $region18: #{_lambda_.29} parent=0 // pred_check
    _
  $region19: #{_lambda_.29} parent=0 // pred_check_branch
    %107 = sbr.rel (0) target = $region21
  $region20: #{_lambda_.29} parent=0 // pred_region
    _
  $region21: #{_lambda_.29} parent=0 // pred_fallthru
    _

// kernel: _lambda_.22
$region0: #{_lambda_.22}
  #allocation0 [shape = 'u32[]', space=smem, size = 0x4, offset = 0x4, fixed_abs, tag = 'smem constant byte address 0x4 - core index']
  #allocation1 [shape = 'u32[144,128]{1,0:T(1,128)}', space=vmem, size = 0x12000, scoped, tag = 'internal scratch']
  %s0 = inlined_call_operand.vmem [shape: s32[2,2], index: 0, kind: input, shape index: {}]
  %s1 = inlined_call_operand.vmem [shape: f32[2,2], index: 1, kind: input, shape index: {}]
  %s2 = inlined_call_operand.vmem [shape: f32[2,16,32], index: 2, kind: input, shape index: {}]
  %s3 = inlined_call_operand.vmem [shape: f32[2,16,32], index: 3, kind: input, shape index: {}]
  %s4 = inlined_call_operand.vmem [shape: bf16[32,32], index: 4, kind: input, shape index: {}]
  %s5 = inlined_call_operand.vmem [shape: f32[1,32], index: 5, kind: input, shape index: {}]
  %s6 = inlined_call_operand.vmem [shape: f32[2,16,32], index: 6, kind: output, shape index: {}]
  %s7 = sld [smem:[#allocation0]]
  $region65: #{_lambda_.22} parent=0
    _
  %s9 = ssub.s32 1, %s7
  %s10 = scalar_select 0, %s9, %s7
  $region1: #{_lambda_.22} parent=0
    #allocation2 [shape = 'u8[1024]{0}', space=smem, size = 0x400, scoped, tag = 'input window, operand 0, single buffered']
    #allocation3 [shape = 's32[2]{0}', space=sflag, size = 0x8, scoped, tag = 'scoped memory for _lambda_.22']
    #allocation4 [shape = 'u8[1024]{0}', space=smem, size = 0x400, scoped, tag = 'input window, operand 1, single buffered']
    #allocation5 [shape = 's32[1]{0}', space=sflag, size = 0x4, scoped, tag = 'scoped memory for _lambda_.22']
    %11 = vsyncpa [#allocation3], 0
    %12 = vsyncpa [#allocation5], 0
    loop: start=0, step=1, limit=4
    $region2: #{_lambda_.22} parent=1 // loop_pre_header
      _
    $region3: #{_lambda_.22} parent=1 // loop_header
      %s14 = sphi 0, %s18
      %p15 = scmp.ge.s32.totalorder %s14, 4
      %s22 = sphi 0, %s22
      %s24 = sphi 0, %s22
      %s25 = sphi 0, %s24
      %s39 = sphi 0, %s25
      %s43 = sphi 0, %s43
      %s45 = sphi 0, %s43
      %s46 = sphi 0, %s45
      %s60 = sphi 0, %s46
      %s66 = sphi 0, %s68
      %s69 = sphi 0, %s66
      %s70 = sphi 0, %s69
      %s86 = sphi 0, %s70
      %s92 = sphi 0, %s94
      %s95 = sphi 0, %s92
      %s96 = sphi 0, %s95
      %s112 = sphi 0, %s96
      %s116 = sphi 0, %s116
      %s118 = sphi 0, %s116
      %s119 = sphi 0, %s118
      %s133 = sphi 0, %s119
      %s137 = sphi 0, %s137
      %s139 = sphi 0, %s137
      %s140 = sphi 0, %s139
      %s154 = sphi 0, %s140
      %s160 = sphi 0, %s162
      %s163 = sphi 0, %s160
      %s164 = sphi 0, %s163
      %s180 = sphi 0, %s164
    $region4: #{_lambda_.22} parent=1 // loop_header_branch
      %17 = sbr.rel (%p15) target = $region8
    $region5: #{_lambda_.22} parent=1 // loop_body
      %s19 = ssub.s32 %s14, 1
      %s20 = ssub.s32 %s14, 2
      %s21 = sadd.s32 %s14, 1
      %s23 = sadd.s32 %s22, 1
      %p26 = scmp.eq.s32.totalorder %s14, 1
      %p27 = scmp.ne.s32.totalorder %s22, %s24
      %p28 = scmp.eq.s32.totalorder %s14, 0
      %p29 = por %p27, %p28
      %p30 = scmp.ne.s32.totalorder %s22, %s24
      %p31 = scmp.eq.s32.totalorder %s19, 1
      %p32 = por %p30, %p31
      %p33 = scmp.ne.s32.totalorder %s24, %s25
      %p34 = scmp.eq.s32.totalorder %s19, 0
      %p35 = por %p33, %p34
      %p36 = scmp.ne.s32.totalorder %s24, %s25
      %p37 = scmp.eq.s32.totalorder %s20, 1
      %p38 = por %p36, %p37
      %p40 = scmp.ne.s32.totalorder %s25, %s39
      %p41 = scmp.eq.s32.totalorder %s20, 0
      %p42 = por %p40, %p41
      %s44 = sadd.s32 %s43, 1
      %p47 = scmp.eq.s32.totalorder %s14, 1
      %p48 = scmp.ne.s32.totalorder %s43, %s45
      %p49 = scmp.eq.s32.totalorder %s14, 0
      %p50 = por %p48, %p49
      %p51 = scmp.ne.s32.totalorder %s43, %s45
      %p52 = scmp.eq.s32.totalorder %s19, 1
      %p53 = por %p51, %p52
      %p54 = scmp.ne.s32.totalorder %s45, %s46
      %p55 = scmp.eq.s32.totalorder %s19, 0
      %p56 = por %p54, %p55
      %p57 = scmp.ne.s32.totalorder %s45, %s46
      %p58 = scmp.eq.s32.totalorder %s20, 1
      %p59 = por %p57, %p58
      %p61 = scmp.ne.s32.totalorder %s46, %s60
      %p62 = scmp.eq.s32.totalorder %s20, 0
      %p63 = por %p61, %p62
      %s64 = ssub.s32 %s14, %s21
      %p65 = scmp.eq.s32.totalorder %s64, 0
      %s67 = sadd.s32 %s66, 1
      %s68 = scalar_select %p65, %s66, %s67
      %p71 = pneg %p65
      %p72 = scmp.eq.s32.totalorder %s14, 1
      %p73 = por %p71, %p72
      %p74 = scmp.ne.s32.totalorder %s66, %s69
      %p75 = scmp.eq.s32.totalorder %s14, 0
      %p76 = por %p74, %p75
      %p77 = scmp.ne.s32.totalorder %s66, %s69
      %p78 = scmp.eq.s32.totalorder %s19, 1
      %p79 = por %p77, %p78
      %p80 = scmp.ne.s32.totalorder %s69, %s70
      %p81 = scmp.eq.s32.totalorder %s19, 0
      %p82 = por %p80, %p81
      %p83 = scmp.ne.s32.totalorder %s69, %s70
      %p84 = scmp.eq.s32.totalorder %s20, 1
      %p85 = por %p83, %p84
      %p87 = scmp.ne.s32.totalorder %s70, %s86
      %p88 = scmp.eq.s32.totalorder %s20, 0
      %p89 = por %p87, %p88
      %s90 = ssub.s32 %s14, %s21
      %p91 = scmp.eq.s32.totalorder %s90, 0
      %s93 = sadd.s32 %s92, 1
      %s94 = scalar_select %p91, %s92, %s93
      %p97 = pneg %p91
      %p98 = scmp.eq.s32.totalorder %s14, 1
      %p99 = por %p97, %p98
      %p100 = scmp.ne.s32.totalorder %s92, %s95
      %p101 = scmp.eq.s32.totalorder %s14, 0
      %p102 = por %p100, %p101
      %p103 = scmp.ne.s32.totalorder %s92, %s95
      %p104 = scmp.eq.s32.totalorder %s19, 1
      %p105 = por %p103, %p104
      %p106 = scmp.ne.s32.totalorder %s95, %s96
      %p107 = scmp.eq.s32.totalorder %s19, 0
      %p108 = por %p106, %p107
      %p109 = scmp.ne.s32.totalorder %s95, %s96
      %p110 = scmp.eq.s32.totalorder %s20, 1
      %p111 = por %p109, %p110
      %p113 = scmp.ne.s32.totalorder %s96, %s112
      %p114 = scmp.eq.s32.totalorder %s20, 0
      %p115 = por %p113, %p114
      %s117 = sadd.s32 %s116, 1
      %p120 = scmp.eq.s32.totalorder %s14, 1
      %p121 = scmp.ne.s32.totalorder %s116, %s118
      %p122 = scmp.eq.s32.totalorder %s14, 0
      %p123 = por %p121, %p122
      %p124 = scmp.ne.s32.totalorder %s116, %s118
      %p125 = scmp.eq.s32.totalorder %s19, 1
      %p126 = por %p124, %p125
      %p127 = scmp.ne.s32.totalorder %s118, %s119
      %p128 = scmp.eq.s32.totalorder %s19, 0
      %p129 = por %p127, %p128
      %p130 = scmp.ne.s32.totalorder %s118, %s119
      %p131 = scmp.eq.s32.totalorder %s20, 1
      %p132 = por %p130, %p131
      %p134 = scmp.ne.s32.totalorder %s119, %s133
      %p135 = scmp.eq.s32.totalorder %s20, 0
      %p136 = por %p134, %p135
      %s138 = sadd.s32 %s137, 1
      %p141 = scmp.eq.s32.totalorder %s14, 1
      %p142 = scmp.ne.s32.totalorder %s137, %s139
      %p143 = scmp.eq.s32.totalorder %s14, 0
      %p144 = por %p142, %p143
      %p145 = scmp.ne.s32.totalorder %s137, %s139
      %p146 = scmp.eq.s32.totalorder %s19, 1
      %p147 = por %p145, %p146
      %p148 = scmp.ne.s32.totalorder %s139, %s140
      %p149 = scmp.eq.s32.totalorder %s19, 0
      %p150 = por %p148, %p149
      %p151 = scmp.ne.s32.totalorder %s139, %s140
      %p152 = scmp.eq.s32.totalorder %s20, 1
      %p153 = por %p151, %p152
      %p155 = scmp.ne.s32.totalorder %s140, %s154
      %p156 = scmp.eq.s32.totalorder %s20, 0
      %p157 = por %p155, %p156
      %s158 = ssub.s32 %s14, %s21
      %p159 = scmp.eq.s32.totalorder %s158, 0
      %s161 = sadd.s32 %s160, 1
      %s162 = scalar_select %p159, %s160, %s161
      %p165 = pneg %p159
      %p166 = scmp.eq.s32.totalorder %s14, 1
      %p167 = por %p165, %p166
      %p168 = scmp.ne.s32.totalorder %s160, %s163
      %p169 = scmp.eq.s32.totalorder %s14, 0
      %p170 = por %p168, %p169
      %p171 = scmp.ne.s32.totalorder %s160, %s163
      %p172 = scmp.eq.s32.totalorder %s19, 1
      %p173 = por %p171, %p172
      %p174 = scmp.ne.s32.totalorder %s163, %s164
      %p175 = scmp.eq.s32.totalorder %s19, 0
      %p176 = por %p174, %p175
      %p177 = scmp.ne.s32.totalorder %s163, %s164
      %p178 = scmp.eq.s32.totalorder %s20, 1
      %p179 = por %p177, %p178
      %p181 = scmp.ne.s32.totalorder %s164, %s180
      %p182 = scmp.eq.s32.totalorder %s20, 0
      %p183 = por %p181, %p182
      %p184 = scmp.le.s32.totalorder 1, %s14
      %p185 = scmp.lt.s32.totalorder %s14, 3
      %p186 = pnand %p184, %p185
      %p187 = pneg %p186
      // Predicated region
      $region9: #{_lambda_.22} parent=5 // pred_check
        _
      $region10: #{_lambda_.22} parent=5 // pred_check_branch
        %189 = sbr.rel (%p186) target = $region12
      $region11: #{_lambda_.22} parent=5 // pred_region
        %s190 = ssub.s32 %s14, 1
        // Predicated region
        $region13: #{_lambda_.22} parent=11 // pred_check
          %p191 = pneg %p35
        $region14: #{_lambda_.22} parent=11 // pred_check_branch
          %193 = sbr.rel (%p191) target = $region16
        $region15: #{_lambda_.22} parent=11 // pred_region
          %s195 = ssub.s32 32, 32
          %196 = vsyncadd [#allocation3], %s195
          %s198 = sshll.u32 %s0, 4
          %s199 = int_to_ptr.vmem [resolvable:$true] %s198
          %201 = dma.vmem_to_smem %s199, 32, [#allocation2], [#allocation3]
        $region16: #{_lambda_.22} parent=11 // pred_fallthru
          _
        // Predicated region
        $region17: #{_lambda_.22} parent=11 // pred_check
          %p202 = pneg %p56
        $region18: #{_lambda_.22} parent=11 // pred_check_branch
          %204 = sbr.rel (%p202) target = $region20
        $region19: #{_lambda_.22} parent=11 // pred_region
          %s206 = ssub.s32 32, 32
          %207 = vsyncadd [#allocation5], %s206
          %s209 = sshll.u32 %s1, 4
          %s210 = int_to_ptr.vmem [resolvable:$true] %s209
          %212 = dma.vmem_to_smem %s210, 32, [#allocation4], [#allocation5]
        $region20: #{_lambda_.22} parent=11 // pred_fallthru
          _
        // Predicated region
        $region21: #{_lambda_.22} parent=11 // pred_check
          %p213 = pneg %p129
        $region22: #{_lambda_.22} parent=11 // pred_check_branch
          %215 = sbr.rel (%p213) target = $region24
        $region23: #{_lambda_.22} parent=11 // pred_region
          _
        $region24: #{_lambda_.22} parent=11 // pred_fallthru
          _
        // Predicated region
        $region25: #{_lambda_.22} parent=11 // pred_check
          %p216 = pneg %p150
        $region26: #{_lambda_.22} parent=11 // pred_check_branch
          %218 = sbr.rel (%p216) target = $region28
        $region27: #{_lambda_.22} parent=11 // pred_region
          _
        $region28: #{_lambda_.22} parent=11 // pred_fallthru
          _
      $region12: #{_lambda_.22} parent=5 // pred_fallthru
        _
      %p219 = scmp.lt.s32.totalorder %s14, 2
      // Predicated region
      $region29: #{_lambda_.22} parent=5 // pred_check
        %p220 = pneg %p219
      $region30: #{_lambda_.22} parent=5 // pred_check_branch
        %222 = sbr.rel (%p220) target = $region32
      $region31: #{_lambda_.22} parent=5 // pred_region
        // Predicated region
        $region33: #{_lambda_.22} parent=31 // pred_check
          %p223 = pneg %p76
        $region34: #{_lambda_.22} parent=31 // pred_check_branch
          %225 = sbr.rel (%p223) target = $region36
        $region35: #{_lambda_.22} parent=31 // pred_region
          %p226 = scmp.lt.s32.totalorder %s14, 1
          %s227 = scalar_select %p226, %s14, 1
          %s228 = smul.addr %s227, 2
          %s229 = smul.addr %s228, 8
          %s230 = scalar_lea.vmem %s2, %s229
        $region36: #{_lambda_.22} parent=31 // pred_fallthru
          _
        // Predicated region
        $region37: #{_lambda_.22} parent=31 // pred_check
          %p231 = pneg %p102
        $region38: #{_lambda_.22} parent=31 // pred_check_branch
          %233 = sbr.rel (%p231) target = $region40
        $region39: #{_lambda_.22} parent=31 // pred_region
          %p234 = scmp.lt.s32.totalorder %s14, 1
          %s235 = scalar_select %p234, %s14, 1
          %s236 = smul.addr %s235, 2
          %s237 = smul.addr %s236, 8
          %s238 = scalar_lea.vmem %s3, %s237
        $region40: #{_lambda_.22} parent=31 // pred_fallthru
          _
      $region32: #{_lambda_.22} parent=5 // pred_fallthru
        _
      %p239 = scmp.le.s32.totalorder 1, %s14
      %p240 = scmp.lt.s32.totalorder %s14, 3
      %p241 = pnand %p239, %p240
      %p242 = pneg %p241
      // Predicated region
      $region41: #{_lambda_.22} parent=5 // pred_check
        _
      $region42: #{_lambda_.22} parent=5 // pred_check_branch
        %244 = sbr.rel (%p241) target = $region44
      $region43: #{_lambda_.22} parent=5 // pred_region
        %s245 = ssub.s32 %s14, 1
        // Predicated region
        $region45: #{_lambda_.22} parent=43 // pred_check
          %p246 = pneg %p35
        $region46: #{_lambda_.22} parent=43 // pred_check_branch
          %248 = sbr.rel (%p246) target = $region48
        $region47: #{_lambda_.22} parent=43 // pred_region
          %249 = dma.done [#allocation3], 32
        $region48: #{_lambda_.22} parent=43 // pred_fallthru
          _
        // Predicated region
        $region49: #{_lambda_.22} parent=43 // pred_check
          %p250 = pneg %p56
        $region50: #{_lambda_.22} parent=43 // pred_check_branch
          %252 = sbr.rel (%p250) target = $region52
        $region51: #{_lambda_.22} parent=43 // pred_region
          %253 = dma.done [#allocation5], 32
        $region52: #{_lambda_.22} parent=43 // pred_fallthru
          _
        %254 = sfence
        %p255 = pneg %p35
        %p256 = pneg %p32
        %p257 = pneg %p56
        %p258 = pneg %p53
        %p259 = scmp.lt.s32.totalorder %s19, 1
        %s260 = scalar_select %p259, %s19, 1
        %s261 = smul.addr %s260, 2
        %s262 = smul.addr %s261, 8
        %s263 = scalar_lea.vmem %s2, %s262
        %p264 = pneg %p82
        %p265 = pneg %p79
        %p266 = scmp.lt.s32.totalorder %s19, 1
        %s267 = scalar_select %p266, %s19, 1
        %s268 = smul.addr %s267, 2
        %s269 = smul.addr %s268, 8
        %s270 = scalar_lea.vmem %s3, %s269
        %p271 = pneg %p108
        %p272 = pneg %p105
        %p273 = pneg %p129
        %p274 = pneg %p126
        %p275 = pneg %p150
        %p276 = pneg %p147
        %p277 = pneg %p176
        %p278 = pneg %p173
        %p279 = scmp.lt.s32.totalorder %s19, 1
        %s280 = scalar_select %p279, %s19, 1
        %s281 = smul.addr %s280, 2
        %s282 = smul.addr %s281, 8
        %s283 = scalar_lea.vmem %s6, %s282
        %p284 = scmp.lt.s32.totalorder %s19, 1
        %s285 = scalar_select %p284, %s19, 1
        %s286 = smul.addr %s285, 2
        %s287 = smul.addr %s286, 8
        %s288 = scalar_lea.vmem %s2, %s287
        %p289 = scmp.lt.s32.totalorder %s19, 1
        %s290 = scalar_select %p289, %s19, 1
        %s291 = smul.addr %s290, 2
        %s292 = smul.addr %s291, 8
        %s293 = scalar_lea.vmem %s3, %s292
        %p294 = scmp.lt.s32.totalorder %s19, 1
        %s295 = scalar_select %p294, %s19, 1
        %s296 = smul.addr %s295, 2
        %s297 = smul.addr %s296, 8
        %s298 = scalar_lea.vmem %s6, %s297
        %v300 = vld [vmem:[%s288] sm:$0xff]
        %v301 = vld [vmem:[%s288 + $0x8] sm:$0xff]
        %v302 = vld [vmem:[%s293] sm:$0xff]
        %v303 = vld [vmem:[%s293 + $0x8] sm:$0xff]
        %v304 = vlaneseq
        %v305 = vshrl.u32 %v304, 7
        %v306 = vadd.s32 %v305, 8
        %v307 = vlaneseq
        %v308 = vand.u32 %v307, 127
        %s309 = smul.u32 %s19, 128
        %s310 = sld [smem:[#allocation2 + %s309]]
        %s311 = sld [smem:[#allocation4 + %s309]]
        %v312 = vstv %s310
        %v313 = vadd.s32 %v305, %v312
        %v314 = vadd.s32 %v306, %v312
        %vm315 = vcmp.ge.s32.totalorder %v313, 16
        %vm316 = vcmp.ge.s32.totalorder %v314, 16
        %v317 = vsub.s32 %v313, 16
        %v318 = vsub.s32 %v314, 16
        %v319 = vsel %vm315, %v317, %v313
        %v320 = vsel %vm316, %v318, %v314
        %vm321 = vcmp.eq.s32.totalorder %v308, %v319
        %vm322 = vcmp.eq.s32.totalorder %v308, %v320
        %v323 = vstv %s311
        %v324 = vsel %vm321, %v323, 0.0
        %v325 = vsel %vm322, %v323, 0.0
        %v326 = vadd.f32 %v324, 0.0
        %v327 = vadd.f32 %v325, 0.0
        %s328 = sadd.s32 %s309, 1
        %s329 = sld [smem:[#allocation2 + %s328]]
        %s330 = sld [smem:[#allocation4 + %s328]]
        %v331 = vstv %s329
        %v332 = vadd.s32 %v305, %v331
        %v333 = vadd.s32 %v306, %v331
        %vm334 = vcmp.ge.s32.totalorder %v332, 16
        %vm335 = vcmp.ge.s32.totalorder %v333, 16
        %v336 = vsub.s32 %v332, 16
        %v337 = vsub.s32 %v333, 16
        %v338 = vsel %vm334, %v336, %v332
        %v339 = vsel %vm335, %v337, %v333
        %vm340 = vcmp.eq.s32.totalorder %v308, %v338
        %vm341 = vcmp.eq.s32.totalorder %v308, %v339
        %v342 = vstv %s330
        %v343 = vsel %vm340, %v342, 0.0
        %v344 = vsel %vm341, %v342, 0.0
        %v345 = vadd.f32 %v326, %v343
        %v346 = vadd.f32 %v327, %v344
        %v347 = vpack.c.bf16 %v346, %v345
        %v348 = vpack.c.bf16 %v301, %v300
        %vm349 = vcmask 130048
        %v351 = vsel %vm349, %v347, 0
        %353 = vmatprep.subr.bf16.mxu0 0
        %354 = vmatpush1.bf16.msra.mxu0 %v348
        %355 = vmatprep.subr.bf16.mxu0 0
        %356 = vmatpush1.bf16.msra.mxu0 0
        %357 = vmatprep.subr.bf16.mxu0 0
        %358 = vmatpush1.bf16.msra.mxu0 0
        %359 = vmatprep.subr.bf16.mxu0 0
        %360 = vmatpush1.bf16.msra.mxu0 0
        %361 = vmatprep.subr.bf16.mxu0 0
        %362 = vmatpush1.bf16.msra.mxu0 0
        %363 = vmatprep.subr.bf16.mxu0 0
        %364 = vmatpush1.bf16.msra.mxu0 0
        %365 = vmatprep.subr.bf16.mxu0 0
        %366 = vmatpush1.bf16.msra.mxu0 0
        %367 = vmatprep.subr.bf16.mxu0 0
        %368 = vmatpush1.bf16.msra.mxu0 0
        %369 = vmatprep.subr.bf16.mxu0 0
        %370 = vmatpush1.bf16.msra.mxu0 0
        %371 = vmatprep.subr.bf16.mxu0 0
        %372 = vmatpush1.bf16.msra.mxu0 0
        %373 = vmatprep.subr.bf16.mxu0 0
        %374 = vmatpush1.bf16.msra.mxu0 0
        %375 = vmatprep.subr.bf16.mxu0 0
        %376 = vmatpush1.bf16.msra.mxu0 0
        %377 = vmatprep.subr.bf16.mxu0 0
        %378 = vmatpush1.bf16.msra.mxu0 0
        %379 = vmatprep.subr.bf16.mxu0 0
        %380 = vmatpush1.bf16.msra.mxu0 0
        %381 = vmatprep.subr.bf16.mxu0 0
        %382 = vmatpush1.bf16.msra.mxu0 0
        %383 = vmatprep.subr.bf16.mxu0 0
        %384 = vmatpush1.bf16.msra.mxu0 0
        %385 = vmatprep.mubr.bf16.mxu0 0
        %386 = vmatmul.mubr.bf16.gmra.mrb[0].mxu0 %v351
        %v387 = vpop.f32.mrb[0].mxu0
        %v388 = vadd.f32 0.0, %v387
        %v389 = vpop.f32.mrb[0].mxu0
        %v390 = vpop.f32.mrb[0].mxu0
        %v391 = vadd.f32 0.0, %v390
        %v392 = vpop.f32.mrb[0].mxu0
        %393 = vdwg.mxu0
        %v394 = vpack.c.bf16 %v391, %v388
        %v395 = vld [vmem:[%s4] sm:$0xf]
        %v396 = vld [vmem:[%s4 + $0x4] sm:$0xf]
        %v397 = vld [vmem:[%s4 + $0x8] sm:$0xf]
        %v398 = vld [vmem:[%s4 + $0xc] sm:$0xf]
        %v399 = vld [vmem:[%s5] sm:$0x1]
        %v401 = vlaneseq
        %v402 = vshrl.u32 %v401, 7
        %v403 = vsub.s32 0, %v402
        %v404 = vrot.slane %v399, %v403
        %v410 = vunpack.c.l.b16 %v395
        %v411 = vunpack.c.l.b16 %v396
        %v412 = vunpack.c.l.b16 %v397
        %v413 = vunpack.c.l.b16 %v398
        %v414 = vpack.c.b16 %v411, %v410
        %v415 = vpack.c.b16 %v413, %v412
        %vm418 = vcmask 261120
        %v420 = vsel %vm418, %v394, 0
        %422 = vmatprep.subr.bf16.mxu0 0
        %423 = vmatpush1.bf16.msra.mxu0 %v414
        %424 = vmatprep.subr.bf16.mxu0 0
        %425 = vmatpush1.bf16.msra.mxu0 %v415
        %426 = vmatprep.subr.bf16.mxu0 0
        %427 = vmatpush1.bf16.msra.mxu0 0
        %428 = vmatprep.subr.bf16.mxu0 0
        %429 = vmatpush1.bf16.msra.mxu0 0
        %430 = vmatprep.subr.bf16.mxu0 0
        %431 = vmatpush1.bf16.msra.mxu0 0
        %432 = vmatprep.subr.bf16.mxu0 0
        %433 = vmatpush1.bf16.msra.mxu0 0
        %434 = vmatprep.subr.bf16.mxu0 0
        %435 = vmatpush1.bf16.msra.mxu0 0
        %436 = vmatprep.subr.bf16.mxu0 0
        %437 = vmatpush1.bf16.msra.mxu0 0
        %438 = vmatprep.subr.bf16.mxu0 0
        %439 = vmatpush1.bf16.msra.mxu0 0
        %440 = vmatprep.subr.bf16.mxu0 0
        %441 = vmatpush1.bf16.msra.mxu0 0
        %442 = vmatprep.subr.bf16.mxu0 0
        %443 = vmatpush1.bf16.msra.mxu0 0
        %444 = vmatprep.subr.bf16.mxu0 0
        %445 = vmatpush1.bf16.msra.mxu0 0
        %446 = vmatprep.subr.bf16.mxu0 0
        %447 = vmatpush1.bf16.msra.mxu0 0
        %448 = vmatprep.subr.bf16.mxu0 0
        %449 = vmatpush1.bf16.msra.mxu0 0
        %450 = vmatprep.subr.bf16.mxu0 0
        %451 = vmatpush1.bf16.msra.mxu0 0
        %452 = vmatprep.subr.bf16.mxu0 0
        %453 = vmatpush1.bf16.msra.mxu0 0
        %454 = vmatprep.mubr.bf16.mxu0 0
        %455 = vmatmul.mubr.bf16.gmra.mrb[0].mxu0 %v420
        %v456 = vpop.f32.mrb[0].mxu0
        %v457 = vadd.f32 %v404, %v456
        %v458 = vpop.f32.mrb[0].mxu0
        %v459 = vpop.f32.mrb[0].mxu0
        %v460 = vadd.f32 %v404, %v459
        %v461 = vpop.f32.mrb[0].mxu0
        %462 = vdwg.mxu0
        %v463 = vadd.f32 %v302, %v457
        %v464 = vadd.f32 %v303, %v460
        %v465 = vlaneseq
        %v466 = vshrl.u32 %v465, 7
        %v467 = vsub.s32 0, %v466
        %v468 = vrot.slane %v463, %v467
        %v469 = vlaneseq
        %v470 = vshrl.u32 %v469, 7
        %v471 = vsub.s32 7, %v470
        %v472 = vrot.slane %v464, %v471
        %vm475 = vcmask 1041408
        %v476 = vrot.slane %v463, 6
        %v477 = vrot.slane %v464, 6
        %v478 = vsel %vm475, %v476, %v477
        %v482 = vsel %vm475, %v468, %v476
        %v483 = vsel %vm475, %v477, %v472
        %vm486 = vcmask 1046528
        %v487 = vrot.slane %v482, 1
        %v488 = vrot.slane %v478, 1
        %v489 = vsel %vm486, %v487, %v488
        %v490 = vrot.slane %v483, 1
        %v491 = vsel %vm486, %v488, %v490
        %v494 = vadd.f32 %v482, %v489
        %v495 = vadd.f32 %v478, %v491
        %vm496 = vcmask 1045504
        %v497 = vrot.slane %v482, 2
        %v498 = vrot.slane %v478, 2
        %v499 = vsel %vm496, %v497, %v498
        %v500 = vrot.slane %v483, 2
        %v501 = vsel %vm496, %v498, %v500
        %v504 = vadd.f32 %v494, %v499
        %v505 = vadd.f32 %v495, %v501
        %vm506 = vcmask 1044480
        %v507 = vrot.slane %v482, 3
        %v508 = vrot.slane %v478, 3
        %v509 = vsel %vm506, %v507, %v508
        %v510 = vrot.slane %v483, 3
        %v511 = vsel %vm506, %v508, %v510
        %v514 = vadd.f32 %v504, %v509
        %v515 = vadd.f32 %v505, %v511
        %vm516 = vcmask 1043456
        %v517 = vrot.slane %v482, 4
        %v518 = vrot.slane %v478, 4
        %v519 = vsel %vm516, %v517, %v518
        %v520 = vrot.slane %v483, 4
        %v521 = vsel %vm516, %v518, %v520
        %v524 = vadd.f32 %v514, %v519
        %v525 = vadd.f32 %v515, %v521
        %v526 = vmul.f32 %v524, 0.2
        %v527 = vmul.f32 %v525, 0.2
        %v528 = vsub.f32 %v463, %v526
        %v529 = vsub.f32 %v464, %v527
        %530 = vst.msk [vmem:[%s298] sm:$0xff] %vm418, %v528
        %531 = vst.msk [vmem:[%s298 + $0x8] sm:$0xff] %vm418, %v529
        %p532 = scmp.lt.s32.totalorder %s19, 1
        %s533 = scalar_select %p532, %s19, 1
        %s534 = smul.addr %s533, 2
        %s535 = smul.addr %s534, 8
        %s536 = scalar_lea.vmem %s6, %s535
        // Predicated region
        $region53: #{_lambda_.22} parent=43 // pred_check
          %p537 = pneg %p173
        $region54: #{_lambda_.22} parent=43 // pred_check_branch
          %539 = sbr.rel (%p537) target = $region56
        $region55: #{_lambda_.22} parent=43 // pred_region
          _
        $region56: #{_lambda_.22} parent=43 // pred_fallthru
          _
      $region44: #{_lambda_.22} parent=5 // pred_fallthru
        _
      %p540 = scmp.le.s32.totalorder 2, %s14
      // Predicated region
      $region57: #{_lambda_.22} parent=5 // pred_check
        %p541 = pneg %p540
      $region58: #{_lambda_.22} parent=5 // pred_check_branch
        %543 = sbr.rel (%p541) target = $region60
      $region59: #{_lambda_.22} parent=5 // pred_region
        %s544 = ssub.s32 %s14, 2
        // Predicated region
        $region61: #{_lambda_.22} parent=59 // pred_check
          %p545 = pneg %p179
        $region62: #{_lambda_.22} parent=59 // pred_check_branch
          %547 = sbr.rel (%p545) target = $region64
        $region63: #{_lambda_.22} parent=59 // pred_region
          %p548 = scmp.lt.s32.totalorder %s20, 1
          %s549 = scalar_select %p548, %s20, 1
          %s550 = smul.addr %s549, 2
          %s551 = smul.addr %s550, 8
          %s552 = scalar_lea.vmem %s6, %s551
        $region64: #{_lambda_.22} parent=59 // pred_fallthru
          _
      $region60: #{_lambda_.22} parent=5 // pred_fallthru
        _
    $region6: #{_lambda_.22} parent=1 // loop_footer
      %s18 = sadd.s32 1, %s14
    $region7: #{_lambda_.22} parent=1 // loop_footer_branch
      %13 = sbr.rel target = $region3
    $region8: #{_lambda_.22} parent=1 // loop_exit
      _
    %553 = vsyncpa [#allocation3], 1
    %s554 = scalar_lea.sflag [#allocation3], 1
    %555 = vsyncpa %s554, 1
    %556 = vsyncpa [#allocation5], 1

// kernel: _lambda_.28
$region0: #{_lambda_.28}
  #allocation0 [shape = 'u32[]', space=smem, size = 0x4, offset = 0x4, fixed_abs, tag = 'smem constant byte address 0x4 - core index']
  #allocation1 [shape = 'u32[144,128]{1,0:T(1,128)}', space=vmem, size = 0x12000, scoped, tag = 'internal scratch']
  %s0 = inlined_call_operand.vmem [shape: s32[2,2], index: 0, kind: input, shape index: {}]
  %s1 = inlined_call_operand.vmem [shape: f32[2,2], index: 1, kind: input, shape index: {}]
  %s2 = inlined_call_operand.vmem [shape: f32[2,16,32], index: 2, kind: input, shape index: {}]
  %s3 = inlined_call_operand.vmem [shape: f32[2,16,32], index: 3, kind: input, shape index: {}]
  %s4 = inlined_call_operand.vmem [shape: bf16[32,32], index: 4, kind: input, shape index: {}]
  %s5 = inlined_call_operand.vmem [shape: f32[1,32], index: 5, kind: input, shape index: {}]
  %s6 = inlined_call_operand.vmem [shape: f32[2,16,32], index: 6, kind: output, shape index: {0}]
  %s7 = inlined_call_operand.vmem [shape: f32[2,16,32], index: 7, kind: output, shape index: {1}]
  %8 = xla_tuple %s6, %s7
  %s9 = sld [smem:[#allocation0]]
  $region73: #{_lambda_.28} parent=0
    _
  %s11 = ssub.s32 1, %s9
  %s12 = scalar_select 0, %s11, %s9
  $region1: #{_lambda_.28} parent=0
    #allocation2 [shape = 'u8[1024]{0}', space=smem, size = 0x400, scoped, tag = 'input window, operand 0, single buffered']
    #allocation3 [shape = 's32[2]{0}', space=sflag, size = 0x8, scoped, tag = 'scoped memory for _lambda_.28']
    #allocation4 [shape = 'u8[1024]{0}', space=smem, size = 0x400, scoped, tag = 'input window, operand 1, single buffered']
    #allocation5 [shape = 's32[1]{0}', space=sflag, size = 0x4, scoped, tag = 'scoped memory for _lambda_.28']
    %13 = vsyncpa [#allocation3], 0
    %14 = vsyncpa [#allocation5], 0
    loop: start=0, step=1, limit=4
    $region2: #{_lambda_.28} parent=1 // loop_pre_header
      _
    $region3: #{_lambda_.28} parent=1 // loop_header
      %s16 = sphi 0, %s20
      %p17 = scmp.ge.s32.totalorder %s16, 4
      %s24 = sphi 0, %s24
      %s26 = sphi 0, %s24
      %s27 = sphi 0, %s26
      %s41 = sphi 0, %s27
      %s45 = sphi 0, %s45
      %s47 = sphi 0, %s45
      %s48 = sphi 0, %s47
      %s62 = sphi 0, %s48
      %s68 = sphi 0, %s70
      %s71 = sphi 0, %s68
      %s72 = sphi 0, %s71
      %s88 = sphi 0, %s72
      %s94 = sphi 0, %s96
      %s97 = sphi 0, %s94
      %s98 = sphi 0, %s97
      %s114 = sphi 0, %s98
      %s118 = sphi 0, %s118
      %s120 = sphi 0, %s118
      %s121 = sphi 0, %s120
      %s135 = sphi 0, %s121
      %s139 = sphi 0, %s139
      %s141 = sphi 0, %s139
      %s142 = sphi 0, %s141
      %s156 = sphi 0, %s142
      %s162 = sphi 0, %s164
      %s165 = sphi 0, %s162
      %s166 = sphi 0, %s165
      %s182 = sphi 0, %s166
      %s188 = sphi 0, %s190
      %s191 = sphi 0, %s188
      %s192 = sphi 0, %s191
      %s208 = sphi 0, %s192
    $region4: #{_lambda_.28} parent=1 // loop_header_branch
      %19 = sbr.rel (%p17) target = $region8
    $region5: #{_lambda_.28} parent=1 // loop_body
      %s21 = ssub.s32 %s16, 1
      %s22 = ssub.s32 %s16, 2
      %s23 = sadd.s32 %s16, 1
      %s25 = sadd.s32 %s24, 1
      %p28 = scmp.eq.s32.totalorder %s16, 1
      %p29 = scmp.ne.s32.totalorder %s24, %s26
      %p30 = scmp.eq.s32.totalorder %s16, 0
      %p31 = por %p29, %p30
      %p32 = scmp.ne.s32.totalorder %s24, %s26
      %p33 = scmp.eq.s32.totalorder %s21, 1
      %p34 = por %p32, %p33
      %p35 = scmp.ne.s32.totalorder %s26, %s27
      %p36 = scmp.eq.s32.totalorder %s21, 0
      %p37 = por %p35, %p36
      %p38 = scmp.ne.s32.totalorder %s26, %s27
      %p39 = scmp.eq.s32.totalorder %s22, 1
      %p40 = por %p38, %p39
      %p42 = scmp.ne.s32.totalorder %s27, %s41
      %p43 = scmp.eq.s32.totalorder %s22, 0
      %p44 = por %p42, %p43
      %s46 = sadd.s32 %s45, 1
      %p49 = scmp.eq.s32.totalorder %s16, 1
      %p50 = scmp.ne.s32.totalorder %s45, %s47
      %p51 = scmp.eq.s32.totalorder %s16, 0
      %p52 = por %p50, %p51
      %p53 = scmp.ne.s32.totalorder %s45, %s47
      %p54 = scmp.eq.s32.totalorder %s21, 1
      %p55 = por %p53, %p54
      %p56 = scmp.ne.s32.totalorder %s47, %s48
      %p57 = scmp.eq.s32.totalorder %s21, 0
      %p58 = por %p56, %p57
      %p59 = scmp.ne.s32.totalorder %s47, %s48
      %p60 = scmp.eq.s32.totalorder %s22, 1
      %p61 = por %p59, %p60
      %p63 = scmp.ne.s32.totalorder %s48, %s62
      %p64 = scmp.eq.s32.totalorder %s22, 0
      %p65 = por %p63, %p64
      %s66 = ssub.s32 %s16, %s23
      %p67 = scmp.eq.s32.totalorder %s66, 0
      %s69 = sadd.s32 %s68, 1
      %s70 = scalar_select %p67, %s68, %s69
      %p73 = pneg %p67
      %p74 = scmp.eq.s32.totalorder %s16, 1
      %p75 = por %p73, %p74
      %p76 = scmp.ne.s32.totalorder %s68, %s71
      %p77 = scmp.eq.s32.totalorder %s16, 0
      %p78 = por %p76, %p77
      %p79 = scmp.ne.s32.totalorder %s68, %s71
      %p80 = scmp.eq.s32.totalorder %s21, 1
      %p81 = por %p79, %p80
      %p82 = scmp.ne.s32.totalorder %s71, %s72
      %p83 = scmp.eq.s32.totalorder %s21, 0
      %p84 = por %p82, %p83
      %p85 = scmp.ne.s32.totalorder %s71, %s72
      %p86 = scmp.eq.s32.totalorder %s22, 1
      %p87 = por %p85, %p86
      %p89 = scmp.ne.s32.totalorder %s72, %s88
      %p90 = scmp.eq.s32.totalorder %s22, 0
      %p91 = por %p89, %p90
      %s92 = ssub.s32 %s16, %s23
      %p93 = scmp.eq.s32.totalorder %s92, 0
      %s95 = sadd.s32 %s94, 1
      %s96 = scalar_select %p93, %s94, %s95
      %p99 = pneg %p93
      %p100 = scmp.eq.s32.totalorder %s16, 1
      %p101 = por %p99, %p100
      %p102 = scmp.ne.s32.totalorder %s94, %s97
      %p103 = scmp.eq.s32.totalorder %s16, 0
      %p104 = por %p102, %p103
      %p105 = scmp.ne.s32.totalorder %s94, %s97
      %p106 = scmp.eq.s32.totalorder %s21, 1
      %p107 = por %p105, %p106
      %p108 = scmp.ne.s32.totalorder %s97, %s98
      %p109 = scmp.eq.s32.totalorder %s21, 0
      %p110 = por %p108, %p109
      %p111 = scmp.ne.s32.totalorder %s97, %s98
      %p112 = scmp.eq.s32.totalorder %s22, 1
      %p113 = por %p111, %p112
      %p115 = scmp.ne.s32.totalorder %s98, %s114
      %p116 = scmp.eq.s32.totalorder %s22, 0
      %p117 = por %p115, %p116
      %s119 = sadd.s32 %s118, 1
      %p122 = scmp.eq.s32.totalorder %s16, 1
      %p123 = scmp.ne.s32.totalorder %s118, %s120
      %p124 = scmp.eq.s32.totalorder %s16, 0
      %p125 = por %p123, %p124
      %p126 = scmp.ne.s32.totalorder %s118, %s120
      %p127 = scmp.eq.s32.totalorder %s21, 1
      %p128 = por %p126, %p127
      %p129 = scmp.ne.s32.totalorder %s120, %s121
      %p130 = scmp.eq.s32.totalorder %s21, 0
      %p131 = por %p129, %p130
      %p132 = scmp.ne.s32.totalorder %s120, %s121
      %p133 = scmp.eq.s32.totalorder %s22, 1
      %p134 = por %p132, %p133
      %p136 = scmp.ne.s32.totalorder %s121, %s135
      %p137 = scmp.eq.s32.totalorder %s22, 0
      %p138 = por %p136, %p137
      %s140 = sadd.s32 %s139, 1
      %p143 = scmp.eq.s32.totalorder %s16, 1
      %p144 = scmp.ne.s32.totalorder %s139, %s141
      %p145 = scmp.eq.s32.totalorder %s16, 0
      %p146 = por %p144, %p145
      %p147 = scmp.ne.s32.totalorder %s139, %s141
      %p148 = scmp.eq.s32.totalorder %s21, 1
      %p149 = por %p147, %p148
      %p150 = scmp.ne.s32.totalorder %s141, %s142
      %p151 = scmp.eq.s32.totalorder %s21, 0
      %p152 = por %p150, %p151
      %p153 = scmp.ne.s32.totalorder %s141, %s142
      %p154 = scmp.eq.s32.totalorder %s22, 1
      %p155 = por %p153, %p154
      %p157 = scmp.ne.s32.totalorder %s142, %s156
      %p158 = scmp.eq.s32.totalorder %s22, 0
      %p159 = por %p157, %p158
      %s160 = ssub.s32 %s16, %s23
      %p161 = scmp.eq.s32.totalorder %s160, 0
      %s163 = sadd.s32 %s162, 1
      %s164 = scalar_select %p161, %s162, %s163
      %p167 = pneg %p161
      %p168 = scmp.eq.s32.totalorder %s16, 1
      %p169 = por %p167, %p168
      %p170 = scmp.ne.s32.totalorder %s162, %s165
      %p171 = scmp.eq.s32.totalorder %s16, 0
      %p172 = por %p170, %p171
      %p173 = scmp.ne.s32.totalorder %s162, %s165
      %p174 = scmp.eq.s32.totalorder %s21, 1
      %p175 = por %p173, %p174
      %p176 = scmp.ne.s32.totalorder %s165, %s166
      %p177 = scmp.eq.s32.totalorder %s21, 0
      %p178 = por %p176, %p177
      %p179 = scmp.ne.s32.totalorder %s165, %s166
      %p180 = scmp.eq.s32.totalorder %s22, 1
      %p181 = por %p179, %p180
      %p183 = scmp.ne.s32.totalorder %s166, %s182
      %p184 = scmp.eq.s32.totalorder %s22, 0
      %p185 = por %p183, %p184
      %s186 = ssub.s32 %s16, %s23
      %p187 = scmp.eq.s32.totalorder %s186, 0
      %s189 = sadd.s32 %s188, 1
      %s190 = scalar_select %p187, %s188, %s189
      %p193 = pneg %p187
      %p194 = scmp.eq.s32.totalorder %s16, 1
      %p195 = por %p193, %p194
      %p196 = scmp.ne.s32.totalorder %s188, %s191
      %p197 = scmp.eq.s32.totalorder %s16, 0
      %p198 = por %p196, %p197
      %p199 = scmp.ne.s32.totalorder %s188, %s191
      %p200 = scmp.eq.s32.totalorder %s21, 1
      %p201 = por %p199, %p200
      %p202 = scmp.ne.s32.totalorder %s191, %s192
      %p203 = scmp.eq.s32.totalorder %s21, 0
      %p204 = por %p202, %p203
      %p205 = scmp.ne.s32.totalorder %s191, %s192
      %p206 = scmp.eq.s32.totalorder %s22, 1
      %p207 = por %p205, %p206
      %p209 = scmp.ne.s32.totalorder %s192, %s208
      %p210 = scmp.eq.s32.totalorder %s22, 0
      %p211 = por %p209, %p210
      %p212 = scmp.le.s32.totalorder 1, %s16
      %p213 = scmp.lt.s32.totalorder %s16, 3
      %p214 = pnand %p212, %p213
      %p215 = pneg %p214
      // Predicated region
      $region9: #{_lambda_.28} parent=5 // pred_check
        _
      $region10: #{_lambda_.28} parent=5 // pred_check_branch
        %217 = sbr.rel (%p214) target = $region12
      $region11: #{_lambda_.28} parent=5 // pred_region
        %s218 = ssub.s32 %s16, 1
        // Predicated region
        $region13: #{_lambda_.28} parent=11 // pred_check
          %p219 = pneg %p37
        $region14: #{_lambda_.28} parent=11 // pred_check_branch
          %221 = sbr.rel (%p219) target = $region16
        $region15: #{_lambda_.28} parent=11 // pred_region
          %s223 = ssub.s32 32, 32
          %224 = vsyncadd [#allocation3], %s223
          %s226 = sshll.u32 %s0, 4
          %s227 = int_to_ptr.vmem [resolvable:$true] %s226
          %229 = dma.vmem_to_smem %s227, 32, [#allocation2], [#allocation3]
        $region16: #{_lambda_.28} parent=11 // pred_fallthru
          _
        // Predicated region
        $region17: #{_lambda_.28} parent=11 // pred_check
          %p230 = pneg %p58
        $region18: #{_lambda_.28} parent=11 // pred_check_branch
          %232 = sbr.rel (%p230) target = $region20
        $region19: #{_lambda_.28} parent=11 // pred_region
          %s234 = ssub.s32 32, 32
          %235 = vsyncadd [#allocation5], %s234
          %s237 = sshll.u32 %s1, 4
          %s238 = int_to_ptr.vmem [resolvable:$true] %s237
          %240 = dma.vmem_to_smem %s238, 32, [#allocation4], [#allocation5]
        $region20: #{_lambda_.28} parent=11 // pred_fallthru
          _
        // Predicated region
        $region21: #{_lambda_.28} parent=11 // pred_check
          %p241 = pneg %p131
        $region22: #{_lambda_.28} parent=11 // pred_check_branch
          %243 = sbr.rel (%p241) target = $region24
        $region23: #{_lambda_.28} parent=11 // pred_region
          _
        $region24: #{_lambda_.28} parent=11 // pred_fallthru
          _
        // Predicated region
        $region25: #{_lambda_.28} parent=11 // pred_check
          %p244 = pneg %p152
        $region26: #{_lambda_.28} parent=11 // pred_check_branch
          %246 = sbr.rel (%p244) target = $region28
        $region27: #{_lambda_.28} parent=11 // pred_region
          _
        $region28: #{_lambda_.28} parent=11 // pred_fallthru
          _
      $region12: #{_lambda_.28} parent=5 // pred_fallthru
        _
      %p247 = scmp.lt.s32.totalorder %s16, 2
      // Predicated region
      $region29: #{_lambda_.28} parent=5 // pred_check
        %p248 = pneg %p247
      $region30: #{_lambda_.28} parent=5 // pred_check_branch
        %250 = sbr.rel (%p248) target = $region32
      $region31: #{_lambda_.28} parent=5 // pred_region
        // Predicated region
        $region33: #{_lambda_.28} parent=31 // pred_check
          %p251 = pneg %p78
        $region34: #{_lambda_.28} parent=31 // pred_check_branch
          %253 = sbr.rel (%p251) target = $region36
        $region35: #{_lambda_.28} parent=31 // pred_region
          %p254 = scmp.lt.s32.totalorder %s16, 1
          %s255 = scalar_select %p254, %s16, 1
          %s256 = smul.addr %s255, 2
          %s257 = smul.addr %s256, 8
          %s258 = scalar_lea.vmem %s2, %s257
        $region36: #{_lambda_.28} parent=31 // pred_fallthru
          _
        // Predicated region
        $region37: #{_lambda_.28} parent=31 // pred_check
          %p259 = pneg %p104
        $region38: #{_lambda_.28} parent=31 // pred_check_branch
          %261 = sbr.rel (%p259) target = $region40
        $region39: #{_lambda_.28} parent=31 // pred_region
          %p262 = scmp.lt.s32.totalorder %s16, 1
          %s263 = scalar_select %p262, %s16, 1
          %s264 = smul.addr %s263, 2
          %s265 = smul.addr %s264, 8
          %s266 = scalar_lea.vmem %s3, %s265
        $region40: #{_lambda_.28} parent=31 // pred_fallthru
          _
      $region32: #{_lambda_.28} parent=5 // pred_fallthru
        _
      %p267 = scmp.le.s32.totalorder 1, %s16
      %p268 = scmp.lt.s32.totalorder %s16, 3
      %p269 = pnand %p267, %p268
      %p270 = pneg %p269
      // Predicated region
      $region41: #{_lambda_.28} parent=5 // pred_check
        _
      $region42: #{_lambda_.28} parent=5 // pred_check_branch
        %272 = sbr.rel (%p269) target = $region44
      $region43: #{_lambda_.28} parent=5 // pred_region
        %s273 = ssub.s32 %s16, 1
        // Predicated region
        $region45: #{_lambda_.28} parent=43 // pred_check
          %p274 = pneg %p37
        $region46: #{_lambda_.28} parent=43 // pred_check_branch
          %276 = sbr.rel (%p274) target = $region48
        $region47: #{_lambda_.28} parent=43 // pred_region
          %277 = dma.done [#allocation3], 32
        $region48: #{_lambda_.28} parent=43 // pred_fallthru
          _
        // Predicated region
        $region49: #{_lambda_.28} parent=43 // pred_check
          %p278 = pneg %p58
        $region50: #{_lambda_.28} parent=43 // pred_check_branch
          %280 = sbr.rel (%p278) target = $region52
        $region51: #{_lambda_.28} parent=43 // pred_region
          %281 = dma.done [#allocation5], 32
        $region52: #{_lambda_.28} parent=43 // pred_fallthru
          _
        %282 = sfence
        %p283 = pneg %p37
        %p284 = pneg %p34
        %p285 = pneg %p58
        %p286 = pneg %p55
        %p287 = scmp.lt.s32.totalorder %s21, 1
        %s288 = scalar_select %p287, %s21, 1
        %s289 = smul.addr %s288, 2
        %s290 = smul.addr %s289, 8
        %s291 = scalar_lea.vmem %s2, %s290
        %p292 = pneg %p84
        %p293 = pneg %p81
        %p294 = scmp.lt.s32.totalorder %s21, 1
        %s295 = scalar_select %p294, %s21, 1
        %s296 = smul.addr %s295, 2
        %s297 = smul.addr %s296, 8
        %s298 = scalar_lea.vmem %s3, %s297
        %p299 = pneg %p110
        %p300 = pneg %p107
        %p301 = pneg %p131
        %p302 = pneg %p128
        %p303 = pneg %p152
        %p304 = pneg %p149
        %p305 = pneg %p178
        %p306 = pneg %p175
        %p307 = scmp.lt.s32.totalorder %s21, 1
        %s308 = scalar_select %p307, %s21, 1
        %s309 = smul.addr %s308, 2
        %s310 = smul.addr %s309, 8
        %s311 = scalar_lea.vmem %s6, %s310
        %p312 = pneg %p204
        %p313 = pneg %p201
        %p314 = scmp.lt.s32.totalorder %s21, 1
        %s315 = scalar_select %p314, %s21, 1
        %s316 = smul.addr %s315, 2
        %s317 = smul.addr %s316, 8
        %s318 = scalar_lea.vmem %s7, %s317
        %p319 = scmp.lt.s32.totalorder %s21, 1
        %s320 = scalar_select %p319, %s21, 1
        %s321 = smul.addr %s320, 2
        %s322 = smul.addr %s321, 8
        %s323 = scalar_lea.vmem %s2, %s322
        %p324 = scmp.lt.s32.totalorder %s21, 1
        %s325 = scalar_select %p324, %s21, 1
        %s326 = smul.addr %s325, 2
        %s327 = smul.addr %s326, 8
        %s328 = scalar_lea.vmem %s3, %s327
        %p329 = scmp.lt.s32.totalorder %s21, 1
        %s330 = scalar_select %p329, %s21, 1
        %s331 = smul.addr %s330, 2
        %s332 = smul.addr %s331, 8
        %s333 = scalar_lea.vmem %s6, %s332
        %p334 = scmp.lt.s32.totalorder %s21, 1
        %s335 = scalar_select %p334, %s21, 1
        %s336 = smul.addr %s335, 2
        %s337 = smul.addr %s336, 8
        %s338 = scalar_lea.vmem %s7, %s337
        %v340 = vld [vmem:[%s323] sm:$0xff]
        %v341 = vld [vmem:[%s323 + $0x8] sm:$0xff]
        %v342 = vld [vmem:[%s328] sm:$0xff]
        %v343 = vld [vmem:[%s328 + $0x8] sm:$0xff]
        %v344 = vlaneseq
        %v345 = vshrl.u32 %v344, 7
        %v346 = vadd.s32 %v345, 8
        %v347 = vlaneseq
        %v348 = vand.u32 %v347, 127
        %s349 = smul.u32 %s21, 128
        %s350 = sld [smem:[#allocation2 + %s349]]
        %s351 = sld [smem:[#allocation4 + %s349]]
        %v352 = vstv %s350
        %v353 = vadd.s32 %v345, %v352
        %v354 = vadd.s32 %v346, %v352
        %vm355 = vcmp.ge.s32.totalorder %v353, 16
        %vm356 = vcmp.ge.s32.totalorder %v354, 16
        %v357 = vsub.s32 %v353, 16
        %v358 = vsub.s32 %v354, 16
        %v359 = vsel %vm355, %v357, %v353
        %v360 = vsel %vm356, %v358, %v354
        %vm361 = vcmp.eq.s32.totalorder %v348, %v359
        %vm362 = vcmp.eq.s32.totalorder %v348, %v360
        %v363 = vstv %s351
        %v364 = vsel %vm361, %v363, 0.0
        %v365 = vsel %vm362, %v363, 0.0
        %v366 = vadd.f32 %v364, 0.0
        %v367 = vadd.f32 %v365, 0.0
        %s368 = sadd.s32 %s349, 1
        %s369 = sld [smem:[#allocation2 + %s368]]
        %s370 = sld [smem:[#allocation4 + %s368]]
        %v371 = vstv %s369
        %v372 = vadd.s32 %v345, %v371
        %v373 = vadd.s32 %v346, %v371
        %vm374 = vcmp.ge.s32.totalorder %v372, 16
        %vm375 = vcmp.ge.s32.totalorder %v373, 16
        %v376 = vsub.s32 %v372, 16
        %v377 = vsub.s32 %v373, 16
        %v378 = vsel %vm374, %v376, %v372
        %v379 = vsel %vm375, %v377, %v373
        %vm380 = vcmp.eq.s32.totalorder %v348, %v378
        %vm381 = vcmp.eq.s32.totalorder %v348, %v379
        %v382 = vstv %s370
        %v383 = vsel %vm380, %v382, 0.0
        %v384 = vsel %vm381, %v382, 0.0
        %v385 = vadd.f32 %v366, %v383
        %v386 = vadd.f32 %v367, %v384
        %v387 = vpack.c.bf16 %v386, %v385
        %v388 = vpack.c.bf16 %v341, %v340
        %vm389 = vcmask 130048
        %v391 = vsel %vm389, %v387, 0
        %393 = vmatprep.subr.bf16.mxu0 0
        %394 = vmatpush1.bf16.msra.mxu0 %v388
        %395 = vmatprep.subr.bf16.mxu0 0
        %396 = vmatpush1.bf16.msra.mxu0 0
        %397 = vmatprep.subr.bf16.mxu0 0
        %398 = vmatpush1.bf16.msra.mxu0 0
        %399 = vmatprep.subr.bf16.mxu0 0
        %400 = vmatpush1.bf16.msra.mxu0 0
        %401 = vmatprep.subr.bf16.mxu0 0
        %402 = vmatpush1.bf16.msra.mxu0 0
        %403 = vmatprep.subr.bf16.mxu0 0
        %404 = vmatpush1.bf16.msra.mxu0 0
        %405 = vmatprep.subr.bf16.mxu0 0
        %406 = vmatpush1.bf16.msra.mxu0 0
        %407 = vmatprep.subr.bf16.mxu0 0
        %408 = vmatpush1.bf16.msra.mxu0 0
        %409 = vmatprep.subr.bf16.mxu0 0
        %410 = vmatpush1.bf16.msra.mxu0 0
        %411 = vmatprep.subr.bf16.mxu0 0
        %412 = vmatpush1.bf16.msra.mxu0 0
        %413 = vmatprep.subr.bf16.mxu0 0
        %414 = vmatpush1.bf16.msra.mxu0 0
        %415 = vmatprep.subr.bf16.mxu0 0
        %416 = vmatpush1.bf16.msra.mxu0 0
        %417 = vmatprep.subr.bf16.mxu0 0
        %418 = vmatpush1.bf16.msra.mxu0 0
        %419 = vmatprep.subr.bf16.mxu0 0
        %420 = vmatpush1.bf16.msra.mxu0 0
        %421 = vmatprep.subr.bf16.mxu0 0
        %422 = vmatpush1.bf16.msra.mxu0 0
        %423 = vmatprep.subr.bf16.mxu0 0
        %424 = vmatpush1.bf16.msra.mxu0 0
        %425 = vmatprep.mubr.bf16.mxu0 0
        %426 = vmatmul.mubr.bf16.gmra.mrb[0].mxu0 %v391
        %v427 = vpop.f32.mrb[0].mxu0
        %v428 = vadd.f32 0.0, %v427
        %v429 = vpop.f32.mrb[0].mxu0
        %v430 = vpop.f32.mrb[0].mxu0
        %v431 = vadd.f32 0.0, %v430
        %v432 = vpop.f32.mrb[0].mxu0
        %433 = vdwg.mxu0
        %v434 = vpack.c.bf16 %v431, %v428
        %v435 = vld [vmem:[%s4] sm:$0xf]
        %v436 = vld [vmem:[%s4 + $0x4] sm:$0xf]
        %v437 = vld [vmem:[%s4 + $0x8] sm:$0xf]
        %v438 = vld [vmem:[%s4 + $0xc] sm:$0xf]
        %v439 = vld [vmem:[%s5] sm:$0x1]
        %v441 = vlaneseq
        %v442 = vshrl.u32 %v441, 7
        %v443 = vsub.s32 0, %v442
        %v444 = vrot.slane %v439, %v443
        %v450 = vunpack.c.l.b16 %v435
        %v451 = vunpack.c.l.b16 %v436
        %v452 = vunpack.c.l.b16 %v437
        %v453 = vunpack.c.l.b16 %v438
        %v454 = vpack.c.b16 %v451, %v450
        %v455 = vpack.c.b16 %v453, %v452
        %vm458 = vcmask 261120
        %v460 = vsel %vm458, %v434, 0
        %462 = vmatprep.subr.bf16.mxu0 0
        %463 = vmatpush1.bf16.msra.mxu0 %v454
        %464 = vmatprep.subr.bf16.mxu0 0
        %465 = vmatpush1.bf16.msra.mxu0 %v455
        %466 = vmatprep.subr.bf16.mxu0 0
        %467 = vmatpush1.bf16.msra.mxu0 0
        %468 = vmatprep.subr.bf16.mxu0 0
        %469 = vmatpush1.bf16.msra.mxu0 0
        %470 = vmatprep.subr.bf16.mxu0 0
        %471 = vmatpush1.bf16.msra.mxu0 0
        %472 = vmatprep.subr.bf16.mxu0 0
        %473 = vmatpush1.bf16.msra.mxu0 0
        %474 = vmatprep.subr.bf16.mxu0 0
        %475 = vmatpush1.bf16.msra.mxu0 0
        %476 = vmatprep.subr.bf16.mxu0 0
        %477 = vmatpush1.bf16.msra.mxu0 0
        %478 = vmatprep.subr.bf16.mxu0 0
        %479 = vmatpush1.bf16.msra.mxu0 0
        %480 = vmatprep.subr.bf16.mxu0 0
        %481 = vmatpush1.bf16.msra.mxu0 0
        %482 = vmatprep.subr.bf16.mxu0 0
        %483 = vmatpush1.bf16.msra.mxu0 0
        %484 = vmatprep.subr.bf16.mxu0 0
        %485 = vmatpush1.bf16.msra.mxu0 0
        %486 = vmatprep.subr.bf16.mxu0 0
        %487 = vmatpush1.bf16.msra.mxu0 0
        %488 = vmatprep.subr.bf16.mxu0 0
        %489 = vmatpush1.bf16.msra.mxu0 0
        %490 = vmatprep.subr.bf16.mxu0 0
        %491 = vmatpush1.bf16.msra.mxu0 0
        %492 = vmatprep.subr.bf16.mxu0 0
        %493 = vmatpush1.bf16.msra.mxu0 0
        %494 = vmatprep.mubr.bf16.mxu0 0
        %495 = vmatmul.mubr.bf16.gmra.mrb[0].mxu0 %v460
        %v496 = vpop.f32.mrb[0].mxu0
        %v497 = vadd.f32 %v444, %v496
        %v498 = vpop.f32.mrb[0].mxu0
        %v499 = vpop.f32.mrb[0].mxu0
        %v500 = vadd.f32 %v444, %v499
        %v501 = vpop.f32.mrb[0].mxu0
        %502 = vdwg.mxu0
        %v503 = vadd.f32 %v342, %v497
        %v504 = vadd.f32 %v343, %v500
        %v505 = vlaneseq
        %v506 = vshrl.u32 %v505, 7
        %v507 = vsub.s32 0, %v506
        %v508 = vrot.slane %v503, %v507
        %v509 = vlaneseq
        %v510 = vshrl.u32 %v509, 7
        %v511 = vsub.s32 7, %v510
        %v512 = vrot.slane %v504, %v511
        %vm515 = vcmask 1041408
        %v516 = vrot.slane %v503, 6
        %v517 = vrot.slane %v504, 6
        %v518 = vsel %vm515, %v516, %v517
        %v522 = vsel %vm515, %v508, %v516
        %v523 = vsel %vm515, %v517, %v512
        %vm526 = vcmask 1046528
        %v527 = vrot.slane %v522, 1
        %v528 = vrot.slane %v518, 1
        %v529 = vsel %vm526, %v527, %v528
        %v530 = vrot.slane %v523, 1
        %v531 = vsel %vm526, %v528, %v530
        %v534 = vadd.f32 %v522, %v529
        %v535 = vadd.f32 %v518, %v531
        %vm536 = vcmask 1045504
        %v537 = vrot.slane %v522, 2
        %v538 = vrot.slane %v518, 2
        %v539 = vsel %vm536, %v537, %v538
        %v540 = vrot.slane %v523, 2
        %v541 = vsel %vm536, %v538, %v540
        %v544 = vadd.f32 %v534, %v539
        %v545 = vadd.f32 %v535, %v541
        %vm546 = vcmask 1044480
        %v547 = vrot.slane %v522, 3
        %v548 = vrot.slane %v518, 3
        %v549 = vsel %vm546, %v547, %v548
        %v550 = vrot.slane %v523, 3
        %v551 = vsel %vm546, %v548, %v550
        %v554 = vadd.f32 %v544, %v549
        %v555 = vadd.f32 %v545, %v551
        %vm556 = vcmask 1043456
        %v557 = vrot.slane %v522, 4
        %v558 = vrot.slane %v518, 4
        %v559 = vsel %vm556, %v557, %v558
        %v560 = vrot.slane %v523, 4
        %v561 = vsel %vm556, %v558, %v560
        %v564 = vadd.f32 %v554, %v559
        %v565 = vadd.f32 %v555, %v561
        %v566 = vmul.f32 %v564, 0.2
        %v567 = vmul.f32 %v565, 0.2
        %v568 = vsub.f32 %v503, %v566
        %v569 = vsub.f32 %v504, %v567
        %570 = vst.msk [vmem:[%s333] sm:$0xff] %vm458, %v568
        %571 = vst.msk [vmem:[%s333 + $0x8] sm:$0xff] %vm458, %v569
        %572 = vst.msk [vmem:[%s338] sm:$0xff] %vm458, %v566
        %573 = vst.msk [vmem:[%s338 + $0x8] sm:$0xff] %vm458, %v567
        %p574 = scmp.lt.s32.totalorder %s21, 1
        %s575 = scalar_select %p574, %s21, 1
        %s576 = smul.addr %s575, 2
        %s577 = smul.addr %s576, 8
        %s578 = scalar_lea.vmem %s6, %s577
        %p579 = scmp.lt.s32.totalorder %s21, 1
        %s580 = scalar_select %p579, %s21, 1
        %s581 = smul.addr %s580, 2
        %s582 = smul.addr %s581, 8
        %s583 = scalar_lea.vmem %s7, %s582
        // Predicated region
        $region53: #{_lambda_.28} parent=43 // pred_check
          %p584 = pneg %p175
        $region54: #{_lambda_.28} parent=43 // pred_check_branch
          %586 = sbr.rel (%p584) target = $region56
        $region55: #{_lambda_.28} parent=43 // pred_region
          _
        $region56: #{_lambda_.28} parent=43 // pred_fallthru
          _
        // Predicated region
        $region57: #{_lambda_.28} parent=43 // pred_check
          %p587 = pneg %p201
        $region58: #{_lambda_.28} parent=43 // pred_check_branch
          %589 = sbr.rel (%p587) target = $region60
        $region59: #{_lambda_.28} parent=43 // pred_region
          _
        $region60: #{_lambda_.28} parent=43 // pred_fallthru
          _
      $region44: #{_lambda_.28} parent=5 // pred_fallthru
        _
      %p590 = scmp.le.s32.totalorder 2, %s16
      // Predicated region
      $region61: #{_lambda_.28} parent=5 // pred_check
        %p591 = pneg %p590
      $region62: #{_lambda_.28} parent=5 // pred_check_branch
        %593 = sbr.rel (%p591) target = $region64
      $region63: #{_lambda_.28} parent=5 // pred_region
        %s594 = ssub.s32 %s16, 2
        // Predicated region
        $region65: #{_lambda_.28} parent=63 // pred_check
          %p595 = pneg %p181
        $region66: #{_lambda_.28} parent=63 // pred_check_branch
          %597 = sbr.rel (%p595) target = $region68
        $region67: #{_lambda_.28} parent=63 // pred_region
          %p598 = scmp.lt.s32.totalorder %s22, 1
          %s599 = scalar_select %p598, %s22, 1
          %s600 = smul.addr %s599, 2
          %s601 = smul.addr %s600, 8
          %s602 = scalar_lea.vmem %s6, %s601
        $region68: #{_lambda_.28} parent=63 // pred_fallthru
          _
        // Predicated region
        $region69: #{_lambda_.28} parent=63 // pred_check
          %p603 = pneg %p207
        $region70: #{_lambda_.28} parent=63 // pred_check_branch
          %605 = sbr.rel (%p603) target = $region72
        $region71: #{_lambda_.28} parent=63 // pred_region
          %p606 = scmp.lt.s32.totalorder %s22, 1
          %s607 = scalar_select %p606, %s22, 1
          %s608 = smul.addr %s607, 2
          %s609 = smul.addr %s608, 8
          %s610 = scalar_lea.vmem %s7, %s609
        $region72: #{_lambda_.28} parent=63 // pred_fallthru
          _
      $region64: #{_lambda_.28} parent=5 // pred_fallthru
        _
    $region6: #{_lambda_.28} parent=1 // loop_footer
      %s20 = sadd.s32 1, %s16
    $region7: #{_lambda_.28} parent=1 // loop_footer_branch
      %15 = sbr.rel target = $region3
    $region8: #{_lambda_.28} parent=1 // loop_exit
      _
    %611 = vsyncpa [#allocation3], 1
    %s612 = scalar_lea.sflag [#allocation3], 1
    %613 = vsyncpa %s612, 1
    %614 = vsyncpa [#allocation5], 1

// kernel: _lambda_.24
$region0: #{_lambda_.24}
  #allocation0 [shape = 'u32[]', space=smem, size = 0x4, offset = 0x4, fixed_abs, tag = 'smem constant byte address 0x4 - core index']
  #allocation1 [shape = 'u32[144,128]{1,0:T(1,128)}', space=vmem, size = 0x12000, scoped, tag = 'internal scratch']
  %s0 = inlined_call_operand.vmem [shape: f32[2,16,32], index: 0, kind: input, shape index: {}]
  %s1 = inlined_call_operand.vmem [shape: f32[1,32], index: 1, kind: input, shape index: {}]
  %s2 = inlined_call_operand.vmem [shape: f32[1,32], index: 2, kind: input, shape index: {}]
  %s3 = inlined_call_operand.vmem [shape: f32[2,16,32], index: 3, kind: output, shape index: {}]
  %s4 = sld [smem:[#allocation0]]
  $region45: #{_lambda_.24} parent=0
    _
  %s6 = ssub.s32 1, %s4
  %s7 = scalar_select 0, %s6, %s4
  loop: start=0, step=1, limit=4
  $region2: #{_lambda_.24} parent=0 // loop_pre_header
    _
  $region3: #{_lambda_.24} parent=0 // loop_header
    %s9 = sphi 0, %s13
    %p10 = scmp.ge.s32.totalorder %s9, 4
    %s19 = sphi 0, %s21
    %s22 = sphi 0, %s19
    %s23 = sphi 0, %s22
    %s39 = sphi 0, %s23
    %s43 = sphi 0, %s43
    %s45 = sphi 0, %s43
    %s46 = sphi 0, %s45
    %s60 = sphi 0, %s46
    %s64 = sphi 0, %s64
    %s66 = sphi 0, %s64
    %s67 = sphi 0, %s66
    %s81 = sphi 0, %s67
    %s87 = sphi 0, %s89
    %s90 = sphi 0, %s87
    %s91 = sphi 0, %s90
    %s107 = sphi 0, %s91
  $region4: #{_lambda_.24} parent=0 // loop_header_branch
    %12 = sbr.rel (%p10) target = $region8
  $region5: #{_lambda_.24} parent=0 // loop_body
    %s14 = ssub.s32 %s9, 1
    %s15 = ssub.s32 %s9, 2
    %s16 = sadd.s32 %s9, 1
    %s17 = ssub.s32 %s9, %s16
    %p18 = scmp.eq.s32.totalorder %s17, 0
    %s20 = sadd.s32 %s19, 1
    %s21 = scalar_select %p18, %s19, %s20
    %p24 = pneg %p18
    %p25 = scmp.eq.s32.totalorder %s9, 1
    %p26 = por %p24, %p25
    %p27 = scmp.ne.s32.totalorder %s19, %s22
    %p28 = scmp.eq.s32.totalorder %s9, 0
    %p29 = por %p27, %p28
    %p30 = scmp.ne.s32.totalorder %s19, %s22
    %p31 = scmp.eq.s32.totalorder %s14, 1
    %p32 = por %p30, %p31
    %p33 = scmp.ne.s32.totalorder %s22, %s23
    %p34 = scmp.eq.s32.totalorder %s14, 0
    %p35 = por %p33, %p34
    %p36 = scmp.ne.s32.totalorder %s22, %s23
    %p37 = scmp.eq.s32.totalorder %s15, 1
    %p38 = por %p36, %p37
    %p40 = scmp.ne.s32.totalorder %s23, %s39
    %p41 = scmp.eq.s32.totalorder %s15, 0
    %p42 = por %p40, %p41
    %s44 = sadd.s32 %s43, 1
    %p47 = scmp.eq.s32.totalorder %s9, 1
    %p48 = scmp.ne.s32.totalorder %s43, %s45
    %p49 = scmp.eq.s32.totalorder %s9, 0
    %p50 = por %p48, %p49
    %p51 = scmp.ne.s32.totalorder %s43, %s45
    %p52 = scmp.eq.s32.totalorder %s14, 1
    %p53 = por %p51, %p52
    %p54 = scmp.ne.s32.totalorder %s45, %s46
    %p55 = scmp.eq.s32.totalorder %s14, 0
    %p56 = por %p54, %p55
    %p57 = scmp.ne.s32.totalorder %s45, %s46
    %p58 = scmp.eq.s32.totalorder %s15, 1
    %p59 = por %p57, %p58
    %p61 = scmp.ne.s32.totalorder %s46, %s60
    %p62 = scmp.eq.s32.totalorder %s15, 0
    %p63 = por %p61, %p62
    %s65 = sadd.s32 %s64, 1
    %p68 = scmp.eq.s32.totalorder %s9, 1
    %p69 = scmp.ne.s32.totalorder %s64, %s66
    %p70 = scmp.eq.s32.totalorder %s9, 0
    %p71 = por %p69, %p70
    %p72 = scmp.ne.s32.totalorder %s64, %s66
    %p73 = scmp.eq.s32.totalorder %s14, 1
    %p74 = por %p72, %p73
    %p75 = scmp.ne.s32.totalorder %s66, %s67
    %p76 = scmp.eq.s32.totalorder %s14, 0
    %p77 = por %p75, %p76
    %p78 = scmp.ne.s32.totalorder %s66, %s67
    %p79 = scmp.eq.s32.totalorder %s15, 1
    %p80 = por %p78, %p79
    %p82 = scmp.ne.s32.totalorder %s67, %s81
    %p83 = scmp.eq.s32.totalorder %s15, 0
    %p84 = por %p82, %p83
    %s85 = ssub.s32 %s9, %s16
    %p86 = scmp.eq.s32.totalorder %s85, 0
    %s88 = sadd.s32 %s87, 1
    %s89 = scalar_select %p86, %s87, %s88
    %p92 = pneg %p86
    %p93 = scmp.eq.s32.totalorder %s9, 1
    %p94 = por %p92, %p93
    %p95 = scmp.ne.s32.totalorder %s87, %s90
    %p96 = scmp.eq.s32.totalorder %s9, 0
    %p97 = por %p95, %p96
    %p98 = scmp.ne.s32.totalorder %s87, %s90
    %p99 = scmp.eq.s32.totalorder %s14, 1
    %p100 = por %p98, %p99
    %p101 = scmp.ne.s32.totalorder %s90, %s91
    %p102 = scmp.eq.s32.totalorder %s14, 0
    %p103 = por %p101, %p102
    %p104 = scmp.ne.s32.totalorder %s90, %s91
    %p105 = scmp.eq.s32.totalorder %s15, 1
    %p106 = por %p104, %p105
    %p108 = scmp.ne.s32.totalorder %s91, %s107
    %p109 = scmp.eq.s32.totalorder %s15, 0
    %p110 = por %p108, %p109
    %p111 = scmp.le.s32.totalorder 1, %s9
    %p112 = scmp.lt.s32.totalorder %s9, 3
    %p113 = pnand %p111, %p112
    %p114 = pneg %p113
    // Predicated region
    $region9: #{_lambda_.24} parent=5 // pred_check
      _
    $region10: #{_lambda_.24} parent=5 // pred_check_branch
      %116 = sbr.rel (%p113) target = $region12
    $region11: #{_lambda_.24} parent=5 // pred_region
      %s117 = ssub.s32 %s9, 1
      // Predicated region
      $region13: #{_lambda_.24} parent=11 // pred_check
        %p118 = pneg %p56
      $region14: #{_lambda_.24} parent=11 // pred_check_branch
        %120 = sbr.rel (%p118) target = $region16
      $region15: #{_lambda_.24} parent=11 // pred_region
        _
      $region16: #{_lambda_.24} parent=11 // pred_fallthru
        _
      // Predicated region
      $region17: #{_lambda_.24} parent=11 // pred_check
        %p121 = pneg %p77
      $region18: #{_lambda_.24} parent=11 // pred_check_branch
        %123 = sbr.rel (%p121) target = $region20
      $region19: #{_lambda_.24} parent=11 // pred_region
        _
      $region20: #{_lambda_.24} parent=11 // pred_fallthru
        _
    $region12: #{_lambda_.24} parent=5 // pred_fallthru
      _
    %p124 = scmp.lt.s32.totalorder %s9, 2
    // Predicated region
    $region21: #{_lambda_.24} parent=5 // pred_check
      %p125 = pneg %p124
    $region22: #{_lambda_.24} parent=5 // pred_check_branch
      %127 = sbr.rel (%p125) target = $region24
    $region23: #{_lambda_.24} parent=5 // pred_region
      // Predicated region
      $region25: #{_lambda_.24} parent=23 // pred_check
        %p128 = pneg %p29
      $region26: #{_lambda_.24} parent=23 // pred_check_branch
        %130 = sbr.rel (%p128) target = $region28
      $region27: #{_lambda_.24} parent=23 // pred_region
        %p131 = scmp.lt.s32.totalorder %s9, 1
        %s132 = scalar_select %p131, %s9, 1
        %s133 = smul.addr %s132, 2
        %s134 = smul.addr %s133, 8
        %s135 = scalar_lea.vmem %s0, %s134
      $region28: #{_lambda_.24} parent=23 // pred_fallthru
        _
    $region24: #{_lambda_.24} parent=5 // pred_fallthru
      _
    %p136 = scmp.le.s32.totalorder 1, %s9
    %p137 = scmp.lt.s32.totalorder %s9, 3
    %p138 = pnand %p136, %p137
    %p139 = pneg %p138
    // Predicated region
    $region29: #{_lambda_.24} parent=5 // pred_check
      _
    $region30: #{_lambda_.24} parent=5 // pred_check_branch
      %141 = sbr.rel (%p138) target = $region32
    $region31: #{_lambda_.24} parent=5 // pred_region
      %s142 = ssub.s32 %s9, 1
      %p143 = scmp.lt.s32.totalorder %s14, 1
      %s144 = scalar_select %p143, %s14, 1
      %s145 = smul.addr %s144, 2
      %s146 = smul.addr %s145, 8
      %s147 = scalar_lea.vmem %s0, %s146
      %p148 = pneg %p35
      %p149 = pneg %p32
      %p150 = pneg %p56
      %p151 = pneg %p53
      %p152 = pneg %p77
      %p153 = pneg %p74
      %p154 = pneg %p103
      %p155 = pneg %p100
      %p156 = scmp.lt.s32.totalorder %s14, 1
      %s157 = scalar_select %p156, %s14, 1
      %s158 = smul.addr %s157, 2
      %s159 = smul.addr %s158, 8
      %s160 = scalar_lea.vmem %s3, %s159
      %p161 = scmp.lt.s32.totalorder %s14, 1
      %s162 = scalar_select %p161, %s14, 1
      %s163 = smul.addr %s162, 2
      %s164 = smul.addr %s163, 8
      %s165 = scalar_lea.vmem %s0, %s164
      %p166 = scmp.lt.s32.totalorder %s14, 1
      %s167 = scalar_select %p166, %s14, 1
      %s168 = smul.addr %s167, 2
      %s169 = smul.addr %s168, 8
      %s170 = scalar_lea.vmem %s3, %s169
      %v171 = vld [vmem:[%s165] sm:$0xff]
      %v172 = vld [vmem:[%s165 + $0x8] sm:$0xff]
      %v173 = vld [vmem:[%s1] sm:$0x1]
      %v174 = vld [vmem:[%s2] sm:$0x1]
      %vm175 = vcmask 261120
      %v176 = vsel %vm175, %v171, 0.0
      %177 = vadd.xlane.f32.xlu0 %v176
      %v178 = vpop.xlane.xlu0 %177
      %v179 = vsel %vm175, %v172, 0.0
      %180 = vadd.xlane.f32.xlu0 %v179
      %v181 = vpop.xlane.xlu0 %180
      %v182 = vrcp.pop 32.0
      %v183 = vmul.f32 %v178, %v182
      %v184 = vmul.f32 %v181, %v182
      %v185 = vsub.f32 %v171, %v183
      %v186 = vsub.f32 %v172, %v184
      %v187 = vmul.f32 %v185, %v185
      %v188 = vmul.f32 %v186, %v186
      %v189 = vsel %vm175, %v187, 0.0
      %190 = vadd.xlane.f32.xlu0 %v189
      %v191 = vpop.xlane.xlu0 %190
      %v192 = vsel %vm175, %v188, 0.0
      %193 = vadd.xlane.f32.xlu0 %v192
      %v194 = vpop.xlane.xlu0 %193
      %v195 = vmul.f32 %v191, %v182
      %v196 = vmul.f32 %v194, %v182
      %v197 = vadd.f32 %v195, 1e-05
      %v198 = vadd.f32 %v196, 1e-05
      %v199 = vrsqrt.pop %v197
      %v200 = vrsqrt.pop %v198
      %v201 = vmul.f32 %v185, %v199
      %v202 = vmul.f32 %v186, %v200
      %v204 = vlaneseq
      %v205 = vshrl.u32 %v204, 7
      %v206 = vsub.s32 0, %v205
      %v207 = vrot.slane %v173, %v206
      %v209 = vmul.f32 %v201, %v207
      %v210 = vmul.f32 %v202, %v207
      %v212 = vlaneseq
      %v213 = vshrl.u32 %v212, 7
      %v214 = vsub.s32 0, %v213
      %v215 = vrot.slane %v174, %v214
      %v217 = vadd.f32 %v209, %v215
      %v218 = vadd.f32 %v210, %v215
      %v219 = vsel %vm175, %v217, 0.0
      %v220 = vsel %vm175, %v218, 0.0
      %v221 = vadd.f32 %v219, %v220
      %v222 = vrot.slane %v221, 4
      %v223 = vadd.f32 %v221, %v222
      %v224 = vrot.slane %v223, 2
      %v225 = vadd.f32 %v223, %v224
      %v226 = vrot.slane %v225, 1
      %v227 = vadd.f32 %v225, %v226
      %v228 = vrcp.pop 16.0
      %v229 = vmul.f32 %v227, %v228
      %v230 = vsub.f32 %v217, %v229
      %v231 = vsub.f32 %v218, %v229
      %232 = vst.msk [vmem:[%s170] sm:$0xff] %vm175, %v230
      %233 = vst.msk [vmem:[%s170 + $0x8] sm:$0xff] %vm175, %v231
      %p234 = scmp.lt.s32.totalorder %s14, 1
      %s235 = scalar_select %p234, %s14, 1
      %s236 = smul.addr %s235, 2
      %s237 = smul.addr %s236, 8
      %s238 = scalar_lea.vmem %s3, %s237
      // Predicated region
      $region33: #{_lambda_.24} parent=31 // pred_check
        %p239 = pneg %p100
      $region34: #{_lambda_.24} parent=31 // pred_check_branch
        %241 = sbr.rel (%p239) target = $region36
      $region35: #{_lambda_.24} parent=31 // pred_region
        _
      $region36: #{_lambda_.24} parent=31 // pred_fallthru
        _
    $region32: #{_lambda_.24} parent=5 // pred_fallthru
      _
    %p242 = scmp.le.s32.totalorder 2, %s9
    // Predicated region
    $region37: #{_lambda_.24} parent=5 // pred_check
      %p243 = pneg %p242
    $region38: #{_lambda_.24} parent=5 // pred_check_branch
      %245 = sbr.rel (%p243) target = $region40
    $region39: #{_lambda_.24} parent=5 // pred_region
      %s246 = ssub.s32 %s9, 2
      // Predicated region
      $region41: #{_lambda_.24} parent=39 // pred_check
        %p247 = pneg %p106
      $region42: #{_lambda_.24} parent=39 // pred_check_branch
        %249 = sbr.rel (%p247) target = $region44
      $region43: #{_lambda_.24} parent=39 // pred_region
        %p250 = scmp.lt.s32.totalorder %s15, 1
        %s251 = scalar_select %p250, %s15, 1
        %s252 = smul.addr %s251, 2
        %s253 = smul.addr %s252, 8
        %s254 = scalar_lea.vmem %s3, %s253
      $region44: #{_lambda_.24} parent=39 // pred_fallthru
        _
    $region40: #{_lambda_.24} parent=5 // pred_fallthru
      _
  $region6: #{_lambda_.24} parent=0 // loop_footer
    %s13 = sadd.s32 1, %s9
  $region7: #{_lambda_.24} parent=0 // loop_footer_branch
    %8 = sbr.rel target = $region3
  $region8: #{_lambda_.24} parent=0 // loop_exit
    _

// kernel: _lambda_.23
$region0: #{_lambda_.23}
  #allocation0 [shape = 'u32[]', space=smem, size = 0x4, offset = 0x4, fixed_abs, tag = 'smem constant byte address 0x4 - core index']
  #allocation1 [shape = 'u32[144,128]{1,0:T(1,128)}', space=vmem, size = 0x12000, scoped, tag = 'internal scratch']
  %s0 = inlined_call_operand.vmem [shape: f32[2,16,32], index: 0, kind: input, shape index: {}]
  %s1 = inlined_call_operand.vmem [shape: bf16[32,64], index: 1, kind: input, shape index: {}]
  %s2 = inlined_call_operand.vmem [shape: bf16[64,32], index: 2, kind: input, shape index: {}]
  %s3 = inlined_call_operand.vmem [shape: f32[2,16,32], index: 3, kind: output, shape index: {}]
  %s4 = sld [smem:[#allocation0]]
  $region45: #{_lambda_.23} parent=0
    _
  %s6 = ssub.s32 1, %s4
  %s7 = scalar_select 0, %s6, %s4
  loop: start=0, step=1, limit=4
  $region2: #{_lambda_.23} parent=0 // loop_pre_header
    _
  $region3: #{_lambda_.23} parent=0 // loop_header
    %s9 = sphi 0, %s13
    %p10 = scmp.ge.s32.totalorder %s9, 4
    %s19 = sphi 0, %s21
    %s22 = sphi 0, %s19
    %s23 = sphi 0, %s22
    %s39 = sphi 0, %s23
    %s43 = sphi 0, %s43
    %s45 = sphi 0, %s43
    %s46 = sphi 0, %s45
    %s60 = sphi 0, %s46
    %s64 = sphi 0, %s64
    %s66 = sphi 0, %s64
    %s67 = sphi 0, %s66
    %s81 = sphi 0, %s67
    %s87 = sphi 0, %s89
    %s90 = sphi 0, %s87
    %s91 = sphi 0, %s90
    %s107 = sphi 0, %s91
  $region4: #{_lambda_.23} parent=0 // loop_header_branch
    %12 = sbr.rel (%p10) target = $region8
  $region5: #{_lambda_.23} parent=0 // loop_body
    %s14 = ssub.s32 %s9, 1
    %s15 = ssub.s32 %s9, 2
    %s16 = sadd.s32 %s9, 1
    %s17 = ssub.s32 %s9, %s16
    %p18 = scmp.eq.s32.totalorder %s17, 0
    %s20 = sadd.s32 %s19, 1
    %s21 = scalar_select %p18, %s19, %s20
    %p24 = pneg %p18
    %p25 = scmp.eq.s32.totalorder %s9, 1
    %p26 = por %p24, %p25
    %p27 = scmp.ne.s32.totalorder %s19, %s22
    %p28 = scmp.eq.s32.totalorder %s9, 0
    %p29 = por %p27, %p28
    %p30 = scmp.ne.s32.totalorder %s19, %s22
    %p31 = scmp.eq.s32.totalorder %s14, 1
    %p32 = por %p30, %p31
    %p33 = scmp.ne.s32.totalorder %s22, %s23
    %p34 = scmp.eq.s32.totalorder %s14, 0
    %p35 = por %p33, %p34
    %p36 = scmp.ne.s32.totalorder %s22, %s23
    %p37 = scmp.eq.s32.totalorder %s15, 1
    %p38 = por %p36, %p37
    %p40 = scmp.ne.s32.totalorder %s23, %s39
    %p41 = scmp.eq.s32.totalorder %s15, 0
    %p42 = por %p40, %p41
    %s44 = sadd.s32 %s43, 1
    %p47 = scmp.eq.s32.totalorder %s9, 1
    %p48 = scmp.ne.s32.totalorder %s43, %s45
    %p49 = scmp.eq.s32.totalorder %s9, 0
    %p50 = por %p48, %p49
    %p51 = scmp.ne.s32.totalorder %s43, %s45
    %p52 = scmp.eq.s32.totalorder %s14, 1
    %p53 = por %p51, %p52
    %p54 = scmp.ne.s32.totalorder %s45, %s46
    %p55 = scmp.eq.s32.totalorder %s14, 0
    %p56 = por %p54, %p55
    %p57 = scmp.ne.s32.totalorder %s45, %s46
    %p58 = scmp.eq.s32.totalorder %s15, 1
    %p59 = por %p57, %p58
    %p61 = scmp.ne.s32.totalorder %s46, %s60
    %p62 = scmp.eq.s32.totalorder %s15, 0
    %p63 = por %p61, %p62
    %s65 = sadd.s32 %s64, 1
    %p68 = scmp.eq.s32.totalorder %s9, 1
    %p69 = scmp.ne.s32.totalorder %s64, %s66
    %p70 = scmp.eq.s32.totalorder %s9, 0
    %p71 = por %p69, %p70
    %p72 = scmp.ne.s32.totalorder %s64, %s66
    %p73 = scmp.eq.s32.totalorder %s14, 1
    %p74 = por %p72, %p73
    %p75 = scmp.ne.s32.totalorder %s66, %s67
    %p76 = scmp.eq.s32.totalorder %s14, 0
    %p77 = por %p75, %p76
    %p78 = scmp.ne.s32.totalorder %s66, %s67
    %p79 = scmp.eq.s32.totalorder %s15, 1
    %p80 = por %p78, %p79
    %p82 = scmp.ne.s32.totalorder %s67, %s81
    %p83 = scmp.eq.s32.totalorder %s15, 0
    %p84 = por %p82, %p83
    %s85 = ssub.s32 %s9, %s16
    %p86 = scmp.eq.s32.totalorder %s85, 0
    %s88 = sadd.s32 %s87, 1
    %s89 = scalar_select %p86, %s87, %s88
    %p92 = pneg %p86
    %p93 = scmp.eq.s32.totalorder %s9, 1
    %p94 = por %p92, %p93
    %p95 = scmp.ne.s32.totalorder %s87, %s90
    %p96 = scmp.eq.s32.totalorder %s9, 0
    %p97 = por %p95, %p96
    %p98 = scmp.ne.s32.totalorder %s87, %s90
    %p99 = scmp.eq.s32.totalorder %s14, 1
    %p100 = por %p98, %p99
    %p101 = scmp.ne.s32.totalorder %s90, %s91
    %p102 = scmp.eq.s32.totalorder %s14, 0
    %p103 = por %p101, %p102
    %p104 = scmp.ne.s32.totalorder %s90, %s91
    %p105 = scmp.eq.s32.totalorder %s15, 1
    %p106 = por %p104, %p105
    %p108 = scmp.ne.s32.totalorder %s91, %s107
    %p109 = scmp.eq.s32.totalorder %s15, 0
    %p110 = por %p108, %p109
    %p111 = scmp.le.s32.totalorder 1, %s9
    %p112 = scmp.lt.s32.totalorder %s9, 3
    %p113 = pnand %p111, %p112
    %p114 = pneg %p113
    // Predicated region
    $region9: #{_lambda_.23} parent=5 // pred_check
      _
    $region10: #{_lambda_.23} parent=5 // pred_check_branch
      %116 = sbr.rel (%p113) target = $region12
    $region11: #{_lambda_.23} parent=5 // pred_region
      %s117 = ssub.s32 %s9, 1
      // Predicated region
      $region13: #{_lambda_.23} parent=11 // pred_check
        %p118 = pneg %p56
      $region14: #{_lambda_.23} parent=11 // pred_check_branch
        %120 = sbr.rel (%p118) target = $region16
      $region15: #{_lambda_.23} parent=11 // pred_region
        _
      $region16: #{_lambda_.23} parent=11 // pred_fallthru
        _
      // Predicated region
      $region17: #{_lambda_.23} parent=11 // pred_check
        %p121 = pneg %p77
      $region18: #{_lambda_.23} parent=11 // pred_check_branch
        %123 = sbr.rel (%p121) target = $region20
      $region19: #{_lambda_.23} parent=11 // pred_region
        _
      $region20: #{_lambda_.23} parent=11 // pred_fallthru
        _
    $region12: #{_lambda_.23} parent=5 // pred_fallthru
      _
    %p124 = scmp.lt.s32.totalorder %s9, 2
    // Predicated region
    $region21: #{_lambda_.23} parent=5 // pred_check
      %p125 = pneg %p124
    $region22: #{_lambda_.23} parent=5 // pred_check_branch
      %127 = sbr.rel (%p125) target = $region24
    $region23: #{_lambda_.23} parent=5 // pred_region
      // Predicated region
      $region25: #{_lambda_.23} parent=23 // pred_check
        %p128 = pneg %p29
      $region26: #{_lambda_.23} parent=23 // pred_check_branch
        %130 = sbr.rel (%p128) target = $region28
      $region27: #{_lambda_.23} parent=23 // pred_region
        %p131 = scmp.lt.s32.totalorder %s9, 1
        %s132 = scalar_select %p131, %s9, 1
        %s133 = smul.addr %s132, 2
        %s134 = smul.addr %s133, 8
        %s135 = scalar_lea.vmem %s0, %s134
      $region28: #{_lambda_.23} parent=23 // pred_fallthru
        _
    $region24: #{_lambda_.23} parent=5 // pred_fallthru
      _
    %p136 = scmp.le.s32.totalorder 1, %s9
    %p137 = scmp.lt.s32.totalorder %s9, 3
    %p138 = pnand %p136, %p137
    %p139 = pneg %p138
    // Predicated region
    $region29: #{_lambda_.23} parent=5 // pred_check
      _
    $region30: #{_lambda_.23} parent=5 // pred_check_branch
      %141 = sbr.rel (%p138) target = $region32
    $region31: #{_lambda_.23} parent=5 // pred_region
      %s142 = ssub.s32 %s9, 1
      %p143 = scmp.lt.s32.totalorder %s14, 1
      %s144 = scalar_select %p143, %s14, 1
      %s145 = smul.addr %s144, 2
      %s146 = smul.addr %s145, 8
      %s147 = scalar_lea.vmem %s0, %s146
      %p148 = pneg %p35
      %p149 = pneg %p32
      %p150 = pneg %p56
      %p151 = pneg %p53
      %p152 = pneg %p77
      %p153 = pneg %p74
      %p154 = pneg %p103
      %p155 = pneg %p100
      %p156 = scmp.lt.s32.totalorder %s14, 1
      %s157 = scalar_select %p156, %s14, 1
      %s158 = smul.addr %s157, 2
      %s159 = smul.addr %s158, 8
      %s160 = scalar_lea.vmem %s3, %s159
      %p161 = scmp.lt.s32.totalorder %s14, 1
      %s162 = scalar_select %p161, %s14, 1
      %s163 = smul.addr %s162, 2
      %s164 = smul.addr %s163, 8
      %s165 = scalar_lea.vmem %s0, %s164
      %p166 = scmp.lt.s32.totalorder %s14, 1
      %s167 = scalar_select %p166, %s14, 1
      %s168 = smul.addr %s167, 2
      %s169 = smul.addr %s168, 8
      %s170 = scalar_lea.vmem %s3, %s169
      %v172 = vld [vmem:[%s165] sm:$0xff]
      %v173 = vld [vmem:[%s165 + $0x8] sm:$0xff]
      %v174 = vpack.c.bf16 %v173, %v172
      %v175 = vld [vmem:[%s1] sm:$0xf]
      %v176 = vld [vmem:[%s1 + $0x4] sm:$0xf]
      %v177 = vld [vmem:[%s1 + $0x8] sm:$0xf]
      %v178 = vld [vmem:[%s1 + $0xc] sm:$0xf]
      %v183 = vunpack.c.l.b16 %v175
      %v184 = vunpack.c.l.b16 %v176
      %v185 = vunpack.c.l.b16 %v177
      %v186 = vunpack.c.l.b16 %v178
      %v187 = vpack.c.b16 %v184, %v183
      %v188 = vpack.c.b16 %v186, %v185
      %vm191 = vcmask 261120
      %v193 = vsel %vm191, %v174, 0
      %195 = vmatprep.subr.bf16.mxu0 0
      %196 = vmatpush1.bf16.msra.mxu0 %v187
      %197 = vmatprep.subr.bf16.mxu0 0
      %198 = vmatpush1.bf16.msra.mxu0 %v188
      %199 = vmatprep.subr.bf16.mxu0 0
      %200 = vmatpush1.bf16.msra.mxu0 0
      %201 = vmatprep.subr.bf16.mxu0 0
      %202 = vmatpush1.bf16.msra.mxu0 0
      %203 = vmatprep.subr.bf16.mxu0 0
      %204 = vmatpush1.bf16.msra.mxu0 0
      %205 = vmatprep.subr.bf16.mxu0 0
      %206 = vmatpush1.bf16.msra.mxu0 0
      %207 = vmatprep.subr.bf16.mxu0 0
      %208 = vmatpush1.bf16.msra.mxu0 0
      %209 = vmatprep.subr.bf16.mxu0 0
      %210 = vmatpush1.bf16.msra.mxu0 0
      %211 = vmatprep.subr.bf16.mxu0 0
      %212 = vmatpush1.bf16.msra.mxu0 0
      %213 = vmatprep.subr.bf16.mxu0 0
      %214 = vmatpush1.bf16.msra.mxu0 0
      %215 = vmatprep.subr.bf16.mxu0 0
      %216 = vmatpush1.bf16.msra.mxu0 0
      %217 = vmatprep.subr.bf16.mxu0 0
      %218 = vmatpush1.bf16.msra.mxu0 0
      %219 = vmatprep.subr.bf16.mxu0 0
      %220 = vmatpush1.bf16.msra.mxu0 0
      %221 = vmatprep.subr.bf16.mxu0 0
      %222 = vmatpush1.bf16.msra.mxu0 0
      %223 = vmatprep.subr.bf16.mxu0 0
      %224 = vmatpush1.bf16.msra.mxu0 0
      %225 = vmatprep.subr.bf16.mxu0 0
      %226 = vmatpush1.bf16.msra.mxu0 0
      %227 = vmatprep.mubr.bf16.mxu0 0
      %228 = vmatmul.mubr.bf16.gmra.mrb[0].mxu0 %v193
      %v229 = vpop.f32.mrb[0].mxu0
      %v230 = vadd.f32 0.0, %v229
      %v231 = vpop.f32.mrb[0].mxu0
      %v232 = vpop.f32.mrb[0].mxu0
      %v233 = vadd.f32 0.0, %v232
      %v234 = vpop.f32.mrb[0].mxu0
      %235 = vdwg.mxu0
      %v236 = vmax.f32 %v230, 0.0
      %v237 = vmax.f32 %v233, 0.0
      %v238 = vpack.c.bf16 %v237, %v236
      %v239 = vld [vmem:[%s2] sm:$0xf]
      %v240 = vld [vmem:[%s2 + $0x4] sm:$0xf]
      %v241 = vld [vmem:[%s2 + $0x8] sm:$0xf]
      %v242 = vld [vmem:[%s2 + $0xc] sm:$0xf]
      %v243 = vld [vmem:[%s2 + $0x10] sm:$0xf]
      %v244 = vld [vmem:[%s2 + $0x14] sm:$0xf]
      %v245 = vld [vmem:[%s2 + $0x18] sm:$0xf]
      %v246 = vld [vmem:[%s2 + $0x1c] sm:$0xf]
      %v255 = vunpack.c.l.b16 %v239
      %v256 = vunpack.c.l.b16 %v240
      %v257 = vunpack.c.l.b16 %v241
      %v258 = vunpack.c.l.b16 %v242
      %v259 = vunpack.c.l.b16 %v243
      %v260 = vunpack.c.l.b16 %v244
      %v261 = vunpack.c.l.b16 %v245
      %v262 = vunpack.c.l.b16 %v246
      %v263 = vpack.c.b16 %v256, %v255
      %v264 = vpack.c.b16 %v258, %v257
      %v265 = vpack.c.b16 %v260, %v259
      %v266 = vpack.c.b16 %v262, %v261
      %vm271 = vcmask 523264
      %v273 = vsel %vm271, %v238, 0
      %275 = vmatprep.subr.bf16.mxu0 0
      %276 = vmatpush1.bf16.msra.mxu0 %v263
      %277 = vmatprep.subr.bf16.mxu0 0
      %278 = vmatpush1.bf16.msra.mxu0 %v264
      %279 = vmatprep.subr.bf16.mxu0 0
      %280 = vmatpush1.bf16.msra.mxu0 %v265
      %281 = vmatprep.subr.bf16.mxu0 0
      %282 = vmatpush1.bf16.msra.mxu0 %v266
      %283 = vmatprep.subr.bf16.mxu0 0
      %284 = vmatpush1.bf16.msra.mxu0 0
      %285 = vmatprep.subr.bf16.mxu0 0
      %286 = vmatpush1.bf16.msra.mxu0 0
      %287 = vmatprep.subr.bf16.mxu0 0
      %288 = vmatpush1.bf16.msra.mxu0 0
      %289 = vmatprep.subr.bf16.mxu0 0
      %290 = vmatpush1.bf16.msra.mxu0 0
      %291 = vmatprep.subr.bf16.mxu0 0
      %292 = vmatpush1.bf16.msra.mxu0 0
      %293 = vmatprep.subr.bf16.mxu0 0
      %294 = vmatpush1.bf16.msra.mxu0 0
      %295 = vmatprep.subr.bf16.mxu0 0
      %296 = vmatpush1.bf16.msra.mxu0 0
      %297 = vmatprep.subr.bf16.mxu0 0
      %298 = vmatpush1.bf16.msra.mxu0 0
      %299 = vmatprep.subr.bf16.mxu0 0
      %300 = vmatpush1.bf16.msra.mxu0 0
      %301 = vmatprep.subr.bf16.mxu0 0
      %302 = vmatpush1.bf16.msra.mxu0 0
      %303 = vmatprep.subr.bf16.mxu0 0
      %304 = vmatpush1.bf16.msra.mxu0 0
      %305 = vmatprep.subr.bf16.mxu0 0
      %306 = vmatpush1.bf16.msra.mxu0 0
      %307 = vmatprep.mubr.bf16.mxu0 0
      %308 = vmatmul.mubr.bf16.gmra.mrb[0].mxu0 %v273
      %v309 = vpop.f32.mrb[0].mxu0
      %v310 = vadd.f32 0.0, %v309
      %v311 = vpop.f32.mrb[0].mxu0
      %v312 = vpop.f32.mrb[0].mxu0
      %v313 = vadd.f32 0.0, %v312
      %v314 = vpop.f32.mrb[0].mxu0
      %315 = vdwg.mxu0
      %v316 = vadd.f32 %v172, %v310
      %v317 = vadd.f32 %v173, %v313
      %v318 = vlaneseq
      %v319 = vshrl.u32 %v318, 7
      %v320 = vsub.s32 0, %v319
      %v321 = vrot.slane %v316, %v320
      %v322 = vlaneseq
      %v323 = vshrl.u32 %v322, 7
      %v324 = vsub.s32 7, %v323
      %v325 = vrot.slane %v317, %v324
      %vm328 = vcmask 1041408
      %v329 = vrot.slane %v316, 6
      %v330 = vrot.slane %v317, 6
      %v331 = vsel %vm328, %v329, %v330
      %v335 = vsel %vm328, %v321, %v329
      %v336 = vsel %vm328, %v330, %v325
      %vm339 = vcmask 1046528
      %v340 = vrot.slane %v335, 1
      %v341 = vrot.slane %v331, 1
      %v342 = vsel %vm339, %v340, %v341
      %v343 = vrot.slane %v336, 1
      %v344 = vsel %vm339, %v341, %v343
      %v347 = vadd.f32 %v335, %v342
      %v348 = vadd.f32 %v331, %v344
      %vm349 = vcmask 1045504
      %v350 = vrot.slane %v335, 2
      %v351 = vrot.slane %v331, 2
      %v352 = vsel %vm349, %v350, %v351
      %v353 = vrot.slane %v336, 2
      %v354 = vsel %vm349, %v351, %v353
      %v357 = vadd.f32 %v347, %v352
      %v358 = vadd.f32 %v348, %v354
      %vm359 = vcmask 1044480
      %v360 = vrot.slane %v335, 3
      %v361 = vrot.slane %v331, 3
      %v362 = vsel %vm359, %v360, %v361
      %v363 = vrot.slane %v336, 3
      %v364 = vsel %vm359, %v361, %v363
      %v367 = vadd.f32 %v357, %v362
      %v368 = vadd.f32 %v358, %v364
      %vm369 = vcmask 1043456
      %v370 = vrot.slane %v335, 4
      %v371 = vrot.slane %v331, 4
      %v372 = vsel %vm369, %v370, %v371
      %v373 = vrot.slane %v336, 4
      %v374 = vsel %vm369, %v371, %v373
      %v377 = vadd.f32 %v367, %v372
      %v378 = vadd.f32 %v368, %v374
      %v379 = vmul.f32 %v377, 0.2
      %v380 = vmul.f32 %v378, 0.2
      %v381 = vsub.f32 %v316, %v379
      %v382 = vsub.f32 %v317, %v380
      %383 = vst.msk [vmem:[%s170] sm:$0xff] %vm191, %v381
      %384 = vst.msk [vmem:[%s170 + $0x8] sm:$0xff] %vm191, %v382
      %p385 = scmp.lt.s32.totalorder %s14, 1
      %s386 = scalar_select %p385, %s14, 1
      %s387 = smul.addr %s386, 2
      %s388 = smul.addr %s387, 8
      %s389 = scalar_lea.vmem %s3, %s388
      // Predicated region
      $region33: #{_lambda_.23} parent=31 // pred_check
        %p390 = pneg %p100
      $region34: #{_lambda_.23} parent=31 // pred_check_branch
        %392 = sbr.rel (%p390) target = $region36
      $region35: #{_lambda_.23} parent=31 // pred_region
        _
      $region36: #{_lambda_.23} parent=31 // pred_fallthru
        _
    $region32: #{_lambda_.23} parent=5 // pred_fallthru
      _
    %p393 = scmp.le.s32.totalorder 2, %s9
    // Predicated region
    $region37: #{_lambda_.23} parent=5 // pred_check
      %p394 = pneg %p393
    $region38: #{_lambda_.23} parent=5 // pred_check_branch
      %396 = sbr.rel (%p394) target = $region40
    $region39: #{_lambda_.23} parent=5 // pred_region
      %s397 = ssub.s32 %s9, 2
      // Predicated region
      $region41: #{_lambda_.23} parent=39 // pred_check
        %p398 = pneg %p106
      $region42: #{_lambda_.23} parent=39 // pred_check_branch
        %400 = sbr.rel (%p398) target = $region44
      $region43: #{_lambda_.23} parent=39 // pred_region
        %p401 = scmp.lt.s32.totalorder %s15, 1
        %s402 = scalar_select %p401, %s15, 1
        %s403 = smul.addr %s402, 2
        %s404 = smul.addr %s403, 8
        %s405 = scalar_lea.vmem %s3, %s404
      $region44: #{_lambda_.23} parent=39 // pred_fallthru
        _
    $region40: #{_lambda_.23} parent=5 // pred_fallthru
      _
  $region6: #{_lambda_.23} parent=0 // loop_footer
    %s13 = sadd.s32 1, %s9
  $region7: #{_lambda_.23} parent=0 // loop_footer_branch
    %8 = sbr.rel target = $region3
  $region8: #{_lambda_.23} parent=0 // loop_exit
    _

// kernel: _lambda_.30
$region0: #{_lambda_.30}
  #allocation0 [shape = 'u32[]', space=smem, size = 0x4, offset = 0x4, fixed_abs, tag = 'smem constant byte address 0x4 - core index']
  #allocation1 [shape = 'u32[144,128]{1,0:T(1,128)}', space=vmem, size = 0x12000, scoped, tag = 'internal scratch']
  %s0 = inlined_call_operand.vmem [shape: f32[32,32], index: 0, kind: input, shape index: {}]
  %s1 = inlined_call_operand.vmem [shape: bf16[32,64], index: 1, kind: input, shape index: {}]
  %s2 = inlined_call_operand.vmem [shape: f32[1,64], index: 2, kind: input, shape index: {}]
  %s3 = inlined_call_operand.vmem [shape: f32[32,64], index: 3, kind: output, shape index: {}]
  %s4 = sld [smem:[#allocation0]]
  $region22: #{_lambda_.30} parent=0
    _
  %s6 = ssub.s32 1, %s4
  %s7 = scalar_select 0, %s6, %s4
  // Predicated region
  $region2: #{_lambda_.30} parent=0 // pred_check
    _
  $region3: #{_lambda_.30} parent=0 // pred_check_branch
    %9 = sbr.rel (0) target = $region5
  $region4: #{_lambda_.30} parent=0 // pred_region
    _
  $region5: #{_lambda_.30} parent=0 // pred_fallthru
    _
  // Predicated region
  $region6: #{_lambda_.30} parent=0 // pred_check
    _
  $region7: #{_lambda_.30} parent=0 // pred_check_branch
    %11 = sbr.rel (0) target = $region9
  $region8: #{_lambda_.30} parent=0 // pred_region
    _
  $region9: #{_lambda_.30} parent=0 // pred_fallthru
    _
  // Predicated region
  $region10: #{_lambda_.30} parent=0 // pred_check
    _
  $region11: #{_lambda_.30} parent=0 // pred_check_branch
    %13 = sbr.rel (0) target = $region13
  $region12: #{_lambda_.30} parent=0 // pred_region
    _
  $region13: #{_lambda_.30} parent=0 // pred_fallthru
    _
  %v15 = vld [vmem:[%s0] sm:$0xff]
  %v16 = vld [vmem:[%s0 + $0x8] sm:$0xff]
  %v17 = vld [vmem:[%s0 + $0x10] sm:$0xff]
  %v18 = vld [vmem:[%s0 + $0x18] sm:$0xff]
  %v19 = vpack.c.bf16 %v16, %v15
  %v20 = vpack.c.bf16 %v18, %v17
  %v21 = vld [vmem:[%s1] sm:$0xf]
  %v22 = vld [vmem:[%s1 + $0x4] sm:$0xf]
  %v23 = vld [vmem:[%s1 + $0x8] sm:$0xf]
  %v24 = vld [vmem:[%s1 + $0xc] sm:$0xf]
  %v25 = vld [vmem:[%s2] sm:$0x1]
  %v27 = vlaneseq
  %v28 = vshrl.u32 %v27, 7
  %v29 = vsub.s32 0, %v28
  %v30 = vrot.slane %v25, %v29
  %v36 = vunpack.c.l.b16 %v21
  %v37 = vunpack.c.l.b16 %v22
  %v38 = vunpack.c.l.b16 %v23
  %v39 = vunpack.c.l.b16 %v24
  %v40 = vpack.c.b16 %v37, %v36
  %v41 = vpack.c.b16 %v39, %v38
  %vm44 = vcmask 261120
  %v46 = vsel %vm44, %v19, 0
  %v49 = vsel %vm44, %v20, 0
  %51 = vmatprep.subr.bf16.mxu0 0
  %52 = vmatpush1.bf16.msra.mxu0 %v40
  %53 = vmatprep.subr.bf16.mxu0 0
  %54 = vmatpush1.bf16.msra.mxu0 %v41
  %55 = vmatprep.subr.bf16.mxu0 0
  %56 = vmatpush1.bf16.msra.mxu0 0
  %57 = vmatprep.subr.bf16.mxu0 0
  %58 = vmatpush1.bf16.msra.mxu0 0
  %59 = vmatprep.subr.bf16.mxu0 0
  %60 = vmatpush1.bf16.msra.mxu0 0
  %61 = vmatprep.subr.bf16.mxu0 0
  %62 = vmatpush1.bf16.msra.mxu0 0
  %63 = vmatprep.subr.bf16.mxu0 0
  %64 = vmatpush1.bf16.msra.mxu0 0
  %65 = vmatprep.subr.bf16.mxu0 0
  %66 = vmatpush1.bf16.msra.mxu0 0
  %67 = vmatprep.subr.bf16.mxu0 0
  %68 = vmatpush1.bf16.msra.mxu0 0
  %69 = vmatprep.subr.bf16.mxu0 0
  %70 = vmatpush1.bf16.msra.mxu0 0
  %71 = vmatprep.subr.bf16.mxu0 0
  %72 = vmatpush1.bf16.msra.mxu0 0
  %73 = vmatprep.subr.bf16.mxu0 0
  %74 = vmatpush1.bf16.msra.mxu0 0
  %75 = vmatprep.subr.bf16.mxu0 0
  %76 = vmatpush1.bf16.msra.mxu0 0
  %77 = vmatprep.subr.bf16.mxu0 0
  %78 = vmatpush1.bf16.msra.mxu0 0
  %79 = vmatprep.subr.bf16.mxu0 0
  %80 = vmatpush1.bf16.msra.mxu0 0
  %81 = vmatprep.subr.bf16.mxu0 0
  %82 = vmatpush1.bf16.msra.mxu0 0
  %83 = vmatprep.mubr.bf16.mxu0 0
  %84 = vmatmul.mubr.bf16.gmra.mrb[0].mxu0 %v46
  %v85 = vpop.f32.mrb[0].mxu0
  %v86 = vadd.f32 %v30, %v85
  %v87 = vpop.f32.mrb[0].mxu0
  %v88 = vpop.f32.mrb[0].mxu0
  %v89 = vadd.f32 %v30, %v88
  %v90 = vpop.f32.mrb[0].mxu0
  %91 = vmatprep.mubr.bf16.mxu0 0
  %92 = vmatmul.mubr.bf16.gmra.mrb[0].mxu0 %v49
  %v93 = vpop.f32.mrb[0].mxu0
  %v94 = vadd.f32 %v30, %v93
  %v95 = vpop.f32.mrb[0].mxu0
  %v96 = vpop.f32.mrb[0].mxu0
  %v97 = vadd.f32 %v30, %v96
  %v98 = vpop.f32.mrb[0].mxu0
  %99 = vdwg.mxu0
  %vm100 = vcmask 523264
  %101 = vst.msk [vmem:[%s3] sm:$0xff] %vm100, %v86
  %102 = vst.msk [vmem:[%s3 + $0x8] sm:$0xff] %vm100, %v89
  %103 = vst.msk [vmem:[%s3 + $0x10] sm:$0xff] %vm100, %v94
  %104 = vst.msk [vmem:[%s3 + $0x18] sm:$0xff] %vm100, %v97
  // Predicated region
  $region14: #{_lambda_.30} parent=0 // pred_check
    _
  $region15: #{_lambda_.30} parent=0 // pred_check_branch
    %106 = sbr.rel (0) target = $region17
  $region16: #{_lambda_.30} parent=0 // pred_region
    _
  $region17: #{_lambda_.30} parent=0 // pred_fallthru
    _
  // Predicated region
  $region18: #{_lambda_.30} parent=0 // pred_check
    _
  $region19: #{_lambda_.30} parent=0 // pred_check_branch
    %108 = sbr.rel (0) target = $region21
  $region20: #{_lambda_.30} parent=0 // pred_region
    _
  $region21: #{_lambda_.30} parent=0 // pred_fallthru
    _

// kernel: _lambda_.33
$region0: #{_lambda_.33}
  #allocation0 [shape = 'u32[]', space=smem, size = 0x4, offset = 0x4, fixed_abs, tag = 'smem constant byte address 0x4 - core index']
  #allocation1 [shape = 'u32[144,128]{1,0:T(1,128)}', space=vmem, size = 0x12000, scoped, tag = 'internal scratch']
  %s0 = inlined_call_operand.vmem [shape: f32[2,16,32], index: 0, kind: input, shape index: {}]
  %s1 = inlined_call_operand.vmem [shape: bf16[32,64], index: 1, kind: input, shape index: {}]
  %s2 = inlined_call_operand.vmem [shape: bf16[64,32], index: 2, kind: input, shape index: {}]
  %s3 = inlined_call_operand.vmem [shape: f32[2,16,32], index: 3, kind: output, shape index: {0}]
  %s4 = inlined_call_operand.vmem [shape: f32[2,16,32], index: 4, kind: output, shape index: {1}]
  %5 = xla_tuple %s3, %s4
  %s6 = sld [smem:[#allocation0]]
  $region53: #{_lambda_.33} parent=0
    _
  %s8 = ssub.s32 1, %s6
  %s9 = scalar_select 0, %s8, %s6
  loop: start=0, step=1, limit=4
  $region2: #{_lambda_.33} parent=0 // loop_pre_header
    _
  $region3: #{_lambda_.33} parent=0 // loop_header
    %s11 = sphi 0, %s15
    %p12 = scmp.ge.s32.totalorder %s11, 4
    %s21 = sphi 0, %s23
    %s24 = sphi 0, %s21
    %s25 = sphi 0, %s24
    %s41 = sphi 0, %s25
    %s45 = sphi 0, %s45
    %s47 = sphi 0, %s45
    %s48 = sphi 0, %s47
    %s62 = sphi 0, %s48
    %s66 = sphi 0, %s66
    %s68 = sphi 0, %s66
    %s69 = sphi 0, %s68
    %s83 = sphi 0, %s69
    %s89 = sphi 0, %s91
    %s92 = sphi 0, %s89
    %s93 = sphi 0, %s92
    %s109 = sphi 0, %s93
    %s115 = sphi 0, %s117
    %s118 = sphi 0, %s115
    %s119 = sphi 0, %s118
    %s135 = sphi 0, %s119
  $region4: #{_lambda_.33} parent=0 // loop_header_branch
    %14 = sbr.rel (%p12) target = $region8
  $region5: #{_lambda_.33} parent=0 // loop_body
    %s16 = ssub.s32 %s11, 1
    %s17 = ssub.s32 %s11, 2
    %s18 = sadd.s32 %s11, 1
    %s19 = ssub.s32 %s11, %s18
    %p20 = scmp.eq.s32.totalorder %s19, 0
    %s22 = sadd.s32 %s21, 1
    %s23 = scalar_select %p20, %s21, %s22
    %p26 = pneg %p20
    %p27 = scmp.eq.s32.totalorder %s11, 1
    %p28 = por %p26, %p27
    %p29 = scmp.ne.s32.totalorder %s21, %s24
    %p30 = scmp.eq.s32.totalorder %s11, 0
    %p31 = por %p29, %p30
    %p32 = scmp.ne.s32.totalorder %s21, %s24
    %p33 = scmp.eq.s32.totalorder %s16, 1
    %p34 = por %p32, %p33
    %p35 = scmp.ne.s32.totalorder %s24, %s25
    %p36 = scmp.eq.s32.totalorder %s16, 0
    %p37 = por %p35, %p36
    %p38 = scmp.ne.s32.totalorder %s24, %s25
    %p39 = scmp.eq.s32.totalorder %s17, 1
    %p40 = por %p38, %p39
    %p42 = scmp.ne.s32.totalorder %s25, %s41
    %p43 = scmp.eq.s32.totalorder %s17, 0
    %p44 = por %p42, %p43
    %s46 = sadd.s32 %s45, 1
    %p49 = scmp.eq.s32.totalorder %s11, 1
    %p50 = scmp.ne.s32.totalorder %s45, %s47
    %p51 = scmp.eq.s32.totalorder %s11, 0
    %p52 = por %p50, %p51
    %p53 = scmp.ne.s32.totalorder %s45, %s47
    %p54 = scmp.eq.s32.totalorder %s16, 1
    %p55 = por %p53, %p54
    %p56 = scmp.ne.s32.totalorder %s47, %s48
    %p57 = scmp.eq.s32.totalorder %s16, 0
    %p58 = por %p56, %p57
    %p59 = scmp.ne.s32.totalorder %s47, %s48
    %p60 = scmp.eq.s32.totalorder %s17, 1
    %p61 = por %p59, %p60
    %p63 = scmp.ne.s32.totalorder %s48, %s62
    %p64 = scmp.eq.s32.totalorder %s17, 0
    %p65 = por %p63, %p64
    %s67 = sadd.s32 %s66, 1
    %p70 = scmp.eq.s32.totalorder %s11, 1
    %p71 = scmp.ne.s32.totalorder %s66, %s68
    %p72 = scmp.eq.s32.totalorder %s11, 0
    %p73 = por %p71, %p72
    %p74 = scmp.ne.s32.totalorder %s66, %s68
    %p75 = scmp.eq.s32.totalorder %s16, 1
    %p76 = por %p74, %p75
    %p77 = scmp.ne.s32.totalorder %s68, %s69
    %p78 = scmp.eq.s32.totalorder %s16, 0
    %p79 = por %p77, %p78
    %p80 = scmp.ne.s32.totalorder %s68, %s69
    %p81 = scmp.eq.s32.totalorder %s17, 1
    %p82 = por %p80, %p81
    %p84 = scmp.ne.s32.totalorder %s69, %s83
    %p85 = scmp.eq.s32.totalorder %s17, 0
    %p86 = por %p84, %p85
    %s87 = ssub.s32 %s11, %s18
    %p88 = scmp.eq.s32.totalorder %s87, 0
    %s90 = sadd.s32 %s89, 1
    %s91 = scalar_select %p88, %s89, %s90
    %p94 = pneg %p88
    %p95 = scmp.eq.s32.totalorder %s11, 1
    %p96 = por %p94, %p95
    %p97 = scmp.ne.s32.totalorder %s89, %s92
    %p98 = scmp.eq.s32.totalorder %s11, 0
    %p99 = por %p97, %p98
    %p100 = scmp.ne.s32.totalorder %s89, %s92
    %p101 = scmp.eq.s32.totalorder %s16, 1
    %p102 = por %p100, %p101
    %p103 = scmp.ne.s32.totalorder %s92, %s93
    %p104 = scmp.eq.s32.totalorder %s16, 0
    %p105 = por %p103, %p104
    %p106 = scmp.ne.s32.totalorder %s92, %s93
    %p107 = scmp.eq.s32.totalorder %s17, 1
    %p108 = por %p106, %p107
    %p110 = scmp.ne.s32.totalorder %s93, %s109
    %p111 = scmp.eq.s32.totalorder %s17, 0
    %p112 = por %p110, %p111
    %s113 = ssub.s32 %s11, %s18
    %p114 = scmp.eq.s32.totalorder %s113, 0
    %s116 = sadd.s32 %s115, 1
    %s117 = scalar_select %p114, %s115, %s116
    %p120 = pneg %p114
    %p121 = scmp.eq.s32.totalorder %s11, 1
    %p122 = por %p120, %p121
    %p123 = scmp.ne.s32.totalorder %s115, %s118
    %p124 = scmp.eq.s32.totalorder %s11, 0
    %p125 = por %p123, %p124
    %p126 = scmp.ne.s32.totalorder %s115, %s118
    %p127 = scmp.eq.s32.totalorder %s16, 1
    %p128 = por %p126, %p127
    %p129 = scmp.ne.s32.totalorder %s118, %s119
    %p130 = scmp.eq.s32.totalorder %s16, 0
    %p131 = por %p129, %p130
    %p132 = scmp.ne.s32.totalorder %s118, %s119
    %p133 = scmp.eq.s32.totalorder %s17, 1
    %p134 = por %p132, %p133
    %p136 = scmp.ne.s32.totalorder %s119, %s135
    %p137 = scmp.eq.s32.totalorder %s17, 0
    %p138 = por %p136, %p137
    %p139 = scmp.le.s32.totalorder 1, %s11
    %p140 = scmp.lt.s32.totalorder %s11, 3
    %p141 = pnand %p139, %p140
    %p142 = pneg %p141
    // Predicated region
    $region9: #{_lambda_.33} parent=5 // pred_check
      _
    $region10: #{_lambda_.33} parent=5 // pred_check_branch
      %144 = sbr.rel (%p141) target = $region12
    $region11: #{_lambda_.33} parent=5 // pred_region
      %s145 = ssub.s32 %s11, 1
      // Predicated region
      $region13: #{_lambda_.33} parent=11 // pred_check
        %p146 = pneg %p58
      $region14: #{_lambda_.33} parent=11 // pred_check_branch
        %148 = sbr.rel (%p146) target = $region16
      $region15: #{_lambda_.33} parent=11 // pred_region
        _
      $region16: #{_lambda_.33} parent=11 // pred_fallthru
        _
      // Predicated region
      $region17: #{_lambda_.33} parent=11 // pred_check
        %p149 = pneg %p79
      $region18: #{_lambda_.33} parent=11 // pred_check_branch
        %151 = sbr.rel (%p149) target = $region20
      $region19: #{_lambda_.33} parent=11 // pred_region
        _
      $region20: #{_lambda_.33} parent=11 // pred_fallthru
        _
    $region12: #{_lambda_.33} parent=5 // pred_fallthru
      _
    %p152 = scmp.lt.s32.totalorder %s11, 2
    // Predicated region
    $region21: #{_lambda_.33} parent=5 // pred_check
      %p153 = pneg %p152
    $region22: #{_lambda_.33} parent=5 // pred_check_branch
      %155 = sbr.rel (%p153) target = $region24
    $region23: #{_lambda_.33} parent=5 // pred_region
      // Predicated region
      $region25: #{_lambda_.33} parent=23 // pred_check
        %p156 = pneg %p31
      $region26: #{_lambda_.33} parent=23 // pred_check_branch
        %158 = sbr.rel (%p156) target = $region28
      $region27: #{_lambda_.33} parent=23 // pred_region
        %p159 = scmp.lt.s32.totalorder %s11, 1
        %s160 = scalar_select %p159, %s11, 1
        %s161 = smul.addr %s160, 2
        %s162 = smul.addr %s161, 8
        %s163 = scalar_lea.vmem %s0, %s162
      $region28: #{_lambda_.33} parent=23 // pred_fallthru
        _
    $region24: #{_lambda_.33} parent=5 // pred_fallthru
      _
    %p164 = scmp.le.s32.totalorder 1, %s11
    %p165 = scmp.lt.s32.totalorder %s11, 3
    %p166 = pnand %p164, %p165
    %p167 = pneg %p166
    // Predicated region
    $region29: #{_lambda_.33} parent=5 // pred_check
      _
    $region30: #{_lambda_.33} parent=5 // pred_check_branch
      %169 = sbr.rel (%p166) target = $region32
    $region31: #{_lambda_.33} parent=5 // pred_region
      %s170 = ssub.s32 %s11, 1
      %p171 = scmp.lt.s32.totalorder %s16, 1
      %s172 = scalar_select %p171, %s16, 1
      %s173 = smul.addr %s172, 2
      %s174 = smul.addr %s173, 8
      %s175 = scalar_lea.vmem %s0, %s174
      %p176 = pneg %p37
      %p177 = pneg %p34
      %p178 = pneg %p58
      %p179 = pneg %p55
      %p180 = pneg %p79
      %p181 = pneg %p76
      %p182 = pneg %p105
      %p183 = pneg %p102
      %p184 = scmp.lt.s32.totalorder %s16, 1
      %s185 = scalar_select %p184, %s16, 1
      %s186 = smul.addr %s185, 2
      %s187 = smul.addr %s186, 8
      %s188 = scalar_lea.vmem %s3, %s187
      %p189 = pneg %p131
      %p190 = pneg %p128
      %p191 = scmp.lt.s32.totalorder %s16, 1
      %s192 = scalar_select %p191, %s16, 1
      %s193 = smul.addr %s192, 2
      %s194 = smul.addr %s193, 8
      %s195 = scalar_lea.vmem %s4, %s194
      %p196 = scmp.lt.s32.totalorder %s16, 1
      %s197 = scalar_select %p196, %s16, 1
      %s198 = smul.addr %s197, 2
      %s199 = smul.addr %s198, 8
      %s200 = scalar_lea.vmem %s0, %s199
      %p201 = scmp.lt.s32.totalorder %s16, 1
      %s202 = scalar_select %p201, %s16, 1
      %s203 = smul.addr %s202, 2
      %s204 = smul.addr %s203, 8
      %s205 = scalar_lea.vmem %s3, %s204
      %p206 = scmp.lt.s32.totalorder %s16, 1
      %s207 = scalar_select %p206, %s16, 1
      %s208 = smul.addr %s207, 2
      %s209 = smul.addr %s208, 8
      %s210 = scalar_lea.vmem %s4, %s209
      %v212 = vld [vmem:[%s200] sm:$0xff]
      %v213 = vld [vmem:[%s200 + $0x8] sm:$0xff]
      %v214 = vpack.c.bf16 %v213, %v212
      %v215 = vld [vmem:[%s1] sm:$0xf]
      %v216 = vld [vmem:[%s1 + $0x4] sm:$0xf]
      %v217 = vld [vmem:[%s1 + $0x8] sm:$0xf]
      %v218 = vld [vmem:[%s1 + $0xc] sm:$0xf]
      %v223 = vunpack.c.l.b16 %v215
      %v224 = vunpack.c.l.b16 %v216
      %v225 = vunpack.c.l.b16 %v217
      %v226 = vunpack.c.l.b16 %v218
      %v227 = vpack.c.b16 %v224, %v223
      %v228 = vpack.c.b16 %v226, %v225
      %vm231 = vcmask 261120
      %v233 = vsel %vm231, %v214, 0
      %235 = vmatprep.subr.bf16.mxu0 0
      %236 = vmatpush1.bf16.msra.mxu0 %v227
      %237 = vmatprep.subr.bf16.mxu0 0
      %238 = vmatpush1.bf16.msra.mxu0 %v228
      %239 = vmatprep.subr.bf16.mxu0 0
      %240 = vmatpush1.bf16.msra.mxu0 0
      %241 = vmatprep.subr.bf16.mxu0 0
      %242 = vmatpush1.bf16.msra.mxu0 0
      %243 = vmatprep.subr.bf16.mxu0 0
      %244 = vmatpush1.bf16.msra.mxu0 0
      %245 = vmatprep.subr.bf16.mxu0 0
      %246 = vmatpush1.bf16.msra.mxu0 0
      %247 = vmatprep.subr.bf16.mxu0 0
      %248 = vmatpush1.bf16.msra.mxu0 0
      %249 = vmatprep.subr.bf16.mxu0 0
      %250 = vmatpush1.bf16.msra.mxu0 0
      %251 = vmatprep.subr.bf16.mxu0 0
      %252 = vmatpush1.bf16.msra.mxu0 0
      %253 = vmatprep.subr.bf16.mxu0 0
      %254 = vmatpush1.bf16.msra.mxu0 0
      %255 = vmatprep.subr.bf16.mxu0 0
      %256 = vmatpush1.bf16.msra.mxu0 0
      %257 = vmatprep.subr.bf16.mxu0 0
      %258 = vmatpush1.bf16.msra.mxu0 0
      %259 = vmatprep.subr.bf16.mxu0 0
      %260 = vmatpush1.bf16.msra.mxu0 0
      %261 = vmatprep.subr.bf16.mxu0 0
      %262 = vmatpush1.bf16.msra.mxu0 0
      %263 = vmatprep.subr.bf16.mxu0 0
      %264 = vmatpush1.bf16.msra.mxu0 0
      %265 = vmatprep.subr.bf16.mxu0 0
      %266 = vmatpush1.bf16.msra.mxu0 0
      %267 = vmatprep.mubr.bf16.mxu0 0
      %268 = vmatmul.mubr.bf16.gmra.mrb[0].mxu0 %v233
      %v269 = vpop.f32.mrb[0].mxu0
      %v270 = vadd.f32 0.0, %v269
      %v271 = vpop.f32.mrb[0].mxu0
      %v272 = vpop.f32.mrb[0].mxu0
      %v273 = vadd.f32 0.0, %v272
      %v274 = vpop.f32.mrb[0].mxu0
      %275 = vdwg.mxu0
      %v276 = vmax.f32 %v270, 0.0
      %v277 = vmax.f32 %v273, 0.0
      %v278 = vpack.c.bf16 %v277, %v276
      %v279 = vld [vmem:[%s2] sm:$0xf]
      %v280 = vld [vmem:[%s2 + $0x4] sm:$0xf]
      %v281 = vld [vmem:[%s2 + $0x8] sm:$0xf]
      %v282 = vld [vmem:[%s2 + $0xc] sm:$0xf]
      %v283 = vld [vmem:[%s2 + $0x10] sm:$0xf]
      %v284 = vld [vmem:[%s2 + $0x14] sm:$0xf]
      %v285 = vld [vmem:[%s2 + $0x18] sm:$0xf]
      %v286 = vld [vmem:[%s2 + $0x1c] sm:$0xf]
      %v295 = vunpack.c.l.b16 %v279
      %v296 = vunpack.c.l.b16 %v280
      %v297 = vunpack.c.l.b16 %v281
      %v298 = vunpack.c.l.b16 %v282
      %v299 = vunpack.c.l.b16 %v283
      %v300 = vunpack.c.l.b16 %v284
      %v301 = vunpack.c.l.b16 %v285
      %v302 = vunpack.c.l.b16 %v286
      %v303 = vpack.c.b16 %v296, %v295
      %v304 = vpack.c.b16 %v298, %v297
      %v305 = vpack.c.b16 %v300, %v299
      %v306 = vpack.c.b16 %v302, %v301
      %vm311 = vcmask 523264
      %v313 = vsel %vm311, %v278, 0
      %315 = vmatprep.subr.bf16.mxu0 0
      %316 = vmatpush1.bf16.msra.mxu0 %v303
      %317 = vmatprep.subr.bf16.mxu0 0
      %318 = vmatpush1.bf16.msra.mxu0 %v304
      %319 = vmatprep.subr.bf16.mxu0 0
      %320 = vmatpush1.bf16.msra.mxu0 %v305
      %321 = vmatprep.subr.bf16.mxu0 0
      %322 = vmatpush1.bf16.msra.mxu0 %v306
      %323 = vmatprep.subr.bf16.mxu0 0
      %324 = vmatpush1.bf16.msra.mxu0 0
      %325 = vmatprep.subr.bf16.mxu0 0
      %326 = vmatpush1.bf16.msra.mxu0 0
      %327 = vmatprep.subr.bf16.mxu0 0
      %328 = vmatpush1.bf16.msra.mxu0 0
      %329 = vmatprep.subr.bf16.mxu0 0
      %330 = vmatpush1.bf16.msra.mxu0 0
      %331 = vmatprep.subr.bf16.mxu0 0
      %332 = vmatpush1.bf16.msra.mxu0 0
      %333 = vmatprep.subr.bf16.mxu0 0
      %334 = vmatpush1.bf16.msra.mxu0 0
      %335 = vmatprep.subr.bf16.mxu0 0
      %336 = vmatpush1.bf16.msra.mxu0 0
      %337 = vmatprep.subr.bf16.mxu0 0
      %338 = vmatpush1.bf16.msra.mxu0 0
      %339 = vmatprep.subr.bf16.mxu0 0
      %340 = vmatpush1.bf16.msra.mxu0 0
      %341 = vmatprep.subr.bf16.mxu0 0
      %342 = vmatpush1.bf16.msra.mxu0 0
      %343 = vmatprep.subr.bf16.mxu0 0
      %344 = vmatpush1.bf16.msra.mxu0 0
      %345 = vmatprep.subr.bf16.mxu0 0
      %346 = vmatpush1.bf16.msra.mxu0 0
      %347 = vmatprep.mubr.bf16.mxu0 0
      %348 = vmatmul.mubr.bf16.gmra.mrb[0].mxu0 %v313
      %v349 = vpop.f32.mrb[0].mxu0
      %v350 = vadd.f32 0.0, %v349
      %v351 = vpop.f32.mrb[0].mxu0
      %v352 = vpop.f32.mrb[0].mxu0
      %v353 = vadd.f32 0.0, %v352
      %v354 = vpop.f32.mrb[0].mxu0
      %355 = vdwg.mxu0
      %v356 = vadd.f32 %v212, %v350
      %v357 = vadd.f32 %v213, %v353
      %v358 = vlaneseq
      %v359 = vshrl.u32 %v358, 7
      %v360 = vsub.s32 0, %v359
      %v361 = vrot.slane %v356, %v360
      %v362 = vlaneseq
      %v363 = vshrl.u32 %v362, 7
      %v364 = vsub.s32 7, %v363
      %v365 = vrot.slane %v357, %v364
      %vm368 = vcmask 1041408
      %v369 = vrot.slane %v356, 6
      %v370 = vrot.slane %v357, 6
      %v371 = vsel %vm368, %v369, %v370
      %v375 = vsel %vm368, %v361, %v369
      %v376 = vsel %vm368, %v370, %v365
      %vm379 = vcmask 1046528
      %v380 = vrot.slane %v375, 1
      %v381 = vrot.slane %v371, 1
      %v382 = vsel %vm379, %v380, %v381
      %v383 = vrot.slane %v376, 1
      %v384 = vsel %vm379, %v381, %v383
      %v387 = vadd.f32 %v375, %v382
      %v388 = vadd.f32 %v371, %v384
      %vm389 = vcmask 1045504
      %v390 = vrot.slane %v375, 2
      %v391 = vrot.slane %v371, 2
      %v392 = vsel %vm389, %v390, %v391
      %v393 = vrot.slane %v376, 2
      %v394 = vsel %vm389, %v391, %v393
      %v397 = vadd.f32 %v387, %v392
      %v398 = vadd.f32 %v388, %v394
      %vm399 = vcmask 1044480
      %v400 = vrot.slane %v375, 3
      %v401 = vrot.slane %v371, 3
      %v402 = vsel %vm399, %v400, %v401
      %v403 = vrot.slane %v376, 3
      %v404 = vsel %vm399, %v401, %v403
      %v407 = vadd.f32 %v397, %v402
      %v408 = vadd.f32 %v398, %v404
      %vm409 = vcmask 1043456
      %v410 = vrot.slane %v375, 4
      %v411 = vrot.slane %v371, 4
      %v412 = vsel %vm409, %v410, %v411
      %v413 = vrot.slane %v376, 4
      %v414 = vsel %vm409, %v411, %v413
      %v417 = vadd.f32 %v407, %v412
      %v418 = vadd.f32 %v408, %v414
      %v419 = vmul.f32 %v417, 0.2
      %v420 = vmul.f32 %v418, 0.2
      %v421 = vsub.f32 %v356, %v419
      %v422 = vsub.f32 %v357, %v420
      %423 = vst.msk [vmem:[%s205] sm:$0xff] %vm231, %v421
      %424 = vst.msk [vmem:[%s205 + $0x8] sm:$0xff] %vm231, %v422
      %425 = vst.msk [vmem:[%s210] sm:$0xff] %vm231, %v419
      %426 = vst.msk [vmem:[%s210 + $0x8] sm:$0xff] %vm231, %v420
      %p427 = scmp.lt.s32.totalorder %s16, 1
      %s428 = scalar_select %p427, %s16, 1
      %s429 = smul.addr %s428, 2
      %s430 = smul.addr %s429, 8
      %s431 = scalar_lea.vmem %s3, %s430
      %p432 = scmp.lt.s32.totalorder %s16, 1
      %s433 = scalar_select %p432, %s16, 1
      %s434 = smul.addr %s433, 2
      %s435 = smul.addr %s434, 8
      %s436 = scalar_lea.vmem %s4, %s435
      // Predicated region
      $region33: #{_lambda_.33} parent=31 // pred_check
        %p437 = pneg %p102
      $region34: #{_lambda_.33} parent=31 // pred_check_branch
        %439 = sbr.rel (%p437) target = $region36
      $region35: #{_lambda_.33} parent=31 // pred_region
        _
      $region36: #{_lambda_.33} parent=31 // pred_fallthru
        _
      // Predicated region
      $region37: #{_lambda_.33} parent=31 // pred_check
        %p440 = pneg %p128
      $region38: #{_lambda_.33} parent=31 // pred_check_branch
        %442 = sbr.rel (%p440) target = $region40
      $region39: #{_lambda_.33} parent=31 // pred_region
        _
      $region40: #{_lambda_.33} parent=31 // pred_fallthru
        _
    $region32: #{_lambda_.33} parent=5 // pred_fallthru
      _
    %p443 = scmp.le.s32.totalorder 2, %s11
    // Predicated region
    $region41: #{_lambda_.33} parent=5 // pred_check
      %p444 = pneg %p443
    $region42: #{_lambda_.33} parent=5 // pred_check_branch
      %446 = sbr.rel (%p444) target = $region44
    $region43: #{_lambda_.33} parent=5 // pred_region
      %s447 = ssub.s32 %s11, 2
      // Predicated region
      $region45: #{_lambda_.33} parent=43 // pred_check
        %p448 = pneg %p108
      $region46: #{_lambda_.33} parent=43 // pred_check_branch
        %450 = sbr.rel (%p448) target = $region48
      $region47: #{_lambda_.33} parent=43 // pred_region
        %p451 = scmp.lt.s32.totalorder %s17, 1
        %s452 = scalar_select %p451, %s17, 1
        %s453 = smul.addr %s452, 2
        %s454 = smul.addr %s453, 8
        %s455 = scalar_lea.vmem %s3, %s454
      $region48: #{_lambda_.33} parent=43 // pred_fallthru
        _
      // Predicated region
      $region49: #{_lambda_.33} parent=43 // pred_check
        %p456 = pneg %p134
      $region50: #{_lambda_.33} parent=43 // pred_check_branch
        %458 = sbr.rel (%p456) target = $region52
      $region51: #{_lambda_.33} parent=43 // pred_region
        %p459 = scmp.lt.s32.totalorder %s17, 1
        %s460 = scalar_select %p459, %s17, 1
        %s461 = smul.addr %s460, 2
        %s462 = smul.addr %s461, 8
        %s463 = scalar_lea.vmem %s4, %s462
      $region52: #{_lambda_.33} parent=43 // pred_fallthru
        _
    $region44: #{_lambda_.33} parent=5 // pred_fallthru
      _
  $region6: #{_lambda_.33} parent=0 // loop_footer
    %s15 = sadd.s32 1, %s11
  $region7: #{_lambda_.33} parent=0 // loop_footer_branch
    %10 = sbr.rel target = $region3
  $region8: #{_lambda_.33} parent=0 // loop_exit
    _

// kernel: _lambda_.34
$region0: #{_lambda_.34}
  #allocation0 [shape = 'u32[]', space=smem, size = 0x4, offset = 0x4, fixed_abs, tag = 'smem constant byte address 0x4 - core index']
  #allocation1 [shape = 'u32[144,128]{1,0:T(1,128)}', space=vmem, size = 0x12000, scoped, tag = 'internal scratch']
  %s0 = inlined_call_operand.vmem [shape: f32[2,16,32], index: 0, kind: input, shape index: {}]
  %s1 = inlined_call_operand.vmem [shape: f32[2,16,32], index: 1, kind: input, shape index: {}]
  %s2 = inlined_call_operand.vmem [shape: f32[2,16,32], index: 2, kind: input, shape index: {}]
  %s3 = inlined_call_operand.vmem [shape: f32[2,16,4], index: 3, kind: input, shape index: {}]
  %s4 = inlined_call_operand.vmem [shape: bf16[96,4], index: 4, kind: input, shape index: {}]
  %s5 = inlined_call_operand.vmem [shape: f32[2,16,4], index: 5, kind: output, shape index: {}]
  %s6 = sld [smem:[#allocation0]]
  $region53: #{_lambda_.34} parent=0
    _
  %s8 = ssub.s32 1, %s6
  %s9 = scalar_select 0, %s8, %s6
  loop: start=0, step=1, limit=4
  $region2: #{_lambda_.34} parent=0 // loop_pre_header
    _
  $region3: #{_lambda_.34} parent=0 // loop_header
    %s11 = sphi 0, %s15
    %p12 = scmp.ge.s32.totalorder %s11, 4
    %s21 = sphi 0, %s23
    %s24 = sphi 0, %s21
    %s25 = sphi 0, %s24
    %s41 = sphi 0, %s25
    %s47 = sphi 0, %s49
    %s50 = sphi 0, %s47
    %s51 = sphi 0, %s50
    %s67 = sphi 0, %s51
    %s73 = sphi 0, %s75
    %s76 = sphi 0, %s73
    %s77 = sphi 0, %s76
    %s93 = sphi 0, %s77
    %s99 = sphi 0, %s101
    %s102 = sphi 0, %s99
    %s103 = sphi 0, %s102
    %s119 = sphi 0, %s103
    %s123 = sphi 0, %s123
    %s125 = sphi 0, %s123
    %s126 = sphi 0, %s125
    %s140 = sphi 0, %s126
    %s146 = sphi 0, %s148
    %s149 = sphi 0, %s146
    %s150 = sphi 0, %s149
    %s166 = sphi 0, %s150
  $region4: #{_lambda_.34} parent=0 // loop_header_branch
    %14 = sbr.rel (%p12) target = $region8
  $region5: #{_lambda_.34} parent=0 // loop_body
    %s16 = ssub.s32 %s11, 1
    %s17 = ssub.s32 %s11, 2
    %s18 = sadd.s32 %s11, 1
    %s19 = ssub.s32 %s11, %s18
    %p20 = scmp.eq.s32.totalorder %s19, 0
    %s22 = sadd.s32 %s21, 1
    %s23 = scalar_select %p20, %s21, %s22
    %p26 = pneg %p20
    %p27 = scmp.eq.s32.totalorder %s11, 1
    %p28 = por %p26, %p27
    %p29 = scmp.ne.s32.totalorder %s21, %s24
    %p30 = scmp.eq.s32.totalorder %s11, 0
    %p31 = por %p29, %p30
    %p32 = scmp.ne.s32.totalorder %s21, %s24
    %p33 = scmp.eq.s32.totalorder %s16, 1
    %p34 = por %p32, %p33
    %p35 = scmp.ne.s32.totalorder %s24, %s25
    %p36 = scmp.eq.s32.totalorder %s16, 0
    %p37 = por %p35, %p36
    %p38 = scmp.ne.s32.totalorder %s24, %s25
    %p39 = scmp.eq.s32.totalorder %s17, 1
    %p40 = por %p38, %p39
    %p42 = scmp.ne.s32.totalorder %s25, %s41
    %p43 = scmp.eq.s32.totalorder %s17, 0
    %p44 = por %p42, %p43
    %s45 = ssub.s32 %s11, %s18
    %p46 = scmp.eq.s32.totalorder %s45, 0
    %s48 = sadd.s32 %s47, 1
    %s49 = scalar_select %p46, %s47, %s48
    %p52 = pneg %p46
    %p53 = scmp.eq.s32.totalorder %s11, 1
    %p54 = por %p52, %p53
    %p55 = scmp.ne.s32.totalorder %s47, %s50
    %p56 = scmp.eq.s32.totalorder %s11, 0
    %p57 = por %p55, %p56
    %p58 = scmp.ne.s32.totalorder %s47, %s50
    %p59 = scmp.eq.s32.totalorder %s16, 1
    %p60 = por %p58, %p59
    %p61 = scmp.ne.s32.totalorder %s50, %s51
    %p62 = scmp.eq.s32.totalorder %s16, 0
    %p63 = por %p61, %p62
    %p64 = scmp.ne.s32.totalorder %s50, %s51
    %p65 = scmp.eq.s32.totalorder %s17, 1
    %p66 = por %p64, %p65
    %p68 = scmp.ne.s32.totalorder %s51, %s67
    %p69 = scmp.eq.s32.totalorder %s17, 0
    %p70 = por %p68, %p69
    %s71 = ssub.s32 %s11, %s18
    %p72 = scmp.eq.s32.totalorder %s71, 0
    %s74 = sadd.s32 %s73, 1
    %s75 = scalar_select %p72, %s73, %s74
    %p78 = pneg %p72
    %p79 = scmp.eq.s32.totalorder %s11, 1
    %p80 = por %p78, %p79
    %p81 = scmp.ne.s32.totalorder %s73, %s76
    %p82 = scmp.eq.s32.totalorder %s11, 0
    %p83 = por %p81, %p82
    %p84 = scmp.ne.s32.totalorder %s73, %s76
    %p85 = scmp.eq.s32.totalorder %s16, 1
    %p86 = por %p84, %p85
    %p87 = scmp.ne.s32.totalorder %s76, %s77
    %p88 = scmp.eq.s32.totalorder %s16, 0
    %p89 = por %p87, %p88
    %p90 = scmp.ne.s32.totalorder %s76, %s77
    %p91 = scmp.eq.s32.totalorder %s17, 1
    %p92 = por %p90, %p91
    %p94 = scmp.ne.s32.totalorder %s77, %s93
    %p95 = scmp.eq.s32.totalorder %s17, 0
    %p96 = por %p94, %p95
    %s97 = ssub.s32 %s11, %s18
    %p98 = scmp.eq.s32.totalorder %s97, 0
    %s100 = sadd.s32 %s99, 1
    %s101 = scalar_select %p98, %s99, %s100
    %p104 = pneg %p98
    %p105 = scmp.eq.s32.totalorder %s11, 1
    %p106 = por %p104, %p105
    %p107 = scmp.ne.s32.totalorder %s99, %s102
    %p108 = scmp.eq.s32.totalorder %s11, 0
    %p109 = por %p107, %p108
    %p110 = scmp.ne.s32.totalorder %s99, %s102
    %p111 = scmp.eq.s32.totalorder %s16, 1
    %p112 = por %p110, %p111
    %p113 = scmp.ne.s32.totalorder %s102, %s103
    %p114 = scmp.eq.s32.totalorder %s16, 0
    %p115 = por %p113, %p114
    %p116 = scmp.ne.s32.totalorder %s102, %s103
    %p117 = scmp.eq.s32.totalorder %s17, 1
    %p118 = por %p116, %p117
    %p120 = scmp.ne.s32.totalorder %s103, %s119
    %p121 = scmp.eq.s32.totalorder %s17, 0
    %p122 = por %p120, %p121
    %s124 = sadd.s32 %s123, 1
    %p127 = scmp.eq.s32.totalorder %s11, 1
    %p128 = scmp.ne.s32.totalorder %s123, %s125
    %p129 = scmp.eq.s32.totalorder %s11, 0
    %p130 = por %p128, %p129
    %p131 = scmp.ne.s32.totalorder %s123, %s125
    %p132 = scmp.eq.s32.totalorder %s16, 1
    %p133 = por %p131, %p132
    %p134 = scmp.ne.s32.totalorder %s125, %s126
    %p135 = scmp.eq.s32.totalorder %s16, 0
    %p136 = por %p134, %p135
    %p137 = scmp.ne.s32.totalorder %s125, %s126
    %p138 = scmp.eq.s32.totalorder %s17, 1
    %p139 = por %p137, %p138
    %p141 = scmp.ne.s32.totalorder %s126, %s140
    %p142 = scmp.eq.s32.totalorder %s17, 0
    %p143 = por %p141, %p142
    %s144 = ssub.s32 %s11, %s18
    %p145 = scmp.eq.s32.totalorder %s144, 0
    %s147 = sadd.s32 %s146, 1
    %s148 = scalar_select %p145, %s146, %s147
    %p151 = pneg %p145
    %p152 = scmp.eq.s32.totalorder %s11, 1
    %p153 = por %p151, %p152
    %p154 = scmp.ne.s32.totalorder %s146, %s149
    %p155 = scmp.eq.s32.totalorder %s11, 0
    %p156 = por %p154, %p155
    %p157 = scmp.ne.s32.totalorder %s146, %s149
    %p158 = scmp.eq.s32.totalorder %s16, 1
    %p159 = por %p157, %p158
    %p160 = scmp.ne.s32.totalorder %s149, %s150
    %p161 = scmp.eq.s32.totalorder %s16, 0
    %p162 = por %p160, %p161
    %p163 = scmp.ne.s32.totalorder %s149, %s150
    %p164 = scmp.eq.s32.totalorder %s17, 1
    %p165 = por %p163, %p164
    %p167 = scmp.ne.s32.totalorder %s150, %s166
    %p168 = scmp.eq.s32.totalorder %s17, 0
    %p169 = por %p167, %p168
    %p170 = scmp.le.s32.totalorder 1, %s11
    %p171 = scmp.lt.s32.totalorder %s11, 3
    %p172 = pnand %p170, %p171
    %p173 = pneg %p172
    // Predicated region
    $region9: #{_lambda_.34} parent=5 // pred_check
      _
    $region10: #{_lambda_.34} parent=5 // pred_check_branch
      %175 = sbr.rel (%p172) target = $region12
    $region11: #{_lambda_.34} parent=5 // pred_region
      %s176 = ssub.s32 %s11, 1
      // Predicated region
      $region13: #{_lambda_.34} parent=11 // pred_check
        %p177 = pneg %p136
      $region14: #{_lambda_.34} parent=11 // pred_check_branch
        %179 = sbr.rel (%p177) target = $region16
      $region15: #{_lambda_.34} parent=11 // pred_region
        _
      $region16: #{_lambda_.34} parent=11 // pred_fallthru
        _
    $region12: #{_lambda_.34} parent=5 // pred_fallthru
      _
    %p180 = scmp.lt.s32.totalorder %s11, 2
    // Predicated region
    $region17: #{_lambda_.34} parent=5 // pred_check
      %p181 = pneg %p180
    $region18: #{_lambda_.34} parent=5 // pred_check_branch
      %183 = sbr.rel (%p181) target = $region20
    $region19: #{_lambda_.34} parent=5 // pred_region
      // Predicated region
      $region21: #{_lambda_.34} parent=19 // pred_check
        %p184 = pneg %p31
      $region22: #{_lambda_.34} parent=19 // pred_check_branch
        %186 = sbr.rel (%p184) target = $region24
      $region23: #{_lambda_.34} parent=19 // pred_region
        %p187 = scmp.lt.s32.totalorder %s11, 1
        %s188 = scalar_select %p187, %s11, 1
        %s189 = smul.addr %s188, 2
        %s190 = smul.addr %s189, 8
        %s191 = scalar_lea.vmem %s0, %s190
      $region24: #{_lambda_.34} parent=19 // pred_fallthru
        _
      // Predicated region
      $region25: #{_lambda_.34} parent=19 // pred_check
        %p192 = pneg %p57
      $region26: #{_lambda_.34} parent=19 // pred_check_branch
        %194 = sbr.rel (%p192) target = $region28
      $region27: #{_lambda_.34} parent=19 // pred_region
        %p195 = scmp.lt.s32.totalorder %s11, 1
        %s196 = scalar_select %p195, %s11, 1
        %s197 = smul.addr %s196, 2
        %s198 = smul.addr %s197, 8
        %s199 = scalar_lea.vmem %s1, %s198
      $region28: #{_lambda_.34} parent=19 // pred_fallthru
        _
      // Predicated region
      $region29: #{_lambda_.34} parent=19 // pred_check
        %p200 = pneg %p83
      $region30: #{_lambda_.34} parent=19 // pred_check_branch
        %202 = sbr.rel (%p200) target = $region32
      $region31: #{_lambda_.34} parent=19 // pred_region
        %p203 = scmp.lt.s32.totalorder %s11, 1
        %s204 = scalar_select %p203, %s11, 1
        %s205 = smul.addr %s204, 2
        %s206 = smul.addr %s205, 8
        %s207 = scalar_lea.vmem %s2, %s206
      $region32: #{_lambda_.34} parent=19 // pred_fallthru
        _
      // Predicated region
      $region33: #{_lambda_.34} parent=19 // pred_check
        %p208 = pneg %p109
      $region34: #{_lambda_.34} parent=19 // pred_check_branch
        %210 = sbr.rel (%p208) target = $region36
      $region35: #{_lambda_.34} parent=19 // pred_region
        %p211 = scmp.lt.s32.totalorder %s11, 1
        %s212 = scalar_select %p211, %s11, 1
        %s213 = smul.addr %s212, 2
        %s214 = smul.addr %s213, 8
        %s215 = scalar_lea.vmem %s3, %s214
      $region36: #{_lambda_.34} parent=19 // pred_fallthru
        _
    $region20: #{_lambda_.34} parent=5 // pred_fallthru
      _
    %p216 = scmp.le.s32.totalorder 1, %s11
    %p217 = scmp.lt.s32.totalorder %s11, 3
    %p218 = pnand %p216, %p217
    %p219 = pneg %p218
    // Predicated region
    $region37: #{_lambda_.34} parent=5 // pred_check
      _
    $region38: #{_lambda_.34} parent=5 // pred_check_branch
      %221 = sbr.rel (%p218) target = $region40
    $region39: #{_lambda_.34} parent=5 // pred_region
      %s222 = ssub.s32 %s11, 1
      %p223 = scmp.lt.s32.totalorder %s16, 1
      %s224 = scalar_select %p223, %s16, 1
      %s225 = smul.addr %s224, 2
      %s226 = smul.addr %s225, 8
      %s227 = scalar_lea.vmem %s0, %s226
      %p228 = pneg %p37
      %p229 = pneg %p34
      %p230 = scmp.lt.s32.totalorder %s16, 1
      %s231 = scalar_select %p230, %s16, 1
      %s232 = smul.addr %s231, 2
      %s233 = smul.addr %s232, 8
      %s234 = scalar_lea.vmem %s1, %s233
      %p235 = pneg %p63
      %p236 = pneg %p60
      %p237 = scmp.lt.s32.totalorder %s16, 1
      %s238 = scalar_select %p237, %s16, 1
      %s239 = smul.addr %s238, 2
      %s240 = smul.addr %s239, 8
      %s241 = scalar_lea.vmem %s2, %s240
      %p242 = pneg %p89
      %p243 = pneg %p86
      %p244 = scmp.lt.s32.totalorder %s16, 1
      %s245 = scalar_select %p244, %s16, 1
      %s246 = smul.addr %s245, 2
      %s247 = smul.addr %s246, 8
      %s248 = scalar_lea.vmem %s3, %s247
      %p249 = pneg %p115
      %p250 = pneg %p112
      %p251 = pneg %p136
      %p252 = pneg %p133
      %p253 = pneg %p162
      %p254 = pneg %p159
      %p255 = scmp.lt.s32.totalorder %s16, 1
      %s256 = scalar_select %p255, %s16, 1
      %s257 = smul.addr %s256, 2
      %s258 = smul.addr %s257, 8
      %s259 = scalar_lea.vmem %s5, %s258
      %p260 = scmp.lt.s32.totalorder %s16, 1
      %s261 = scalar_select %p260, %s16, 1
      %s262 = smul.addr %s261, 2
      %s263 = smul.addr %s262, 8
      %s264 = scalar_lea.vmem %s0, %s263
      %p265 = scmp.lt.s32.totalorder %s16, 1
      %s266 = scalar_select %p265, %s16, 1
      %s267 = smul.addr %s266, 2
      %s268 = smul.addr %s267, 8
      %s269 = scalar_lea.vmem %s1, %s268
      %p270 = scmp.lt.s32.totalorder %s16, 1
      %s271 = scalar_select %p270, %s16, 1
      %s272 = smul.addr %s271, 2
      %s273 = smul.addr %s272, 8
      %s274 = scalar_lea.vmem %s2, %s273
      %p275 = scmp.lt.s32.totalorder %s16, 1
      %s276 = scalar_select %p275, %s16, 1
      %s277 = smul.addr %s276, 2
      %s278 = smul.addr %s277, 8
      %s279 = scalar_lea.vmem %s3, %s278
      %p280 = scmp.lt.s32.totalorder %s16, 1
      %s281 = scalar_select %p280, %s16, 1
      %s282 = smul.addr %s281, 2
      %s283 = smul.addr %s282, 8
      %s284 = scalar_lea.vmem %s5, %s283
      %v286 = vld [vmem:[%s264] sm:$0xff]
      %v287 = vld [vmem:[%s264 + $0x8] sm:$0xff]
      %v288 = vld [vmem:[%s269] sm:$0xff]
      %v289 = vld [vmem:[%s269 + $0x8] sm:$0xff]
      %v290 = vadd.f32 %v286, %v288
      %v291 = vadd.f32 %v287, %v289
      %v292 = vld [vmem:[%s274] sm:$0xff]
      %v293 = vld [vmem:[%s274 + $0x8] sm:$0xff]
      %v294 = vadd.f32 %v290, %v292
      %v295 = vadd.f32 %v291, %v293
      %v296 = vld [vmem:[%s279] sm:$0xff]
      %v297 = vld [vmem:[%s279 + $0x8] sm:$0xff]
      %v299 = vrot.slane %v295, 7
      %vm302 = vcmask 1040384
      %v303 = vrot.slane %v294, 7
      %v304 = vsel %vm302, %v303, %v299
      %v307 = vsel %vm302, %v299, %v303
      %vm308 = vcmask 1046528
      %v309 = vrot.slane %v294, 1
      %v310 = vrot.slane %v295, 1
      %v311 = vsel %vm308, %v309, %v310
      %v314 = vsel %vm308, %v310, %v309
      %315 = vrot.lane.b32.xlu0 %v294, 32
      %v316 = vpop.permute.xlu0 %315
      %317 = vrot.lane.b32.xlu0 %v295, 32
      %v318 = vpop.permute.xlu0 %317
      %322 = vrot.lane.b32.xlu0 %v311, 64
      %v323 = vpop.permute.xlu0 %322
      %324 = vrot.lane.b32.xlu0 %v314, 64
      %v325 = vpop.permute.xlu0 %324
      %vm328 = vcmask 261120
      %v329 = vsel %vm328, %v307, %v316
      %v330 = vsel %vm328, %v304, %v318
      %vm331 = vcmask 523264
      %v332 = vsel %vm331, %v329, %v323
      %v333 = vsel %vm331, %v330, %v325
      %v334 = vpack.c.bf16 %v333, %v332
      %v335 = vld [vmem:[%s4] sm:$0xf]
      %v336 = vld [vmem:[%s4 + $0x4] sm:$0xf]
      %v337 = vld [vmem:[%s4 + $0x8] sm:$0xf]
      %v338 = vld [vmem:[%s4 + $0xc] sm:$0xf]
      %v339 = vld [vmem:[%s4 + $0x10] sm:$0xf]
      %v340 = vld [vmem:[%s4 + $0x14] sm:$0xf]
      %v341 = vld [vmem:[%s4 + $0x18] sm:$0xf]
      %v342 = vld [vmem:[%s4 + $0x1c] sm:$0xf]
      %v343 = vld [vmem:[%s4 + $0x20] sm:$0xf]
      %v344 = vld [vmem:[%s4 + $0x24] sm:$0xf]
      %v345 = vld [vmem:[%s4 + $0x28] sm:$0xf]
      %v346 = vld [vmem:[%s4 + $0x2c] sm:$0xf]
      %v359 = vunpack.c.l.b16 %v335
      %v360 = vunpack.c.l.b16 %v336
      %v361 = vunpack.c.l.b16 %v337
      %v362 = vunpack.c.l.b16 %v338
      %v363 = vunpack.c.l.b16 %v339
      %v364 = vunpack.c.l.b16 %v340
      %v365 = vunpack.c.l.b16 %v341
      %v366 = vunpack.c.l.b16 %v342
      %v367 = vunpack.c.l.b16 %v343
      %v368 = vunpack.c.l.b16 %v344
      %v369 = vunpack.c.l.b16 %v345
      %v370 = vunpack.c.l.b16 %v346
      %v371 = vpack.c.b16 %v360, %v359
      %v372 = vpack.c.b16 %v362, %v361
      %v373 = vpack.c.b16 %v364, %v363
      %v374 = vpack.c.b16 %v366, %v365
      %v375 = vpack.c.b16 %v368, %v367
      %v376 = vpack.c.b16 %v370, %v369
      %vm383 = vcmask 785408
      %v385 = vsel %vm383, %v334, 0
      %387 = vmatprep.subr.bf16.mxu0 0
      %388 = vmatpush1.bf16.msra.mxu0 %v371
      %389 = vmatprep.subr.bf16.mxu0 0
      %390 = vmatpush1.bf16.msra.mxu0 %v372
      %391 = vmatprep.subr.bf16.mxu0 0
      %392 = vmatpush1.bf16.msra.mxu0 %v373
      %393 = vmatprep.subr.bf16.mxu0 0
      %394 = vmatpush1.bf16.msra.mxu0 %v374
      %395 = vmatprep.subr.bf16.mxu0 0
      %396 = vmatpush1.bf16.msra.mxu0 %v375
      %397 = vmatprep.subr.bf16.mxu0 0
      %398 = vmatpush1.bf16.msra.mxu0 %v376
      %399 = vmatprep.subr.bf16.mxu0 0
      %400 = vmatpush1.bf16.msra.mxu0 0
      %401 = vmatprep.subr.bf16.mxu0 0
      %402 = vmatpush1.bf16.msra.mxu0 0
      %403 = vmatprep.subr.bf16.mxu0 0
      %404 = vmatpush1.bf16.msra.mxu0 0
      %405 = vmatprep.subr.bf16.mxu0 0
      %406 = vmatpush1.bf16.msra.mxu0 0
      %407 = vmatprep.subr.bf16.mxu0 0
      %408 = vmatpush1.bf16.msra.mxu0 0
      %409 = vmatprep.subr.bf16.mxu0 0
      %410 = vmatpush1.bf16.msra.mxu0 0
      %411 = vmatprep.subr.bf16.mxu0 0
      %412 = vmatpush1.bf16.msra.mxu0 0
      %413 = vmatprep.subr.bf16.mxu0 0
      %414 = vmatpush1.bf16.msra.mxu0 0
      %415 = vmatprep.subr.bf16.mxu0 0
      %416 = vmatpush1.bf16.msra.mxu0 0
      %417 = vmatprep.subr.bf16.mxu0 0
      %418 = vmatpush1.bf16.msra.mxu0 0
      %419 = vmatprep.mubr.bf16.mxu0 0
      %420 = vmatmul.mubr.bf16.gmra.mrb[0].mxu0 %v385
      %v421 = vpop.f32.mrb[0].mxu0
      %v422 = vadd.f32 %v296, %v421
      %v423 = vpop.f32.mrb[0].mxu0
      %v424 = vpop.f32.mrb[0].mxu0
      %v425 = vadd.f32 %v297, %v424
      %v426 = vpop.f32.mrb[0].mxu0
      %427 = vdwg.mxu0
      %vm428 = vcmask 31744
      %429 = vst.msk [vmem:[%s284] sm:$0xff] %vm428, %v422
      %430 = vst.msk [vmem:[%s284 + $0x8] sm:$0xff] %vm428, %v425
      %p431 = scmp.lt.s32.totalorder %s16, 1
      %s432 = scalar_select %p431, %s16, 1
      %s433 = smul.addr %s432, 2
      %s434 = smul.addr %s433, 8
      %s435 = scalar_lea.vmem %s5, %s434
      // Predicated region
      $region41: #{_lambda_.34} parent=39 // pred_check
        %p436 = pneg %p159
      $region42: #{_lambda_.34} parent=39 // pred_check_branch
        %438 = sbr.rel (%p436) target = $region44
      $region43: #{_lambda_.34} parent=39 // pred_region
        _
      $region44: #{_lambda_.34} parent=39 // pred_fallthru
        _
    $region40: #{_lambda_.34} parent=5 // pred_fallthru
      _
    %p439 = scmp.le.s32.totalorder 2, %s11
    // Predicated region
    $region45: #{_lambda_.34} parent=5 // pred_check
      %p440 = pneg %p439
    $region46: #{_lambda_.34} parent=5 // pred_check_branch
      %442 = sbr.rel (%p440) target = $region48
    $region47: #{_lambda_.34} parent=5 // pred_region
      %s443 = ssub.s32 %s11, 2
      // Predicated region
      $region49: #{_lambda_.34} parent=47 // pred_check
        %p444 = pneg %p165
      $region50: #{_lambda_.34} parent=47 // pred_check_branch
        %446 = sbr.rel (%p444) target = $region52
      $region51: #{_lambda_.34} parent=47 // pred_region
        %p447 = scmp.lt.s32.totalorder %s17, 1
        %s448 = scalar_select %p447, %s17, 1
        %s449 = smul.addr %s448, 2
        %s450 = smul.addr %s449, 8
        %s451 = scalar_lea.vmem %s5, %s450
      $region52: #{_lambda_.34} parent=47 // pred_fallthru
        _
    $region48: #{_lambda_.34} parent=5 // pred_fallthru
      _
  $region6: #{_lambda_.34} parent=0 // loop_footer
    %s15 = sadd.s32 1, %s11
  $region7: #{_lambda_.34} parent=0 // loop_footer_branch
    %10 = sbr.rel target = $region3
  $region8: #{_lambda_.34} parent=0 // loop_exit
    _

// kernel: _lambda_.35
$region0: #{_lambda_.35}
  #allocation0 [shape = 'u32[]', space=smem, size = 0x4, offset = 0x4, fixed_abs, tag = 'smem constant byte address 0x4 - core index']
  #allocation1 [shape = 'u32[144,128]{1,0:T(1,128)}', space=vmem, size = 0x12000, scoped, tag = 'internal scratch']
  %s0 = inlined_call_operand.vmem [shape: f32[2,16,32], index: 0, kind: input, shape index: {}]
  %s1 = inlined_call_operand.vmem [shape: f32[1,32], index: 1, kind: input, shape index: {}]
  %s2 = inlined_call_operand.vmem [shape: f32[1,32], index: 2, kind: input, shape index: {}]
  %s3 = inlined_call_operand.vmem [shape: bf16[32,4], index: 3, kind: input, shape index: {}]
  %s4 = inlined_call_operand.vmem [shape: f32[1,4], index: 4, kind: input, shape index: {}]
  %s5 = inlined_call_operand.vmem [shape: f32[2,16,4], index: 5, kind: output, shape index: {}]
  %s6 = sld [smem:[#allocation0]]
  $region53: #{_lambda_.35} parent=0
    _
  %s8 = ssub.s32 1, %s6
  %s9 = scalar_select 0, %s8, %s6
  loop: start=0, step=1, limit=4
  $region2: #{_lambda_.35} parent=0 // loop_pre_header
    _
  $region3: #{_lambda_.35} parent=0 // loop_header
    %s11 = sphi 0, %s15
    %p12 = scmp.ge.s32.totalorder %s11, 4
    %s21 = sphi 0, %s23
    %s24 = sphi 0, %s21
    %s25 = sphi 0, %s24
    %s41 = sphi 0, %s25
    %s45 = sphi 0, %s45
    %s47 = sphi 0, %s45
    %s48 = sphi 0, %s47
    %s62 = sphi 0, %s48
    %s66 = sphi 0, %s66
    %s68 = sphi 0, %s66
    %s69 = sphi 0, %s68
    %s83 = sphi 0, %s69
    %s87 = sphi 0, %s87
    %s89 = sphi 0, %s87
    %s90 = sphi 0, %s89
    %s104 = sphi 0, %s90
    %s108 = sphi 0, %s108
    %s110 = sphi 0, %s108
    %s111 = sphi 0, %s110
    %s125 = sphi 0, %s111
    %s131 = sphi 0, %s133
    %s134 = sphi 0, %s131
    %s135 = sphi 0, %s134
    %s151 = sphi 0, %s135
  $region4: #{_lambda_.35} parent=0 // loop_header_branch
    %14 = sbr.rel (%p12) target = $region8
  $region5: #{_lambda_.35} parent=0 // loop_body
    %s16 = ssub.s32 %s11, 1
    %s17 = ssub.s32 %s11, 2
    %s18 = sadd.s32 %s11, 1
    %s19 = ssub.s32 %s11, %s18
    %p20 = scmp.eq.s32.totalorder %s19, 0
    %s22 = sadd.s32 %s21, 1
    %s23 = scalar_select %p20, %s21, %s22
    %p26 = pneg %p20
    %p27 = scmp.eq.s32.totalorder %s11, 1
    %p28 = por %p26, %p27
    %p29 = scmp.ne.s32.totalorder %s21, %s24
    %p30 = scmp.eq.s32.totalorder %s11, 0
    %p31 = por %p29, %p30
    %p32 = scmp.ne.s32.totalorder %s21, %s24
    %p33 = scmp.eq.s32.totalorder %s16, 1
    %p34 = por %p32, %p33
    %p35 = scmp.ne.s32.totalorder %s24, %s25
    %p36 = scmp.eq.s32.totalorder %s16, 0
    %p37 = por %p35, %p36
    %p38 = scmp.ne.s32.totalorder %s24, %s25
    %p39 = scmp.eq.s32.totalorder %s17, 1
    %p40 = por %p38, %p39
    %p42 = scmp.ne.s32.totalorder %s25, %s41
    %p43 = scmp.eq.s32.totalorder %s17, 0
    %p44 = por %p42, %p43
    %s46 = sadd.s32 %s45, 1
    %p49 = scmp.eq.s32.totalorder %s11, 1
    %p50 = scmp.ne.s32.totalorder %s45, %s47
    %p51 = scmp.eq.s32.totalorder %s11, 0
    %p52 = por %p50, %p51
    %p53 = scmp.ne.s32.totalorder %s45, %s47
    %p54 = scmp.eq.s32.totalorder %s16, 1
    %p55 = por %p53, %p54
    %p56 = scmp.ne.s32.totalorder %s47, %s48
    %p57 = scmp.eq.s32.totalorder %s16, 0
    %p58 = por %p56, %p57
    %p59 = scmp.ne.s32.totalorder %s47, %s48
    %p60 = scmp.eq.s32.totalorder %s17, 1
    %p61 = por %p59, %p60
    %p63 = scmp.ne.s32.totalorder %s48, %s62
    %p64 = scmp.eq.s32.totalorder %s17, 0
    %p65 = por %p63, %p64
    %s67 = sadd.s32 %s66, 1
    %p70 = scmp.eq.s32.totalorder %s11, 1
    %p71 = scmp.ne.s32.totalorder %s66, %s68
    %p72 = scmp.eq.s32.totalorder %s11, 0
    %p73 = por %p71, %p72
    %p74 = scmp.ne.s32.totalorder %s66, %s68
    %p75 = scmp.eq.s32.totalorder %s16, 1
    %p76 = por %p74, %p75
    %p77 = scmp.ne.s32.totalorder %s68, %s69
    %p78 = scmp.eq.s32.totalorder %s16, 0
    %p79 = por %p77, %p78
    %p80 = scmp.ne.s32.totalorder %s68, %s69
    %p81 = scmp.eq.s32.totalorder %s17, 1
    %p82 = por %p80, %p81
    %p84 = scmp.ne.s32.totalorder %s69, %s83
    %p85 = scmp.eq.s32.totalorder %s17, 0
    %p86 = por %p84, %p85
    %s88 = sadd.s32 %s87, 1
    %p91 = scmp.eq.s32.totalorder %s11, 1
    %p92 = scmp.ne.s32.totalorder %s87, %s89
    %p93 = scmp.eq.s32.totalorder %s11, 0
    %p94 = por %p92, %p93
    %p95 = scmp.ne.s32.totalorder %s87, %s89
    %p96 = scmp.eq.s32.totalorder %s16, 1
    %p97 = por %p95, %p96
    %p98 = scmp.ne.s32.totalorder %s89, %s90
    %p99 = scmp.eq.s32.totalorder %s16, 0
    %p100 = por %p98, %p99
    %p101 = scmp.ne.s32.totalorder %s89, %s90
    %p102 = scmp.eq.s32.totalorder %s17, 1
    %p103 = por %p101, %p102
    %p105 = scmp.ne.s32.totalorder %s90, %s104
    %p106 = scmp.eq.s32.totalorder %s17, 0
    %p107 = por %p105, %p106
    %s109 = sadd.s32 %s108, 1
    %p112 = scmp.eq.s32.totalorder %s11, 1
    %p113 = scmp.ne.s32.totalorder %s108, %s110
    %p114 = scmp.eq.s32.totalorder %s11, 0
    %p115 = por %p113, %p114
    %p116 = scmp.ne.s32.totalorder %s108, %s110
    %p117 = scmp.eq.s32.totalorder %s16, 1
    %p118 = por %p116, %p117
    %p119 = scmp.ne.s32.totalorder %s110, %s111
    %p120 = scmp.eq.s32.totalorder %s16, 0
    %p121 = por %p119, %p120
    %p122 = scmp.ne.s32.totalorder %s110, %s111
    %p123 = scmp.eq.s32.totalorder %s17, 1
    %p124 = por %p122, %p123
    %p126 = scmp.ne.s32.totalorder %s111, %s125
    %p127 = scmp.eq.s32.totalorder %s17, 0
    %p128 = por %p126, %p127
    %s129 = ssub.s32 %s11, %s18
    %p130 = scmp.eq.s32.totalorder %s129, 0
    %s132 = sadd.s32 %s131, 1
    %s133 = scalar_select %p130, %s131, %s132
    %p136 = pneg %p130
    %p137 = scmp.eq.s32.totalorder %s11, 1
    %p138 = por %p136, %p137
    %p139 = scmp.ne.s32.totalorder %s131, %s134
    %p140 = scmp.eq.s32.totalorder %s11, 0
    %p141 = por %p139, %p140
    %p142 = scmp.ne.s32.totalorder %s131, %s134
    %p143 = scmp.eq.s32.totalorder %s16, 1
    %p144 = por %p142, %p143
    %p145 = scmp.ne.s32.totalorder %s134, %s135
    %p146 = scmp.eq.s32.totalorder %s16, 0
    %p147 = por %p145, %p146
    %p148 = scmp.ne.s32.totalorder %s134, %s135
    %p149 = scmp.eq.s32.totalorder %s17, 1
    %p150 = por %p148, %p149
    %p152 = scmp.ne.s32.totalorder %s135, %s151
    %p153 = scmp.eq.s32.totalorder %s17, 0
    %p154 = por %p152, %p153
    %p155 = scmp.le.s32.totalorder 1, %s11
    %p156 = scmp.lt.s32.totalorder %s11, 3
    %p157 = pnand %p155, %p156
    %p158 = pneg %p157
    // Predicated region
    $region9: #{_lambda_.35} parent=5 // pred_check
      _
    $region10: #{_lambda_.35} parent=5 // pred_check_branch
      %160 = sbr.rel (%p157) target = $region12
    $region11: #{_lambda_.35} parent=5 // pred_region
      %s161 = ssub.s32 %s11, 1
      // Predicated region
      $region13: #{_lambda_.35} parent=11 // pred_check
        %p162 = pneg %p58
      $region14: #{_lambda_.35} parent=11 // pred_check_branch
        %164 = sbr.rel (%p162) target = $region16
      $region15: #{_lambda_.35} parent=11 // pred_region
        _
      $region16: #{_lambda_.35} parent=11 // pred_fallthru
        _
      // Predicated region
      $region17: #{_lambda_.35} parent=11 // pred_check
        %p165 = pneg %p79
      $region18: #{_lambda_.35} parent=11 // pred_check_branch
        %167 = sbr.rel (%p165) target = $region20
      $region19: #{_lambda_.35} parent=11 // pred_region
        _
      $region20: #{_lambda_.35} parent=11 // pred_fallthru
        _
      // Predicated region
      $region21: #{_lambda_.35} parent=11 // pred_check
        %p168 = pneg %p100
      $region22: #{_lambda_.35} parent=11 // pred_check_branch
        %170 = sbr.rel (%p168) target = $region24
      $region23: #{_lambda_.35} parent=11 // pred_region
        _
      $region24: #{_lambda_.35} parent=11 // pred_fallthru
        _
      // Predicated region
      $region25: #{_lambda_.35} parent=11 // pred_check
        %p171 = pneg %p121
      $region26: #{_lambda_.35} parent=11 // pred_check_branch
        %173 = sbr.rel (%p171) target = $region28
      $region27: #{_lambda_.35} parent=11 // pred_region
        _
      $region28: #{_lambda_.35} parent=11 // pred_fallthru
        _
    $region12: #{_lambda_.35} parent=5 // pred_fallthru
      _
    %p174 = scmp.lt.s32.totalorder %s11, 2
    // Predicated region
    $region29: #{_lambda_.35} parent=5 // pred_check
      %p175 = pneg %p174
    $region30: #{_lambda_.35} parent=5 // pred_check_branch
      %177 = sbr.rel (%p175) target = $region32
    $region31: #{_lambda_.35} parent=5 // pred_region
      // Predicated region
      $region33: #{_lambda_.35} parent=31 // pred_check
        %p178 = pneg %p31
      $region34: #{_lambda_.35} parent=31 // pred_check_branch
        %180 = sbr.rel (%p178) target = $region36
      $region35: #{_lambda_.35} parent=31 // pred_region
        %p181 = scmp.lt.s32.totalorder %s11, 1
        %s182 = scalar_select %p181, %s11, 1
        %s183 = smul.addr %s182, 2
        %s184 = smul.addr %s183, 8
        %s185 = scalar_lea.vmem %s0, %s184
      $region36: #{_lambda_.35} parent=31 // pred_fallthru
        _
    $region32: #{_lambda_.35} parent=5 // pred_fallthru
      _
    %p186 = scmp.le.s32.totalorder 1, %s11
    %p187 = scmp.lt.s32.totalorder %s11, 3
    %p188 = pnand %p186, %p187
    %p189 = pneg %p188
    // Predicated region
    $region37: #{_lambda_.35} parent=5 // pred_check
      _
    $region38: #{_lambda_.35} parent=5 // pred_check_branch
      %191 = sbr.rel (%p188) target = $region40
    $region39: #{_lambda_.35} parent=5 // pred_region
      %s192 = ssub.s32 %s11, 1
      %p193 = scmp.lt.s32.totalorder %s16, 1
      %s194 = scalar_select %p193, %s16, 1
      %s195 = smul.addr %s194, 2
      %s196 = smul.addr %s195, 8
      %s197 = scalar_lea.vmem %s0, %s196
      %p198 = pneg %p37
      %p199 = pneg %p34
      %p200 = pneg %p58
      %p201 = pneg %p55
      %p202 = pneg %p79
      %p203 = pneg %p76
      %p204 = pneg %p100
      %p205 = pneg %p97
      %p206 = pneg %p121
      %p207 = pneg %p118
      %p208 = pneg %p147
      %p209 = pneg %p144
      %p210 = scmp.lt.s32.totalorder %s16, 1
      %s211 = scalar_select %p210, %s16, 1
      %s212 = smul.addr %s211, 2
      %s213 = smul.addr %s212, 8
      %s214 = scalar_lea.vmem %s5, %s213
      %p215 = scmp.lt.s32.totalorder %s16, 1
      %s216 = scalar_select %p215, %s16, 1
      %s217 = smul.addr %s216, 2
      %s218 = smul.addr %s217, 8
      %s219 = scalar_lea.vmem %s0, %s218
      %p220 = scmp.lt.s32.totalorder %s16, 1
      %s221 = scalar_select %p220, %s16, 1
      %s222 = smul.addr %s221, 2
      %s223 = smul.addr %s222, 8
      %s224 = scalar_lea.vmem %s5, %s223
      %v226 = vld [vmem:[%s219] sm:$0xff]
      %v227 = vld [vmem:[%s219 + $0x8] sm:$0xff]
      %v228 = vld [vmem:[%s1] sm:$0x1]
      %v229 = vld [vmem:[%s2] sm:$0x1]
      %vm230 = vcmask 261120
      %v231 = vsel %vm230, %v226, 0.0
      %232 = vadd.xlane.f32.xlu0 %v231
      %v233 = vpop.xlane.xlu0 %232
      %v234 = vsel %vm230, %v227, 0.0
      %235 = vadd.xlane.f32.xlu0 %v234
      %v236 = vpop.xlane.xlu0 %235
      %v237 = vrcp.pop 32.0
      %v238 = vmul.f32 %v233, %v237
      %v239 = vmul.f32 %v236, %v237
      %v240 = vsub.f32 %v226, %v238
      %v241 = vsub.f32 %v227, %v239
      %v242 = vmul.f32 %v240, %v240
      %v243 = vmul.f32 %v241, %v241
      %v244 = vsel %vm230, %v242, 0.0
      %245 = vadd.xlane.f32.xlu0 %v244
      %v246 = vpop.xlane.xlu0 %245
      %v247 = vsel %vm230, %v243, 0.0
      %248 = vadd.xlane.f32.xlu0 %v247
      %v249 = vpop.xlane.xlu0 %248
      %v250 = vmul.f32 %v246, %v237
      %v251 = vmul.f32 %v249, %v237
      %v252 = vadd.f32 %v250, 1e-05
      %v253 = vadd.f32 %v251, 1e-05
      %v254 = vrsqrt.pop %v252
      %v255 = vrsqrt.pop %v253
      %v256 = vmul.f32 %v240, %v254
      %v257 = vmul.f32 %v241, %v255
      %v259 = vlaneseq
      %v260 = vshrl.u32 %v259, 7
      %v261 = vsub.s32 0, %v260
      %v262 = vrot.slane %v228, %v261
      %v264 = vmul.f32 %v256, %v262
      %v265 = vmul.f32 %v257, %v262
      %v267 = vlaneseq
      %v268 = vshrl.u32 %v267, 7
      %v269 = vsub.s32 0, %v268
      %v270 = vrot.slane %v229, %v269
      %v272 = vadd.f32 %v264, %v270
      %v273 = vadd.f32 %v265, %v270
      %v274 = vsel %vm230, %v272, 0.0
      %v275 = vsel %vm230, %v273, 0.0
      %v276 = vadd.f32 %v274, %v275
      %v277 = vrot.slane %v276, 4
      %v278 = vadd.f32 %v276, %v277
      %v279 = vrot.slane %v278, 2
      %v280 = vadd.f32 %v278, %v279
      %v281 = vrot.slane %v280, 1
      %v282 = vadd.f32 %v280, %v281
      %v283 = vrcp.pop 16.0
      %v284 = vmul.f32 %v282, %v283
      %v285 = vsub.f32 %v272, %v284
      %v286 = vsub.f32 %v273, %v284
      %v287 = vld [vmem:[%s3] sm:$0xf]
      %v288 = vld [vmem:[%s3 + $0x4] sm:$0xf]
      %v289 = vld [vmem:[%s3 + $0x8] sm:$0xf]
      %v290 = vld [vmem:[%s3 + $0xc] sm:$0xf]
      %v291 = vld [vmem:[%s4] sm:$0x1]
      %v292 = vpack.c.bf16 %v286, %v285
      %v294 = vlaneseq
      %v295 = vshrl.u32 %v294, 7
      %v296 = vsub.s32 0, %v295
      %v297 = vrot.slane %v291, %v296
      %v303 = vunpack.c.l.b16 %v287
      %v304 = vunpack.c.l.b16 %v288
      %v305 = vunpack.c.l.b16 %v289
      %v306 = vunpack.c.l.b16 %v290
      %v307 = vpack.c.b16 %v304, %v303
      %v308 = vpack.c.b16 %v306, %v305
      %v312 = vsel %vm230, %v292, 0
      %314 = vmatprep.subr.bf16.mxu0 0
      %315 = vmatpush1.bf16.msra.mxu0 %v307
      %316 = vmatprep.subr.bf16.mxu0 0
      %317 = vmatpush1.bf16.msra.mxu0 %v308
      %318 = vmatprep.subr.bf16.mxu0 0
      %319 = vmatpush1.bf16.msra.mxu0 0
      %320 = vmatprep.subr.bf16.mxu0 0
      %321 = vmatpush1.bf16.msra.mxu0 0
      %322 = vmatprep.subr.bf16.mxu0 0
      %323 = vmatpush1.bf16.msra.mxu0 0
      %324 = vmatprep.subr.bf16.mxu0 0
      %325 = vmatpush1.bf16.msra.mxu0 0
      %326 = vmatprep.subr.bf16.mxu0 0
      %327 = vmatpush1.bf16.msra.mxu0 0
      %328 = vmatprep.subr.bf16.mxu0 0
      %329 = vmatpush1.bf16.msra.mxu0 0
      %330 = vmatprep.subr.bf16.mxu0 0
      %331 = vmatpush1.bf16.msra.mxu0 0
      %332 = vmatprep.subr.bf16.mxu0 0
      %333 = vmatpush1.bf16.msra.mxu0 0
      %334 = vmatprep.subr.bf16.mxu0 0
      %335 = vmatpush1.bf16.msra.mxu0 0
      %336 = vmatprep.subr.bf16.mxu0 0
      %337 = vmatpush1.bf16.msra.mxu0 0
      %338 = vmatprep.subr.bf16.mxu0 0
      %339 = vmatpush1.bf16.msra.mxu0 0
      %340 = vmatprep.subr.bf16.mxu0 0
      %341 = vmatpush1.bf16.msra.mxu0 0
      %342 = vmatprep.subr.bf16.mxu0 0
      %343 = vmatpush1.bf16.msra.mxu0 0
      %344 = vmatprep.subr.bf16.mxu0 0
      %345 = vmatpush1.bf16.msra.mxu0 0
      %346 = vmatprep.mubr.bf16.mxu0 0
      %347 = vmatmul.mubr.bf16.gmra.mrb[0].mxu0 %v312
      %v348 = vpop.f32.mrb[0].mxu0
      %v349 = vadd.f32 %v297, %v348
      %v350 = vpop.f32.mrb[0].mxu0
      %v351 = vpop.f32.mrb[0].mxu0
      %v352 = vadd.f32 %v297, %v351
      %v353 = vpop.f32.mrb[0].mxu0
      %354 = vdwg.mxu0
      %vm355 = vcmask 31744
      %356 = vst.msk [vmem:[%s224] sm:$0xff] %vm355, %v349
      %357 = vst.msk [vmem:[%s224 + $0x8] sm:$0xff] %vm355, %v352
      %p358 = scmp.lt.s32.totalorder %s16, 1
      %s359 = scalar_select %p358, %s16, 1
      %s360 = smul.addr %s359, 2
      %s361 = smul.addr %s360, 8
      %s362 = scalar_lea.vmem %s5, %s361
      // Predicated region
      $region41: #{_lambda_.35} parent=39 // pred_check
        %p363 = pneg %p144
      $region42: #{_lambda_.35} parent=39 // pred_check_branch
        %365 = sbr.rel (%p363) target = $region44
      $region43: #{_lambda_.35} parent=39 // pred_region
        _
      $region44: #{_lambda_.35} parent=39 // pred_fallthru
        _
    $region40: #{_lambda_.35} parent=5 // pred_fallthru
      _
    %p366 = scmp.le.s32.totalorder 2, %s11
    // Predicated region
    $region45: #{_lambda_.35} parent=5 // pred_check
      %p367 = pneg %p366
    $region46: #{_lambda_.35} parent=5 // pred_check_branch
      %369 = sbr.rel (%p367) target = $region48
    $region47: #{_lambda_.35} parent=5 // pred_region
      %s370 = ssub.s32 %s11, 2
      // Predicated region
      $region49: #{_lambda_.35} parent=47 // pred_check
        %p371 = pneg %p150
      $region50: #{_lambda_.35} parent=47 // pred_check_branch
        %373 = sbr.rel (%p371) target = $region52
      $region51: #{_lambda_.35} parent=47 // pred_region
        %p374 = scmp.lt.s32.totalorder %s17, 1
        %s375 = scalar_select %p374, %s17, 1
        %s376 = smul.addr %s375, 2
        %s377 = smul.addr %s376, 8
        %s378 = scalar_lea.vmem %s5, %s377
      $region52: #{_lambda_.35} parent=47 // pred_fallthru
        _
    $region48: #{_lambda_.35} parent=5 // pred_fallthru
      _
  $region6: #{_lambda_.35} parent=0 // loop_footer
    %s15 = sadd.s32 1, %s11
  $region7: #{_lambda_.35} parent=0 // loop_footer_branch
    %10 = sbr.rel target = $region3
  $region8: #{_lambda_.35} parent=0 // loop_exit
    _

</llo_original>
